<compile_context>
chip_gen: v5e
topology: v5e:2x2
jax: 0.10.0
libtpu: 0.0.40
codegen_flags: <defaults>
</compile_context>

<pallas_src>
import numpy as np

import jax
import jax.numpy as jnp
from jax import lax
from jax.experimental import pallas as pl
from jax.experimental.pallas import tpu as pltpu


# ------------------------------ Pallas kernel -------------------------------

def _chess_cnn_kernel(x_ref, w_wide_ref, w_mid_ref, w_nar_ref, bias_ref, o_ref):
    """Entire ChessCNN forward for one row-block: 7 fused matmul+bias+act.

    Weight slabs (bf16, MXU inputs), row-band layout (all offsets are
    multiples of 8 sublanes / full lane width -> zero-cost static views):
      w_wide (1184, 800): [0:384]   conv1           [384:1184] conv2
      w_mid  (1056, 256): [0:800]   pool1∘conv3     [800:1056] conv4
      w_nar  ( 512, 128): [0:256]   pool2∘fc1       [256:384]  fc2(pad N→128)
                          [384:512] fc3 (pad K→128, N→128; lane 0 is real)
      bias   (8, 800) f32: row i = bias of layer i (zero padded).
    """
    def dense(h, w, bias_row, n, act):
        acc = jnp.dot(h.astype(w.dtype), w,
                      preferred_element_type=jnp.float32)          # MXU, f32 acc
        acc = acc + bias_ref[bias_row:bias_row + 1, 0:n]            # (1, n) bcast
        if act == "relu":
            return jnp.maximum(acc, 0.0)
        return jax.nn.sigmoid(acc)                                   # EUP, f32

    h = x_ref[...].astype(jnp.float32)                               # (bm, 384)
    h = dense(h, w_wide_ref[0:384, :],    0, 800, "relu")            # conv1
    h = dense(h, w_wide_ref[384:1184, :], 1, 800, "relu")            # conv2
    h = dense(h, w_mid_ref[0:800, :],     2, 256, "relu")            # pool1∘conv3
    h = dense(h, w_mid_ref[800:1056, :],  3, 256, "relu")            # conv4
    h = dense(h, w_nar_ref[0:256, :],     4, 128, "relu")            # pool2∘fc1
    h = dense(h, w_nar_ref[256:384, :],   5, 128, "relu")            # fc2 (padded)
    # TODO(synk): F.dropout(0.5) after fc1/fc2 (functional default training=True)
    # is stochastic; treated as identity (inference semantics).
    h = dense(h, w_nar_ref[384:512, :],   6, 128, "sigmoid")         # fc3 (padded)
    o_ref[...] = h.astype(o_ref.dtype)                               # (bm, 128)


def _round_up(n, m):
    return ((n + m - 1) // m) * m


def chess_cnn_forward(prepped, x, *, block_rows=256):
    """x: (B, 6, 8, 8) float32 NCHW  ->  (B, 1) float32 in [0, 1]."""
    w_wide, w_mid, w_nar, bias = prepped
    B = x.shape[0]
    x_flat = x.reshape(B, 6 * 8 * 8).astype(jnp.float32)     # raw NCHW flatten

    # Row-block size: multiple of 8 sublanes, capped so VMEM stays tiny even
    # on v7x (2.6 MiB resident weights + double-buffered x/out blocks).
    bm = _round_up(min(int(block_rows), _round_up(B, 8)), 8)
    pad_b = _round_up(B, bm)
    if pad_b != B:                                            # pad batch to full tiles
        x_flat = jnp.pad(x_flat, ((0, pad_b - B), (0, 0)))
    grid = (pad_b // bm,)

    per_row_flops = 2 * (384 * 800 + 800 * 800 + 800 * 256 + 256 * 256
                         + 256 * 128 + 128 * 128 + 128 * 128)
    weight_bytes = 2 * (w_wide.size + w_mid.size + w_nar.size) + 4 * bias.size
    io_bytes = 4 * pad_b * (384 + 128)

    out = pl.pallas_call(
        _chess_cnn_kernel,
        out_shape=jax.ShapeDtypeStruct((pad_b, 128), jnp.float32),
        grid=grid,
        in_specs=[
            pl.BlockSpec((bm, 384), lambda i: (i, 0)),        # x row-block
            pl.BlockSpec(w_wide.shape, lambda i: (0, 0)),     # weights: constant
            pl.BlockSpec(w_mid.shape, lambda i: (0, 0)),      #  index_maps ->
            pl.BlockSpec(w_nar.shape, lambda i: (0, 0)),      #  VMEM-resident
            pl.BlockSpec(bias.shape, lambda i: (0, 0)),       #  across grid steps
        ],
        out_specs=pl.BlockSpec((bm, 128), lambda i: (i, 0)),
        compiler_params=pltpu.CompilerParams(
            dimension_semantics=("parallel",)),               # v7x: 2 TCs share batch
        cost_estimate=pl.CostEstimate(
            flops=pad_b * per_row_flops,
            transcendentals=pad_b * 128,
            bytes_accessed=weight_bytes + io_bytes),
    )(x_flat, w_wide, w_mid, w_nar, bias)
    return out[:B, :1]                                        # real fc3 output is lane 0


# ------------------ host-side (one-time) parameter lowering -----------------

def _conv_dense(w, b, H, W, pad, in_layout="hwc"):
    """Dense (H*W*C_in, OH*OW*C_out) matrix equal to Conv2d(w, padding=pad)
    acting on a flattened activation; output is flattened channel-minor."""
    w = np.asarray(w, np.float32)                 # (C_out, C_in, KH, KW)
    b = np.asarray(b, np.float32)
    c_out, c_in, kh, kw = w.shape
    oh = H + 2 * pad - kh + 1
    ow = W + 2 * pad - kw + 1
    mat = np.zeros((c_in * H * W, oh * ow * c_out), np.float32)
    for oy in range(oh):
        for ox in range(ow):
            col0 = (oy * ow + ox) * c_out
            for ky in range(kh):
                iy = oy + ky - pad
                if not 0 <= iy < H:
                    continue
                for kx in range(kw):
                    ix = ox + kx - pad
                    if not 0 <= ix < W:
                        continue
                    blk = w[:, :, ky, kx].T       # (C_in, C_out)
                    if in_layout == "hwc":
                        rows = (iy * W + ix) * c_in + np.arange(c_in)
                    else:                          # "chw": raw NCHW flatten order
                        rows = np.arange(c_in) * (H * W) + iy * W + ix
                    mat[rows, col0:col0 + c_out] += blk
    bias_row = np.tile(b, oh * ow)[None, :]
    return mat, bias_row


def _avgpool2x2_dense(C, H, W):
    """Dense matrix for AvgPool2d(2, 2) (floor mode) on an hwc-flattened map."""
    oh, ow = H // 2, W // 2
    mat = np.zeros((H * W * C, oh * ow * C), np.float32)
    eye = 0.25 * np.eye(C, dtype=np.float32)
    for oy in range(oh):
        for ox in range(ow):
            col0 = (oy * ow + ox) * C
            for dy in range(2):
                for dx in range(2):
                    row0 = ((2 * oy + dy) * W + (2 * ox + dx)) * C
                    mat[row0:row0 + C, col0:col0 + C] += eye
    return mat


def prepare_params(params, matmul_dtype=jnp.bfloat16):
    """One-time lowering to 4 packed kernel operands:
       3 bf16 weight slabs (grouped by lane width, vertically stacked,
       128-lane / 8-sublane aligned segments) + 1 f32 bias slab."""
    m1, b1 = _conv_dense(params["conv1_w"], params["conv1_b"], 8, 8, 0, in_layout="chw")
    m2, b2 = _conv_dense(params["conv2_w"], params["conv2_b"], 5, 5, 1)
    m3c, b3 = _conv_dense(params["conv3_w"], params["conv3_b"], 2, 2, 1)
    m3 = _avgpool2x2_dense(32, 5, 5) @ m3c                    # pool1 ∘ conv3 : (800,256)
    m4, b4 = _conv_dense(params["conv4_w"], params["conv4_b"], 2, 2, 1)
    m5 = _avgpool2x2_dense(64, 2, 2) @ np.asarray(params["fc1_w"], np.float32).T
    b5 = np.asarray(params["fc1_b"], np.float32)[None, :]     # pool2 ∘ fc1 : (256,128)

    m6 = np.zeros((128, 128), np.float32)                     # fc2: pad N 64 -> 128
    m6[:, :64] = np.asarray(params["fc2_w"], np.float32).T
    b6 = np.zeros((1, 128), np.float32)
    b6[0, :64] = np.asarray(params["fc2_b"], np.float32)

    m7 = np.zeros((128, 128), np.float32)                     # fc3: pad K/N -> 128
    m7[:64, 0] = np.asarray(params["fc3_w"], np.float32)[0]
    b7 = np.zeros((1, 128), np.float32)
    b7[0, 0] = float(np.asarray(params["fc3_b"], np.float32)[0])

    w_wide = np.concatenate([m1, m2], axis=0)                 # (1184, 800) bf16
    w_mid = np.concatenate([m3, m4], axis=0)                  # (1056, 256) bf16
    w_nar = np.concatenate([m5, m6, m7], axis=0)              # ( 512, 128) bf16

    bias = np.zeros((8, 800), np.float32)                     # one f32 bias slab
    for r, brow in enumerate((b1, b2, b3, b4, b5, b6, b7)):
        bias[r, :brow.shape[1]] = brow[0]

    return (jnp.asarray(w_wide, matmul_dtype),
            jnp.asarray(w_mid, matmul_dtype),
            jnp.asarray(w_nar, matmul_dtype),
            jnp.asarray(bias, jnp.float32))


# --------------------------- params / reference -----------------------------

def init_params(key):
    """Random params with PyTorch module shapes (Conv2d (C_out,C_in,KH,KW),
    Linear (out_features, in_features))."""
    ks = jax.random.split(key, 14)

    def conv_w(k, c_out, c_in, kh, kw):
        return jax.random.normal(k, (c_out, c_in, kh, kw), jnp.float32) / np.sqrt(c_in * kh * kw)

    def lin_w(k, out_f, in_f):
        return jax.random.normal(k, (out_f, in_f), jnp.float32) / np.sqrt(in_f)

    return {
        "conv1_w": conv_w(ks[0], 32, 6, 4, 4),
        "conv1_b": 0.01 * jax.random.normal(ks[1], (32,), jnp.float32),
        "conv2_w": conv_w(ks[2], 32, 32, 3, 3),
        "conv2_b": 0.01 * jax.random.normal(ks[3], (32,), jnp.float32),
        "conv3_w": conv_w(ks[4], 64, 32, 3, 3),
        "conv3_b": 0.01 * jax.random.normal(ks[5], (64,), jnp.float32),
        "conv4_w": conv_w(ks[6], 64, 64, 3, 3),
        "conv4_b": 0.01 * jax.random.normal(ks[7], (64,), jnp.float32),
        "fc1_w": lin_w(ks[8], 128, 64),
        "fc1_b": 0.01 * jax.random.normal(ks[9], (128,), jnp.float32),
        "fc2_w": lin_w(ks[10], 64, 128),
        "fc2_b": 0.01 * jax.random.normal(ks[11], (64,), jnp.float32),
        "fc3_w": lin_w(ks[12], 1, 64),
        "fc3_b": 0.01 * jax.random.normal(ks[13], (1,), jnp.float32),
    }


def reference_forward(params, x):
    """Pure-JAX (XLA) fp32 reference with exact PyTorch semantics."""
    def conv_relu(x, w, b, pad):
        y = lax.conv_general_dilated(
            x, w, window_strides=(1, 1), padding=[(pad, pad), (pad, pad)],
            dimension_numbers=("NCHW", "OIHW", "NCHW"),
            precision=lax.Precision.HIGHEST)
        return jnp.maximum(y + b[None, :, None, None], 0.0)

    def avg_pool(x):
        h2, w2 = (x.shape[2] // 2) * 2, (x.shape[3] // 2) * 2
        x = x[:, :, :h2, :w2]
        return 0.25 * (x[:, :, 0::2, 0::2] + x[:, :, 0::2, 1::2]
                       + x[:, :, 1::2, 0::2] + x[:, :, 1::2, 1::2])

    x = conv_relu(x, params["conv1_w"], params["conv1_b"], 0)
    x = conv_relu(x, params["conv2_w"], params["conv2_b"], 1)
    x = avg_pool(x)
    x = conv_relu(x, params["conv3_w"], params["conv3_b"], 1)
    x = conv_relu(x, params["conv4_w"], params["conv4_b"], 1)
    x = avg_pool(x)
    x = x.reshape(x.shape[0], -1)
    x = jnp.maximum(x @ params["fc1_w"].T + params["fc1_b"], 0.0)
    x = jnp.maximum(x @ params["fc2_w"].T + params["fc2_b"], 0.0)
    return jax.nn.sigmoid(x @ params["fc3_w"].T + params["fc3_b"])


# ----------------------------------- main ------------------------------------

if __name__ == "__main__":
    key = jax.random.PRNGKey(0)
    pkey, xkey = jax.random.split(key)
    params = init_params(pkey)
    prepped = prepare_params(params)                 # host-side, once (not per call)
    x = jax.random.normal(xkey, (2, 6, 8, 8), jnp.float32)   # 2 boards, 6x8x8

    fwd = jax.jit(chess_cnn_forward)
    out = jax.block_until_ready(fwd(prepped, x))

    assert out.shape == (2, 1)
    assert bool(jnp.all(jnp.isfinite(out)))
    assert bool(jnp.all((out >= 0.0) & (out <= 1.0)))

    ref = reference_forward(params, x)               # fp32 reference
    assert float(jnp.max(jnp.abs(out - ref))) < 5e-2  # bf16-weight tolerance
    print("KERNEL_OK")
</pallas_src>

<mosaic_0001>
module attributes {stable_mosaic.version = 11 : i64} {
  func.func @_chess_cnn_kernel(%arg0: i32, %arg1: memref<8x384xf32, #tpu.memory_space<vmem>>, %arg2: memref<1184x800xbf16, #tpu.memory_space<vmem>>, %arg3: memref<1056x256xbf16, #tpu.memory_space<vmem>>, %arg4: memref<512x128xbf16, #tpu.memory_space<vmem>>, %arg5: memref<8x800xf32, #tpu.memory_space<vmem>>, %arg6: memref<8x128xf32, #tpu.memory_space<vmem>>) attributes {dimension_semantics = [#tpu.dimension_semantics<parallel>], iteration_bounds = array<i64: 1>, scalar_prefetch = 0 : i64, scratch_operands = 0 : i64, tpu.core_type = #tpu.core_type<tc>, window_params = [{transform_indices = @transform_0, window_bounds = array<i64: 8, 384>}, {pipeline_mode = #tpu.pipeline_mode<synchronous>, transform_indices = @transform_1, window_bounds = array<i64: 1184, 800>}, {pipeline_mode = #tpu.pipeline_mode<synchronous>, transform_indices = @transform_2, window_bounds = array<i64: 1056, 256>}, {pipeline_mode = #tpu.pipeline_mode<synchronous>, transform_indices = @transform_3, window_bounds = array<i64: 512, 128>}, {pipeline_mode = #tpu.pipeline_mode<synchronous>, transform_indices = @transform_4, window_bounds = array<i64: 8, 800>}, {transform_indices = @transform_5, window_bounds = array<i64: 8, 128>}]} {
    %c0 = arith.constant 0 : index
    %c0_0 = arith.constant 0 : index
    %0 = vector.load %arg1[%c0, %c0_0] : memref<8x384xf32, #tpu.memory_space<vmem>>, vector<8x384xf32>
    %c0_1 = arith.constant 0 : index
    %c0_2 = arith.constant 0 : index
    %1 = vector.load %arg2[%c0_1, %c0_2] : memref<1184x800xbf16, #tpu.memory_space<vmem>>, vector<384x800xbf16>
    %2 = arith.truncf %0 : vector<8x384xf32> to vector<8x384xbf16>
    %cst = arith.constant dense<0.000000e+00> : vector<8x800xf32>
    %3 = tpu.matmul %2, %1, %cst {dimension_numbers = #tpu.dot_dimension_numbers<[1], [0], [0], [1], [0, 0, 1, 1], [], []>} : vector<8x384xbf16>, vector<384x800xbf16>, vector<8x800xf32> -> vector<8x800xf32>
    %c0_3 = arith.constant 0 : index
    %c0_4 = arith.constant 0 : index
    %4 = vector.load %arg5[%c0_3, %c0_4] : memref<8x800xf32, #tpu.memory_space<vmem>>, vector<1x800xf32>
    %5 = vector.broadcast %4 : vector<1x800xf32> to vector<8x800xf32>
    %6 = arith.addf %3, %5 : vector<8x800xf32>
    %cst_5 = arith.constant 0.000000e+00 : f32
    %7 = vector.broadcast %cst_5 : f32 to vector<8x800xf32>
    %8 = arith.maximumf %6, %7 : vector<8x800xf32>
    %c384 = arith.constant 384 : index
    %c0_6 = arith.constant 0 : index
    %9 = vector.load %arg2[%c384, %c0_6] : memref<1184x800xbf16, #tpu.memory_space<vmem>>, vector<800x800xbf16>
    %10 = arith.truncf %8 : vector<8x800xf32> to vector<8x800xbf16>
    %cst_7 = arith.constant dense<0.000000e+00> : vector<8x800xf32>
    %11 = tpu.matmul %10, %9, %cst_7 {dimension_numbers = #tpu.dot_dimension_numbers<[1], [0], [0], [1], [0, 0, 1, 1], [], []>} : vector<8x800xbf16>, vector<800x800xbf16>, vector<8x800xf32> -> vector<8x800xf32>
    %c1 = arith.constant 1 : index
    %c0_8 = arith.constant 0 : index
    %12 = vector.load %arg5[%c1, %c0_8] : memref<8x800xf32, #tpu.memory_space<vmem>>, vector<1x800xf32>
    %13 = vector.broadcast %12 : vector<1x800xf32> to vector<8x800xf32>
    %14 = arith.addf %11, %13 : vector<8x800xf32>
    %cst_9 = arith.constant 0.000000e+00 : f32
    %15 = vector.broadcast %cst_9 : f32 to vector<8x800xf32>
    %16 = arith.maximumf %14, %15 : vector<8x800xf32>
    %c0_10 = arith.constant 0 : index
    %c0_11 = arith.constant 0 : index
    %17 = vector.load %arg3[%c0_10, %c0_11] : memref<1056x256xbf16, #tpu.memory_space<vmem>>, vector<800x256xbf16>
    %18 = arith.truncf %16 : vector<8x800xf32> to vector<8x800xbf16>
    %cst_12 = arith.constant dense<0.000000e+00> : vector<8x256xf32>
    %19 = tpu.matmul %18, %17, %cst_12 {dimension_numbers = #tpu.dot_dimension_numbers<[1], [0], [0], [1], [0, 0, 1, 1], [], []>} : vector<8x800xbf16>, vector<800x256xbf16>, vector<8x256xf32> -> vector<8x256xf32>
    %c2 = arith.constant 2 : index
    %c0_13 = arith.constant 0 : index
    %20 = vector.load %arg5[%c2, %c0_13] : memref<8x800xf32, #tpu.memory_space<vmem>>, vector<1x256xf32>
    %21 = vector.broadcast %20 : vector<1x256xf32> to vector<8x256xf32>
    %22 = arith.addf %19, %21 : vector<8x256xf32>
    %cst_14 = arith.constant 0.000000e+00 : f32
    %23 = vector.broadcast %cst_14 : f32 to vector<8x256xf32>
    %24 = arith.maximumf %22, %23 : vector<8x256xf32>
    %c800 = arith.constant 800 : index
    %c0_15 = arith.constant 0 : index
    %25 = vector.load %arg3[%c800, %c0_15] : memref<1056x256xbf16, #tpu.memory_space<vmem>>, vector<256x256xbf16>
    %26 = arith.truncf %24 : vector<8x256xf32> to vector<8x256xbf16>
    %cst_16 = arith.constant dense<0.000000e+00> : vector<8x256xf32>
    %27 = tpu.matmul %26, %25, %cst_16 {dimension_numbers = #tpu.dot_dimension_numbers<[1], [0], [0], [1], [0, 0, 1, 1], [], []>} : vector<8x256xbf16>, vector<256x256xbf16>, vector<8x256xf32> -> vector<8x256xf32>
    %c3 = arith.constant 3 : index
    %c0_17 = arith.constant 0 : index
    %28 = vector.load %arg5[%c3, %c0_17] : memref<8x800xf32, #tpu.memory_space<vmem>>, vector<1x256xf32>
    %29 = vector.broadcast %28 : vector<1x256xf32> to vector<8x256xf32>
    %30 = arith.addf %27, %29 : vector<8x256xf32>
    %cst_18 = arith.constant 0.000000e+00 : f32
    %31 = vector.broadcast %cst_18 : f32 to vector<8x256xf32>
    %32 = arith.maximumf %30, %31 : vector<8x256xf32>
    %c0_19 = arith.constant 0 : index
    %c0_20 = arith.constant 0 : index
    %33 = vector.load %arg4[%c0_19, %c0_20] : memref<512x128xbf16, #tpu.memory_space<vmem>>, vector<256x128xbf16>
    %34 = arith.truncf %32 : vector<8x256xf32> to vector<8x256xbf16>
    %cst_21 = arith.constant dense<0.000000e+00> : vector<8x128xf32>
    %35 = tpu.matmul %34, %33, %cst_21 {dimension_numbers = #tpu.dot_dimension_numbers<[1], [0], [0], [1], [0, 0, 1, 1], [], []>} : vector<8x256xbf16>, vector<256x128xbf16>, vector<8x128xf32> -> vector<8x128xf32>
    %c4 = arith.constant 4 : index
    %c0_22 = arith.constant 0 : index
    %36 = vector.load %arg5[%c4, %c0_22] : memref<8x800xf32, #tpu.memory_space<vmem>>, vector<1x128xf32>
    %37 = vector.broadcast %36 : vector<1x128xf32> to vector<8x128xf32>
    %38 = arith.addf %35, %37 : vector<8x128xf32>
    %cst_23 = arith.constant 0.000000e+00 : f32
    %39 = vector.broadcast %cst_23 : f32 to vector<8x128xf32>
    %40 = arith.maximumf %38, %39 : vector<8x128xf32>
    %c256 = arith.constant 256 : index
    %c0_24 = arith.constant 0 : index
    %41 = vector.load %arg4[%c256, %c0_24] : memref<512x128xbf16, #tpu.memory_space<vmem>>, vector<128x128xbf16>
    %42 = arith.truncf %40 : vector<8x128xf32> to vector<8x128xbf16>
    %cst_25 = arith.constant dense<0.000000e+00> : vector<8x128xf32>
    %43 = tpu.matmul %42, %41, %cst_25 {dimension_numbers = #tpu.dot_dimension_numbers<[1], [0], [0], [1], [0, 0, 1, 1], [], []>} : vector<8x128xbf16>, vector<128x128xbf16>, vector<8x128xf32> -> vector<8x128xf32>
    %c5 = arith.constant 5 : index
    %c0_26 = arith.constant 0 : index
    %44 = vector.load %arg5[%c5, %c0_26] : memref<8x800xf32, #tpu.memory_space<vmem>>, vector<1x128xf32>
    %45 = vector.broadcast %44 : vector<1x128xf32> to vector<8x128xf32>
    %46 = arith.addf %43, %45 : vector<8x128xf32>
    %cst_27 = arith.constant 0.000000e+00 : f32
    %47 = vector.broadcast %cst_27 : f32 to vector<8x128xf32>
    %48 = arith.maximumf %46, %47 : vector<8x128xf32>
    %c384_28 = arith.constant 384 : index
    %c0_29 = arith.constant 0 : index
    %49 = vector.load %arg4[%c384_28, %c0_29] : memref<512x128xbf16, #tpu.memory_space<vmem>>, vector<128x128xbf16>
    %50 = arith.truncf %48 : vector<8x128xf32> to vector<8x128xbf16>
    %cst_30 = arith.constant dense<0.000000e+00> : vector<8x128xf32>
    %51 = tpu.matmul %50, %49, %cst_30 {dimension_numbers = #tpu.dot_dimension_numbers<[1], [0], [0], [1], [0, 0, 1, 1], [], []>} : vector<8x128xbf16>, vector<128x128xbf16>, vector<8x128xf32> -> vector<8x128xf32>
    %c6 = arith.constant 6 : index
    %c0_31 = arith.constant 0 : index
    %52 = vector.load %arg5[%c6, %c0_31] : memref<8x800xf32, #tpu.memory_space<vmem>>, vector<1x128xf32>
    %53 = vector.broadcast %52 : vector<1x128xf32> to vector<8x128xf32>
    %54 = arith.addf %51, %53 : vector<8x128xf32>
    %55 = arith.negf %54 : vector<8x128xf32>
    %56 = math.exp %55 : vector<8x128xf32>
    %cst_32 = arith.constant 1.000000e+00 : f32
    %57 = vector.broadcast %cst_32 : f32 to vector<8x128xf32>
    %58 = arith.addf %57, %56 : vector<8x128xf32>
    %59 = arith.divf %57, %58 : vector<8x128xf32>
    %c0_33 = arith.constant 0 : index
    %c0_34 = arith.constant 0 : index
    %60 = vector.load %arg6[%c0_33, %c0_34] : memref<8x128xf32, #tpu.memory_space<vmem>>, vector<8x128xf32>
    tpu.vector_store %arg6[%c0_33, %c0_34], %59 {strides = array<i32>} : memref<8x128xf32, #tpu.memory_space<vmem>>, vector<8x128xf32>,
    return
  }
  func.func @transform_0(%arg0: i32) -> (i32, i32) {
    %c0_i32 = arith.constant 0 : i32
    %c0_i32_0 = arith.constant 0 : i32
    return %arg0, %c0_i32 : i32, i32
  }
  func.func @transform_1(%arg0: i32) -> (i32, i32) {
    %c0_i32 = arith.constant 0 : i32
    %c0_i32_0 = arith.constant 0 : i32
    %c0_i32_1 = arith.constant 0 : i32
    return %c0_i32, %c0_i32_0 : i32, i32
  }
  func.func @transform_2(%arg0: i32) -> (i32, i32) {
    %c0_i32 = arith.constant 0 : i32
    %c0_i32_0 = arith.constant 0 : i32
    %c0_i32_1 = arith.constant 0 : i32
    return %c0_i32, %c0_i32_0 : i32, i32
  }
  func.func @transform_3(%arg0: i32) -> (i32, i32) {
    %c0_i32 = arith.constant 0 : i32
    %c0_i32_0 = arith.constant 0 : i32
    %c0_i32_1 = arith.constant 0 : i32
    return %c0_i32, %c0_i32_0 : i32, i32
  }
  func.func @transform_4(%arg0: i32) -> (i32, i32) {
    %c0_i32 = arith.constant 0 : i32
    %c0_i32_0 = arith.constant 0 : i32
    %c0_i32_1 = arith.constant 0 : i32
    return %c0_i32, %c0_i32_0 : i32, i32
  }
  func.func @transform_5(%arg0: i32) -> (i32, i32) {
    %c0_i32 = arith.constant 0 : i32
    %c0_i32_0 = arith.constant 0 : i32
    return %arg0, %c0_i32 : i32, i32
  }
}

</mosaic_0001>

<llo_original>
// kernel: chess_cnn_forward.1
$region0: #{chess_cnn_forward.1}
  #allocation0 [shape = 'u32[]', space=smem, size = 0x4, offset = 0x4, fixed_abs, tag = 'smem constant byte address 0x4 - core index']
  #allocation1 [shape = 'u32[72,128]{1,0:T(1,128)}', space=vmem, size = 0x9000, scoped, tag = 'internal scratch']
  %s0 = inlined_call_operand.vmem [shape: f32[8,384], index: 0, kind: input, shape index: {}]
  %s1 = inlined_call_operand.vmem [shape: bf16[1184,800], index: 1, kind: input, shape index: {}]
  %s2 = inlined_call_operand.vmem [shape: bf16[1056,256], index: 2, kind: input, shape index: {}]
  %s3 = inlined_call_operand.vmem [shape: bf16[512,128], index: 3, kind: input, shape index: {}]
  %s4 = inlined_call_operand.vmem [shape: f32[8,800], index: 4, kind: input, shape index: {}]
  %s5 = inlined_call_operand.vmem [shape: f32[8,128], index: 5, kind: output, shape index: {}]
  %s6 = sld [smem:[#allocation0]]
  $region30: #{chess_cnn_forward.1} parent=0
    _
  %s8 = ssub.s32 1, %s6
  %s9 = scalar_select 0, %s8, %s6
  // Predicated region
  $region2: #{chess_cnn_forward.1} parent=0 // pred_check
    _
  $region3: #{chess_cnn_forward.1} parent=0 // pred_check_branch
    %11 = sbr.rel (0) target = $region5
  $region4: #{chess_cnn_forward.1} parent=0 // pred_region
    _
  $region5: #{chess_cnn_forward.1} parent=0 // pred_fallthru
    _
  // Predicated region
  $region6: #{chess_cnn_forward.1} parent=0 // pred_check
    _
  $region7: #{chess_cnn_forward.1} parent=0 // pred_check_branch
    %13 = sbr.rel (0) target = $region9
  $region8: #{chess_cnn_forward.1} parent=0 // pred_region
    _
  $region9: #{chess_cnn_forward.1} parent=0 // pred_fallthru
    _
  // Predicated region
  $region10: #{chess_cnn_forward.1} parent=0 // pred_check
    _
  $region11: #{chess_cnn_forward.1} parent=0 // pred_check_branch
    %15 = sbr.rel (0) target = $region13
  $region12: #{chess_cnn_forward.1} parent=0 // pred_region
    _
  $region13: #{chess_cnn_forward.1} parent=0 // pred_fallthru
    _
  // Predicated region
  $region14: #{chess_cnn_forward.1} parent=0 // pred_check
    _
  $region15: #{chess_cnn_forward.1} parent=0 // pred_check_branch
    %17 = sbr.rel (0) target = $region17
  $region16: #{chess_cnn_forward.1} parent=0 // pred_region
    _
  $region17: #{chess_cnn_forward.1} parent=0 // pred_fallthru
    _
  // Predicated region
  $region18: #{chess_cnn_forward.1} parent=0 // pred_check
    _
  $region19: #{chess_cnn_forward.1} parent=0 // pred_check_branch
    %19 = sbr.rel (0) target = $region21
  $region20: #{chess_cnn_forward.1} parent=0 // pred_region
    _
  $region21: #{chess_cnn_forward.1} parent=0 // pred_fallthru
    _
  %v21 = vld [vmem:[%s0] sm:$0xff]
  %v22 = vld [vmem:[%s0 + $0x8] sm:$0xff]
  %v23 = vld [vmem:[%s0 + $0x10] sm:$0xff]
  %v24 = vld [vmem:[%s1] sm:$0xff]
  %v25 = vld [vmem:[%s1 + $0x8] sm:$0xff]
  %v26 = vld [vmem:[%s1 + $0x10] sm:$0xff]
  %v27 = vld [vmem:[%s1 + $0x18] sm:$0xf]
  %v28 = vld [vmem:[%s1 + $0x1c] sm:$0xff]
  %v29 = vld [vmem:[%s1 + $0x24] sm:$0xff]
  %v30 = vld [vmem:[%s1 + $0x2c] sm:$0xff]
  %v31 = vld [vmem:[%s1 + $0x34] sm:$0xf]
  %v32 = vld [vmem:[%s1 + $0x38] sm:$0xff]
  %v33 = vld [vmem:[%s1 + $0x40] sm:$0xff]
  %v34 = vld [vmem:[%s1 + $0x48] sm:$0xff]
  %v35 = vld [vmem:[%s1 + $0x50] sm:$0xf]
  %v36 = vld [vmem:[%s1 + $0x54] sm:$0xff]
  %v37 = vld [vmem:[%s1 + $0x5c] sm:$0xff]
  %v38 = vld [vmem:[%s1 + $0x64] sm:$0xff]
  %v39 = vld [vmem:[%s1 + $0x6c] sm:$0xf]
  %v40 = vld [vmem:[%s1 + $0x70] sm:$0xff]
  %v41 = vld [vmem:[%s1 + $0x78] sm:$0xff]
  %v42 = vld [vmem:[%s1 + $0x80] sm:$0xff]
  %v43 = vld [vmem:[%s1 + $0x88] sm:$0xf]
  %v44 = vld [vmem:[%s1 + $0x8c] sm:$0xff]
  %v45 = vld [vmem:[%s1 + $0x94] sm:$0xff]
  %v46 = vld [vmem:[%s1 + $0x9c] sm:$0xff]
  %v47 = vld [vmem:[%s1 + $0xa4] sm:$0xf]
  %v48 = vld [vmem:[%s1 + $0xa8] sm:$0xff]
  %v49 = vld [vmem:[%s1 + $0xb0] sm:$0xff]
  %v50 = vld [vmem:[%s1 + $0xb8] sm:$0xff]
  %v51 = vld [vmem:[%s1 + $0xc0] sm:$0xf]
  %v52 = vld [vmem:[%s1 + $0xc4] sm:$0xff]
  %v53 = vld [vmem:[%s1 + $0xcc] sm:$0xff]
  %v54 = vld [vmem:[%s1 + $0xd4] sm:$0xff]
  %v55 = vld [vmem:[%s1 + $0xdc] sm:$0xf]
  %v56 = vld [vmem:[%s1 + $0xe0] sm:$0xff]
  %v57 = vld [vmem:[%s1 + $0xe8] sm:$0xff]
  %v58 = vld [vmem:[%s1 + $0xf0] sm:$0xff]
  %v59 = vld [vmem:[%s1 + $0xf8] sm:$0xf]
  %v60 = vld [vmem:[%s1 + $0xfc] sm:$0xff]
  %v61 = vld [vmem:[%s1 + $0x104] sm:$0xff]
  %v62 = vld [vmem:[%s1 + $0x10c] sm:$0xff]
  %v63 = vld [vmem:[%s1 + $0x114] sm:$0xf]
  %v64 = vld [vmem:[%s1 + $0x118] sm:$0xff]
  %v65 = vld [vmem:[%s1 + $0x120] sm:$0xff]
  %v66 = vld [vmem:[%s1 + $0x128] sm:$0xff]
  %v67 = vld [vmem:[%s1 + $0x130] sm:$0xf]
  %v68 = vld [vmem:[%s1 + $0x134] sm:$0xff]
  %v69 = vld [vmem:[%s1 + $0x13c] sm:$0xff]
  %v70 = vld [vmem:[%s1 + $0x144] sm:$0xff]
  %v71 = vld [vmem:[%s1 + $0x14c] sm:$0xf]
  %v72 = vld [vmem:[%s1 + $0x150] sm:$0xff]
  %v73 = vld [vmem:[%s1 + $0x158] sm:$0xff]
  %v74 = vld [vmem:[%s1 + $0x160] sm:$0xff]
  %v75 = vld [vmem:[%s1 + $0x168] sm:$0xf]
  %v76 = vld [vmem:[%s1 + $0x16c] sm:$0xff]
  %v77 = vld [vmem:[%s1 + $0x174] sm:$0xff]
  %v78 = vld [vmem:[%s1 + $0x17c] sm:$0xff]
  %v79 = vld [vmem:[%s1 + $0x184] sm:$0xf]
  %v80 = vld [vmem:[%s1 + $0x188] sm:$0xff]
  %v81 = vld [vmem:[%s1 + $0x190] sm:$0xff]
  %v82 = vld [vmem:[%s1 + $0x198] sm:$0xff]
  %v83 = vld [vmem:[%s1 + $0x1a0] sm:$0xf]
  %v84 = vld [vmem:[%s1 + $0x1a4] sm:$0xff]
  %v85 = vld [vmem:[%s1 + $0x1ac] sm:$0xff]
  %v86 = vld [vmem:[%s1 + $0x1b4] sm:$0xff]
  %v87 = vld [vmem:[%s1 + $0x1bc] sm:$0xf]
  %v88 = vld [vmem:[%s1 + $0x1c0] sm:$0xff]
  %v89 = vld [vmem:[%s1 + $0x1c8] sm:$0xff]
  %v90 = vld [vmem:[%s1 + $0x1d0] sm:$0xff]
  %v91 = vld [vmem:[%s1 + $0x1d8] sm:$0xf]
  %v92 = vld [vmem:[%s1 + $0x1dc] sm:$0xff]
  %v93 = vld [vmem:[%s1 + $0x1e4] sm:$0xff]
  %v94 = vld [vmem:[%s1 + $0x1ec] sm:$0xff]
  %v95 = vld [vmem:[%s1 + $0x1f4] sm:$0xf]
  %v96 = vld [vmem:[%s1 + $0x1f8] sm:$0xff]
  %v97 = vld [vmem:[%s1 + $0x200] sm:$0xff]
  %v98 = vld [vmem:[%s1 + $0x208] sm:$0xff]
  %v99 = vld [vmem:[%s1 + $0x210] sm:$0xf]
  %v100 = vld [vmem:[%s1 + $0x214] sm:$0xff]
  %v101 = vld [vmem:[%s1 + $0x21c] sm:$0xff]
  %v102 = vld [vmem:[%s1 + $0x224] sm:$0xff]
  %v103 = vld [vmem:[%s1 + $0x22c] sm:$0xf]
  %v104 = vld [vmem:[%s1 + $0x230] sm:$0xff]
  %v105 = vld [vmem:[%s1 + $0x238] sm:$0xff]
  %v106 = vld [vmem:[%s1 + $0x240] sm:$0xff]
  %v107 = vld [vmem:[%s1 + $0x248] sm:$0xf]
  %v108 = vld [vmem:[%s1 + $0x24c] sm:$0xff]
  %v109 = vld [vmem:[%s1 + $0x254] sm:$0xff]
  %v110 = vld [vmem:[%s1 + $0x25c] sm:$0xff]
  %v111 = vld [vmem:[%s1 + $0x264] sm:$0xf]
  %v112 = vld [vmem:[%s1 + $0x268] sm:$0xff]
  %v113 = vld [vmem:[%s1 + $0x270] sm:$0xff]
  %v114 = vld [vmem:[%s1 + $0x278] sm:$0xff]
  %v115 = vld [vmem:[%s1 + $0x280] sm:$0xf]
  %v116 = vld [vmem:[%s1 + $0x284] sm:$0xff]
  %v117 = vld [vmem:[%s1 + $0x28c] sm:$0xff]
  %v118 = vld [vmem:[%s1 + $0x294] sm:$0xff]
  %v119 = vld [vmem:[%s1 + $0x29c] sm:$0xf]
  %v120 = vld [vmem:[%s1 + $0x2a0] sm:$0xff]
  %v121 = vld [vmem:[%s1 + $0x2a8] sm:$0xff]
  %v122 = vld [vmem:[%s1 + $0x2b0] sm:$0xff]
  %v123 = vld [vmem:[%s1 + $0x2b8] sm:$0xf]
  %v124 = vld [vmem:[%s1 + $0x2bc] sm:$0xff]
  %v125 = vld [vmem:[%s1 + $0x2c4] sm:$0xff]
  %v126 = vld [vmem:[%s1 + $0x2cc] sm:$0xff]
  %v127 = vld [vmem:[%s1 + $0x2d4] sm:$0xf]
  %v128 = vld [vmem:[%s1 + $0x2d8] sm:$0xff]
  %v129 = vld [vmem:[%s1 + $0x2e0] sm:$0xff]
  %v130 = vld [vmem:[%s1 + $0x2e8] sm:$0xff]
  %v131 = vld [vmem:[%s1 + $0x2f0] sm:$0xf]
  %v132 = vld [vmem:[%s1 + $0x2f4] sm:$0xff]
  %v133 = vld [vmem:[%s1 + $0x2fc] sm:$0xff]
  %v134 = vld [vmem:[%s1 + $0x304] sm:$0xff]
  %v135 = vld [vmem:[%s1 + $0x30c] sm:$0xf]
  %v136 = vld [vmem:[%s1 + $0x310] sm:$0xff]
  %v137 = vld [vmem:[%s1 + $0x318] sm:$0xff]
  %v138 = vld [vmem:[%s1 + $0x320] sm:$0xff]
  %v139 = vld [vmem:[%s1 + $0x328] sm:$0xf]
  %v140 = vld [vmem:[%s1 + $0x32c] sm:$0xff]
  %v141 = vld [vmem:[%s1 + $0x334] sm:$0xff]
  %v142 = vld [vmem:[%s1 + $0x33c] sm:$0xff]
  %v143 = vld [vmem:[%s1 + $0x344] sm:$0xf]
  %v144 = vld [vmem:[%s1 + $0x348] sm:$0xff]
  %v145 = vld [vmem:[%s1 + $0x350] sm:$0xff]
  %v146 = vld [vmem:[%s1 + $0x358] sm:$0xff]
  %v147 = vld [vmem:[%s1 + $0x360] sm:$0xf]
  %v148 = vld [vmem:[%s1 + $0x364] sm:$0xff]
  %v149 = vld [vmem:[%s1 + $0x36c] sm:$0xff]
  %v150 = vld [vmem:[%s1 + $0x374] sm:$0xff]
  %v151 = vld [vmem:[%s1 + $0x37c] sm:$0xf]
  %v152 = vld [vmem:[%s1 + $0x380] sm:$0xff]
  %v153 = vld [vmem:[%s1 + $0x388] sm:$0xff]
  %v154 = vld [vmem:[%s1 + $0x390] sm:$0xff]
  %v155 = vld [vmem:[%s1 + $0x398] sm:$0xf]
  %v156 = vld [vmem:[%s1 + $0x39c] sm:$0xff]
  %v157 = vld [vmem:[%s1 + $0x3a4] sm:$0xff]
  %v158 = vld [vmem:[%s1 + $0x3ac] sm:$0xff]
  %v159 = vld [vmem:[%s1 + $0x3b4] sm:$0xf]
  %v160 = vld [vmem:[%s1 + $0x3b8] sm:$0xff]
  %v161 = vld [vmem:[%s1 + $0x3c0] sm:$0xff]
  %v162 = vld [vmem:[%s1 + $0x3c8] sm:$0xff]
  %v163 = vld [vmem:[%s1 + $0x3d0] sm:$0xf]
  %v164 = vld [vmem:[%s1 + $0x3d4] sm:$0xff]
  %v165 = vld [vmem:[%s1 + $0x3dc] sm:$0xff]
  %v166 = vld [vmem:[%s1 + $0x3e4] sm:$0xff]
  %v167 = vld [vmem:[%s1 + $0x3ec] sm:$0xf]
  %v168 = vld [vmem:[%s1 + $0x3f0] sm:$0xff]
  %v169 = vld [vmem:[%s1 + $0x3f8] sm:$0xff]
  %v170 = vld [vmem:[%s1 + $0x400] sm:$0xff]
  %v171 = vld [vmem:[%s1 + $0x408] sm:$0xf]
  %v172 = vld [vmem:[%s1 + $0x40c] sm:$0xff]
  %v173 = vld [vmem:[%s1 + $0x414] sm:$0xff]
  %v174 = vld [vmem:[%s1 + $0x41c] sm:$0xff]
  %v175 = vld [vmem:[%s1 + $0x424] sm:$0xf]
  %v176 = vld [vmem:[%s1 + $0x428] sm:$0xff]
  %v177 = vld [vmem:[%s1 + $0x430] sm:$0xff]
  %v178 = vld [vmem:[%s1 + $0x438] sm:$0xff]
  %v179 = vld [vmem:[%s1 + $0x440] sm:$0xf]
  %v180 = vld [vmem:[%s1 + $0x444] sm:$0xff]
  %v181 = vld [vmem:[%s1 + $0x44c] sm:$0xff]
  %v182 = vld [vmem:[%s1 + $0x454] sm:$0xff]
  %v183 = vld [vmem:[%s1 + $0x45c] sm:$0xf]
  %v184 = vld [vmem:[%s1 + $0x460] sm:$0xff]
  %v185 = vld [vmem:[%s1 + $0x468] sm:$0xff]
  %v186 = vld [vmem:[%s1 + $0x470] sm:$0xff]
  %v187 = vld [vmem:[%s1 + $0x478] sm:$0xf]
  %v188 = vld [vmem:[%s1 + $0x47c] sm:$0xff]
  %v189 = vld [vmem:[%s1 + $0x484] sm:$0xff]
  %v190 = vld [vmem:[%s1 + $0x48c] sm:$0xff]
  %v191 = vld [vmem:[%s1 + $0x494] sm:$0xf]
  %v192 = vld [vmem:[%s1 + $0x498] sm:$0xff]
  %v193 = vld [vmem:[%s1 + $0x4a0] sm:$0xff]
  %v194 = vld [vmem:[%s1 + $0x4a8] sm:$0xff]
  %v195 = vld [vmem:[%s1 + $0x4b0] sm:$0xf]
  %v196 = vld [vmem:[%s1 + $0x4b4] sm:$0xff]
  %v197 = vld [vmem:[%s1 + $0x4bc] sm:$0xff]
  %v198 = vld [vmem:[%s1 + $0x4c4] sm:$0xff]
  %v199 = vld [vmem:[%s1 + $0x4cc] sm:$0xf]
  %v200 = vld [vmem:[%s1 + $0x4d0] sm:$0xff]
  %v201 = vld [vmem:[%s1 + $0x4d8] sm:$0xff]
  %v202 = vld [vmem:[%s1 + $0x4e0] sm:$0xff]
  %v203 = vld [vmem:[%s1 + $0x4e8] sm:$0xf]
  %v204 = vld [vmem:[%s1 + $0x4ec] sm:$0xff]
  %v205 = vld [vmem:[%s1 + $0x4f4] sm:$0xff]
  %v206 = vld [vmem:[%s1 + $0x4fc] sm:$0xff]
  %v207 = vld [vmem:[%s1 + $0x504] sm:$0xf]
  %v208 = vld [vmem:[%s1 + $0x508] sm:$0xff]
  %v209 = vld [vmem:[%s1 + $0x510] sm:$0xff]
  %v210 = vld [vmem:[%s1 + $0x518] sm:$0xff]
  %v211 = vld [vmem:[%s1 + $0x520] sm:$0xf]
  %v212 = vld [vmem:[%s1 + $0x524] sm:$0xff]
  %v213 = vld [vmem:[%s1 + $0x52c] sm:$0xff]
  %v214 = vld [vmem:[%s1 + $0x534] sm:$0xff]
  %v215 = vld [vmem:[%s1 + $0x53c] sm:$0xf]
  %v216 = vpack.c.bf16 %v21, %v21
  %v217 = vpack.c.bf16 %v22, %v22
  %v218 = vpack.c.bf16 %v23, %v23
  %v219 = vld [vmem:[%s4] ss:$8 sm:$0xf]
  %v220 = vld [vmem:[%s4] ss:$8 sm:$0x70]
  %v221 = vor.u32 %v219, %v220
  %v223 = vperm.slane %v221, 0
  %v224 = vperm.slane %v221, 1
  %v225 = vperm.slane %v221, 2
  %v226 = vperm.slane %v221, 3
  %v227 = vperm.slane %v221, 4
  %v228 = vperm.slane %v221, 5
  %v229 = vperm.slane %v221, 6
  %v429 = vunpack.c.l.b16 %v24
  %v430 = vunpack.c.h.b16 %v24
  %v431 = vunpack.c.l.b16 %v25
  %v432 = vunpack.c.h.b16 %v25
  %v433 = vunpack.c.l.b16 %v26
  %v434 = vunpack.c.h.b16 %v26
  %v435 = vunpack.c.l.b16 %v27
  %v436 = vunpack.c.l.b16 %v28
  %v437 = vunpack.c.h.b16 %v28
  %v438 = vunpack.c.l.b16 %v29
  %v439 = vunpack.c.h.b16 %v29
  %v440 = vunpack.c.l.b16 %v30
  %v441 = vunpack.c.h.b16 %v30
  %v442 = vunpack.c.l.b16 %v31
  %v443 = vunpack.c.l.b16 %v32
  %v444 = vunpack.c.h.b16 %v32
  %v445 = vunpack.c.l.b16 %v33
  %v446 = vunpack.c.h.b16 %v33
  %v447 = vunpack.c.l.b16 %v34
  %v448 = vunpack.c.h.b16 %v34
  %v449 = vunpack.c.l.b16 %v35
  %v450 = vunpack.c.l.b16 %v36
  %v451 = vunpack.c.h.b16 %v36
  %v452 = vunpack.c.l.b16 %v37
  %v453 = vunpack.c.h.b16 %v37
  %v454 = vunpack.c.l.b16 %v38
  %v455 = vunpack.c.h.b16 %v38
  %v456 = vunpack.c.l.b16 %v39
  %v457 = vunpack.c.l.b16 %v40
  %v458 = vunpack.c.h.b16 %v40
  %v459 = vunpack.c.l.b16 %v41
  %v460 = vunpack.c.h.b16 %v41
  %v461 = vunpack.c.l.b16 %v42
  %v462 = vunpack.c.h.b16 %v42
  %v463 = vunpack.c.l.b16 %v43
  %v464 = vunpack.c.l.b16 %v44
  %v465 = vunpack.c.h.b16 %v44
  %v466 = vunpack.c.l.b16 %v45
  %v467 = vunpack.c.h.b16 %v45
  %v468 = vunpack.c.l.b16 %v46
  %v469 = vunpack.c.h.b16 %v46
  %v470 = vunpack.c.l.b16 %v47
  %v471 = vunpack.c.l.b16 %v48
  %v472 = vunpack.c.h.b16 %v48
  %v473 = vunpack.c.l.b16 %v49
  %v474 = vunpack.c.h.b16 %v49
  %v475 = vunpack.c.l.b16 %v50
  %v476 = vunpack.c.h.b16 %v50
  %v477 = vunpack.c.l.b16 %v51
  %v478 = vunpack.c.l.b16 %v52
  %v479 = vunpack.c.h.b16 %v52
  %v480 = vunpack.c.l.b16 %v53
  %v481 = vunpack.c.h.b16 %v53
  %v482 = vunpack.c.l.b16 %v54
  %v483 = vunpack.c.h.b16 %v54
  %v484 = vunpack.c.l.b16 %v55
  %v485 = vunpack.c.l.b16 %v56
  %v486 = vunpack.c.h.b16 %v56
  %v487 = vunpack.c.l.b16 %v57
  %v488 = vunpack.c.h.b16 %v57
  %v489 = vunpack.c.l.b16 %v58
  %v490 = vunpack.c.h.b16 %v58
  %v491 = vunpack.c.l.b16 %v59
  %v492 = vunpack.c.l.b16 %v60
  %v493 = vunpack.c.h.b16 %v60
  %v494 = vunpack.c.l.b16 %v61
  %v495 = vunpack.c.h.b16 %v61
  %v496 = vunpack.c.l.b16 %v62
  %v497 = vunpack.c.h.b16 %v62
  %v498 = vunpack.c.l.b16 %v63
  %v499 = vunpack.c.l.b16 %v64
  %v500 = vunpack.c.h.b16 %v64
  %v501 = vunpack.c.l.b16 %v65
  %v502 = vunpack.c.h.b16 %v65
  %v503 = vunpack.c.l.b16 %v66
  %v504 = vunpack.c.h.b16 %v66
  %v505 = vunpack.c.l.b16 %v67
  %v506 = vunpack.c.l.b16 %v68
  %v507 = vunpack.c.h.b16 %v68
  %v508 = vunpack.c.l.b16 %v69
  %v509 = vunpack.c.h.b16 %v69
  %v510 = vunpack.c.l.b16 %v70
  %v511 = vunpack.c.h.b16 %v70
  %v512 = vunpack.c.l.b16 %v71
  %v513 = vunpack.c.l.b16 %v72
  %v514 = vunpack.c.h.b16 %v72
  %v515 = vunpack.c.l.b16 %v73
  %v516 = vunpack.c.h.b16 %v73
  %v517 = vunpack.c.l.b16 %v74
  %v518 = vunpack.c.h.b16 %v74
  %v519 = vunpack.c.l.b16 %v75
  %v520 = vunpack.c.l.b16 %v76
  %v521 = vunpack.c.h.b16 %v76
  %v522 = vunpack.c.l.b16 %v77
  %v523 = vunpack.c.h.b16 %v77
  %v524 = vunpack.c.l.b16 %v78
  %v525 = vunpack.c.h.b16 %v78
  %v526 = vunpack.c.l.b16 %v79
  %v527 = vunpack.c.l.b16 %v80
  %v528 = vunpack.c.h.b16 %v80
  %v529 = vunpack.c.l.b16 %v81
  %v530 = vunpack.c.h.b16 %v81
  %v531 = vunpack.c.l.b16 %v82
  %v532 = vunpack.c.h.b16 %v82
  %v533 = vunpack.c.l.b16 %v83
  %v534 = vunpack.c.l.b16 %v84
  %v535 = vunpack.c.h.b16 %v84
  %v536 = vunpack.c.l.b16 %v85
  %v537 = vunpack.c.h.b16 %v85
  %v538 = vunpack.c.l.b16 %v86
  %v539 = vunpack.c.h.b16 %v86
  %v540 = vunpack.c.l.b16 %v87
  %v541 = vunpack.c.l.b16 %v88
  %v542 = vunpack.c.h.b16 %v88
  %v543 = vunpack.c.l.b16 %v89
  %v544 = vunpack.c.h.b16 %v89
  %v545 = vunpack.c.l.b16 %v90
  %v546 = vunpack.c.h.b16 %v90
  %v547 = vunpack.c.l.b16 %v91
  %v548 = vunpack.c.l.b16 %v92
  %v549 = vunpack.c.h.b16 %v92
  %v550 = vunpack.c.l.b16 %v93
  %v551 = vunpack.c.h.b16 %v93
  %v552 = vunpack.c.l.b16 %v94
  %v553 = vunpack.c.h.b16 %v94
  %v554 = vunpack.c.l.b16 %v95
  %v555 = vunpack.c.l.b16 %v96
  %v556 = vunpack.c.h.b16 %v96
  %v557 = vunpack.c.l.b16 %v97
  %v558 = vunpack.c.h.b16 %v97
  %v559 = vunpack.c.l.b16 %v98
  %v560 = vunpack.c.h.b16 %v98
  %v561 = vunpack.c.l.b16 %v99
  %v562 = vunpack.c.l.b16 %v100
  %v563 = vunpack.c.h.b16 %v100
  %v564 = vunpack.c.l.b16 %v101
  %v565 = vunpack.c.h.b16 %v101
  %v566 = vunpack.c.l.b16 %v102
  %v567 = vunpack.c.h.b16 %v102
  %v568 = vunpack.c.l.b16 %v103
  %v569 = vunpack.c.l.b16 %v104
  %v570 = vunpack.c.h.b16 %v104
  %v571 = vunpack.c.l.b16 %v105
  %v572 = vunpack.c.h.b16 %v105
  %v573 = vunpack.c.l.b16 %v106
  %v574 = vunpack.c.h.b16 %v106
  %v575 = vunpack.c.l.b16 %v107
  %v576 = vunpack.c.l.b16 %v108
  %v577 = vunpack.c.h.b16 %v108
  %v578 = vunpack.c.l.b16 %v109
  %v579 = vunpack.c.h.b16 %v109
  %v580 = vunpack.c.l.b16 %v110
  %v581 = vunpack.c.h.b16 %v110
  %v582 = vunpack.c.l.b16 %v111
  %v583 = vunpack.c.l.b16 %v112
  %v584 = vunpack.c.h.b16 %v112
  %v585 = vunpack.c.l.b16 %v113
  %v586 = vunpack.c.h.b16 %v113
  %v587 = vunpack.c.l.b16 %v114
  %v588 = vunpack.c.h.b16 %v114
  %v589 = vunpack.c.l.b16 %v115
  %v590 = vunpack.c.l.b16 %v116
  %v591 = vunpack.c.h.b16 %v116
  %v592 = vunpack.c.l.b16 %v117
  %v593 = vunpack.c.h.b16 %v117
  %v594 = vunpack.c.l.b16 %v118
  %v595 = vunpack.c.h.b16 %v118
  %v596 = vunpack.c.l.b16 %v119
  %v597 = vunpack.c.l.b16 %v120
  %v598 = vunpack.c.h.b16 %v120
  %v599 = vunpack.c.l.b16 %v121
  %v600 = vunpack.c.h.b16 %v121
  %v601 = vunpack.c.l.b16 %v122
  %v602 = vunpack.c.h.b16 %v122
  %v603 = vunpack.c.l.b16 %v123
  %v604 = vunpack.c.l.b16 %v124
  %v605 = vunpack.c.h.b16 %v124
  %v606 = vunpack.c.l.b16 %v125
  %v607 = vunpack.c.h.b16 %v125
  %v608 = vunpack.c.l.b16 %v126
  %v609 = vunpack.c.h.b16 %v126
  %v610 = vunpack.c.l.b16 %v127
  %v611 = vunpack.c.l.b16 %v128
  %v612 = vunpack.c.h.b16 %v128
  %v613 = vunpack.c.l.b16 %v129
  %v614 = vunpack.c.h.b16 %v129
  %v615 = vunpack.c.l.b16 %v130
  %v616 = vunpack.c.h.b16 %v130
  %v617 = vunpack.c.l.b16 %v131
  %v618 = vunpack.c.l.b16 %v132
  %v619 = vunpack.c.h.b16 %v132
  %v620 = vunpack.c.l.b16 %v133
  %v621 = vunpack.c.h.b16 %v133
  %v622 = vunpack.c.l.b16 %v134
  %v623 = vunpack.c.h.b16 %v134
  %v624 = vunpack.c.l.b16 %v135
  %v625 = vunpack.c.l.b16 %v136
  %v626 = vunpack.c.h.b16 %v136
  %v627 = vunpack.c.l.b16 %v137
  %v628 = vunpack.c.h.b16 %v137
  %v629 = vunpack.c.l.b16 %v138
  %v630 = vunpack.c.h.b16 %v138
  %v631 = vunpack.c.l.b16 %v139
  %v632 = vunpack.c.l.b16 %v140
  %v633 = vunpack.c.h.b16 %v140
  %v634 = vunpack.c.l.b16 %v141
  %v635 = vunpack.c.h.b16 %v141
  %v636 = vunpack.c.l.b16 %v142
  %v637 = vunpack.c.h.b16 %v142
  %v638 = vunpack.c.l.b16 %v143
  %v639 = vunpack.c.l.b16 %v144
  %v640 = vunpack.c.h.b16 %v144
  %v641 = vunpack.c.l.b16 %v145
  %v642 = vunpack.c.h.b16 %v145
  %v643 = vunpack.c.l.b16 %v146
  %v644 = vunpack.c.h.b16 %v146
  %v645 = vunpack.c.l.b16 %v147
  %v646 = vunpack.c.l.b16 %v148
  %v647 = vunpack.c.h.b16 %v148
  %v648 = vunpack.c.l.b16 %v149
  %v649 = vunpack.c.h.b16 %v149
  %v650 = vunpack.c.l.b16 %v150
  %v651 = vunpack.c.h.b16 %v150
  %v652 = vunpack.c.l.b16 %v151
  %v653 = vunpack.c.l.b16 %v152
  %v654 = vunpack.c.h.b16 %v152
  %v655 = vunpack.c.l.b16 %v153
  %v656 = vunpack.c.h.b16 %v153
  %v657 = vunpack.c.l.b16 %v154
  %v658 = vunpack.c.h.b16 %v154
  %v659 = vunpack.c.l.b16 %v155
  %v660 = vunpack.c.l.b16 %v156
  %v661 = vunpack.c.h.b16 %v156
  %v662 = vunpack.c.l.b16 %v157
  %v663 = vunpack.c.h.b16 %v157
  %v664 = vunpack.c.l.b16 %v158
  %v665 = vunpack.c.h.b16 %v158
  %v666 = vunpack.c.l.b16 %v159
  %v667 = vunpack.c.l.b16 %v160
  %v668 = vunpack.c.h.b16 %v160
  %v669 = vunpack.c.l.b16 %v161
  %v670 = vunpack.c.h.b16 %v161
  %v671 = vunpack.c.l.b16 %v162
  %v672 = vunpack.c.h.b16 %v162
  %v673 = vunpack.c.l.b16 %v163
  %v674 = vunpack.c.l.b16 %v164
  %v675 = vunpack.c.h.b16 %v164
  %v676 = vunpack.c.l.b16 %v165
  %v677 = vunpack.c.h.b16 %v165
  %v678 = vunpack.c.l.b16 %v166
  %v679 = vunpack.c.h.b16 %v166
  %v680 = vunpack.c.l.b16 %v167
  %v681 = vunpack.c.l.b16 %v168
  %v682 = vunpack.c.h.b16 %v168
  %v683 = vunpack.c.l.b16 %v169
  %v684 = vunpack.c.h.b16 %v169
  %v685 = vunpack.c.l.b16 %v170
  %v686 = vunpack.c.h.b16 %v170
  %v687 = vunpack.c.l.b16 %v171
  %v688 = vunpack.c.l.b16 %v172
  %v689 = vunpack.c.h.b16 %v172
  %v690 = vunpack.c.l.b16 %v173
  %v691 = vunpack.c.h.b16 %v173
  %v692 = vunpack.c.l.b16 %v174
  %v693 = vunpack.c.h.b16 %v174
  %v694 = vunpack.c.l.b16 %v175
  %v695 = vunpack.c.l.b16 %v176
  %v696 = vunpack.c.h.b16 %v176
  %v697 = vunpack.c.l.b16 %v177
  %v698 = vunpack.c.h.b16 %v177
  %v699 = vunpack.c.l.b16 %v178
  %v700 = vunpack.c.h.b16 %v178
  %v701 = vunpack.c.l.b16 %v179
  %v702 = vunpack.c.l.b16 %v180
  %v703 = vunpack.c.h.b16 %v180
  %v704 = vunpack.c.l.b16 %v181
  %v705 = vunpack.c.h.b16 %v181
  %v706 = vunpack.c.l.b16 %v182
  %v707 = vunpack.c.h.b16 %v182
  %v708 = vunpack.c.l.b16 %v183
  %v709 = vunpack.c.l.b16 %v184
  %v710 = vunpack.c.h.b16 %v184
  %v711 = vunpack.c.l.b16 %v185
  %v712 = vunpack.c.h.b16 %v185
  %v713 = vunpack.c.l.b16 %v186
  %v714 = vunpack.c.h.b16 %v186
  %v715 = vunpack.c.l.b16 %v187
  %v716 = vunpack.c.l.b16 %v188
  %v717 = vunpack.c.h.b16 %v188
  %v718 = vunpack.c.l.b16 %v189
  %v719 = vunpack.c.h.b16 %v189
  %v720 = vunpack.c.l.b16 %v190
  %v721 = vunpack.c.h.b16 %v190
  %v722 = vunpack.c.l.b16 %v191
  %v723 = vunpack.c.l.b16 %v192
  %v724 = vunpack.c.h.b16 %v192
  %v725 = vunpack.c.l.b16 %v193
  %v726 = vunpack.c.h.b16 %v193
  %v727 = vunpack.c.l.b16 %v194
  %v728 = vunpack.c.h.b16 %v194
  %v729 = vunpack.c.l.b16 %v195
  %v730 = vunpack.c.l.b16 %v196
  %v731 = vunpack.c.h.b16 %v196
  %v732 = vunpack.c.l.b16 %v197
  %v733 = vunpack.c.h.b16 %v197
  %v734 = vunpack.c.l.b16 %v198
  %v735 = vunpack.c.h.b16 %v198
  %v736 = vunpack.c.l.b16 %v199
  %v737 = vunpack.c.l.b16 %v200
  %v738 = vunpack.c.h.b16 %v200
  %v739 = vunpack.c.l.b16 %v201
  %v740 = vunpack.c.h.b16 %v201
  %v741 = vunpack.c.l.b16 %v202
  %v742 = vunpack.c.h.b16 %v202
  %v743 = vunpack.c.l.b16 %v203
  %v744 = vunpack.c.l.b16 %v204
  %v745 = vunpack.c.h.b16 %v204
  %v746 = vunpack.c.l.b16 %v205
  %v747 = vunpack.c.h.b16 %v205
  %v748 = vunpack.c.l.b16 %v206
  %v749 = vunpack.c.h.b16 %v206
  %v750 = vunpack.c.l.b16 %v207
  %v751 = vunpack.c.l.b16 %v208
  %v752 = vunpack.c.h.b16 %v208
  %v753 = vunpack.c.l.b16 %v209
  %v754 = vunpack.c.h.b16 %v209
  %v755 = vunpack.c.l.b16 %v210
  %v756 = vunpack.c.h.b16 %v210
  %v757 = vunpack.c.l.b16 %v211
  %v758 = vunpack.c.l.b16 %v212
  %v759 = vunpack.c.h.b16 %v212
  %v760 = vunpack.c.l.b16 %v213
  %v761 = vunpack.c.h.b16 %v213
  %v762 = vunpack.c.l.b16 %v214
  %v763 = vunpack.c.h.b16 %v214
  %v764 = vunpack.c.l.b16 %v215
  %v765 = vpack.c.b16 %v436, %v429
  %v766 = vpack.c.b16 %v437, %v430
  %v767 = vpack.c.b16 %v438, %v431
  %v768 = vpack.c.b16 %v439, %v432
  %v769 = vpack.c.b16 %v440, %v433
  %v770 = vpack.c.b16 %v441, %v434
  %v771 = vpack.c.b16 %v442, %v435
  %v772 = vpack.c.b16 %v450, %v443
  %v773 = vpack.c.b16 %v451, %v444
  %v774 = vpack.c.b16 %v452, %v445
  %v775 = vpack.c.b16 %v453, %v446
  %v776 = vpack.c.b16 %v454, %v447
  %v777 = vpack.c.b16 %v455, %v448
  %v778 = vpack.c.b16 %v456, %v449
  %v779 = vpack.c.b16 %v464, %v457
  %v780 = vpack.c.b16 %v465, %v458
  %v781 = vpack.c.b16 %v466, %v459
  %v782 = vpack.c.b16 %v467, %v460
  %v783 = vpack.c.b16 %v468, %v461
  %v784 = vpack.c.b16 %v469, %v462
  %v785 = vpack.c.b16 %v470, %v463
  %v786 = vpack.c.b16 %v478, %v471
  %v787 = vpack.c.b16 %v479, %v472
  %v788 = vpack.c.b16 %v480, %v473
  %v789 = vpack.c.b16 %v481, %v474
  %v790 = vpack.c.b16 %v482, %v475
  %v791 = vpack.c.b16 %v483, %v476
  %v792 = vpack.c.b16 %v484, %v477
  %v793 = vpack.c.b16 %v492, %v485
  %v794 = vpack.c.b16 %v493, %v486
  %v795 = vpack.c.b16 %v494, %v487
  %v796 = vpack.c.b16 %v495, %v488
  %v797 = vpack.c.b16 %v496, %v489
  %v798 = vpack.c.b16 %v497, %v490
  %v799 = vpack.c.b16 %v498, %v491
  %v800 = vpack.c.b16 %v506, %v499
  %v801 = vpack.c.b16 %v507, %v500
  %v802 = vpack.c.b16 %v508, %v501
  %v803 = vpack.c.b16 %v509, %v502
  %v804 = vpack.c.b16 %v510, %v503
  %v805 = vpack.c.b16 %v511, %v504
  %v806 = vpack.c.b16 %v512, %v505
  %v807 = vpack.c.b16 %v520, %v513
  %v808 = vpack.c.b16 %v521, %v514
  %v809 = vpack.c.b16 %v522, %v515
  %v810 = vpack.c.b16 %v523, %v516
  %v811 = vpack.c.b16 %v524, %v517
  %v812 = vpack.c.b16 %v525, %v518
  %v813 = vpack.c.b16 %v526, %v519
  %v814 = vpack.c.b16 %v534, %v527
  %v815 = vpack.c.b16 %v535, %v528
  %v816 = vpack.c.b16 %v536, %v529
  %v817 = vpack.c.b16 %v537, %v530
  %v818 = vpack.c.b16 %v538, %v531
  %v819 = vpack.c.b16 %v539, %v532
  %v820 = vpack.c.b16 %v540, %v533
  %v821 = vpack.c.b16 %v548, %v541
  %v822 = vpack.c.b16 %v549, %v542
  %v823 = vpack.c.b16 %v550, %v543
  %v824 = vpack.c.b16 %v551, %v544
  %v825 = vpack.c.b16 %v552, %v545
  %v826 = vpack.c.b16 %v553, %v546
  %v827 = vpack.c.b16 %v554, %v547
  %v828 = vpack.c.b16 %v562, %v555
  %v829 = vpack.c.b16 %v563, %v556
  %v830 = vpack.c.b16 %v564, %v557
  %v831 = vpack.c.b16 %v565, %v558
  %v832 = vpack.c.b16 %v566, %v559
  %v833 = vpack.c.b16 %v567, %v560
  %v834 = vpack.c.b16 %v568, %v561
  %v835 = vpack.c.b16 %v576, %v569
  %v836 = vpack.c.b16 %v577, %v570
  %v837 = vpack.c.b16 %v578, %v571
  %v838 = vpack.c.b16 %v579, %v572
  %v839 = vpack.c.b16 %v580, %v573
  %v840 = vpack.c.b16 %v581, %v574
  %v841 = vpack.c.b16 %v582, %v575
  %v842 = vpack.c.b16 %v590, %v583
  %v843 = vpack.c.b16 %v591, %v584
  %v844 = vpack.c.b16 %v592, %v585
  %v845 = vpack.c.b16 %v593, %v586
  %v846 = vpack.c.b16 %v594, %v587
  %v847 = vpack.c.b16 %v595, %v588
  %v848 = vpack.c.b16 %v596, %v589
  %v849 = vpack.c.b16 %v604, %v597
  %v850 = vpack.c.b16 %v605, %v598
  %v851 = vpack.c.b16 %v606, %v599
  %v852 = vpack.c.b16 %v607, %v600
  %v853 = vpack.c.b16 %v608, %v601
  %v854 = vpack.c.b16 %v609, %v602
  %v855 = vpack.c.b16 %v610, %v603
  %v856 = vpack.c.b16 %v618, %v611
  %v857 = vpack.c.b16 %v619, %v612
  %v858 = vpack.c.b16 %v620, %v613
  %v859 = vpack.c.b16 %v621, %v614
  %v860 = vpack.c.b16 %v622, %v615
  %v861 = vpack.c.b16 %v623, %v616
  %v862 = vpack.c.b16 %v624, %v617
  %v863 = vpack.c.b16 %v632, %v625
  %v864 = vpack.c.b16 %v633, %v626
  %v865 = vpack.c.b16 %v634, %v627
  %v866 = vpack.c.b16 %v635, %v628
  %v867 = vpack.c.b16 %v636, %v629
  %v868 = vpack.c.b16 %v637, %v630
  %v869 = vpack.c.b16 %v638, %v631
  %v870 = vpack.c.b16 %v646, %v639
  %v871 = vpack.c.b16 %v647, %v640
  %v872 = vpack.c.b16 %v648, %v641
  %v873 = vpack.c.b16 %v649, %v642
  %v874 = vpack.c.b16 %v650, %v643
  %v875 = vpack.c.b16 %v651, %v644
  %v876 = vpack.c.b16 %v652, %v645
  %v877 = vpack.c.b16 %v660, %v653
  %v878 = vpack.c.b16 %v661, %v654
  %v879 = vpack.c.b16 %v662, %v655
  %v880 = vpack.c.b16 %v663, %v656
  %v881 = vpack.c.b16 %v664, %v657
  %v882 = vpack.c.b16 %v665, %v658
  %v883 = vpack.c.b16 %v666, %v659
  %v884 = vpack.c.b16 %v674, %v667
  %v885 = vpack.c.b16 %v675, %v668
  %v886 = vpack.c.b16 %v676, %v669
  %v887 = vpack.c.b16 %v677, %v670
  %v888 = vpack.c.b16 %v678, %v671
  %v889 = vpack.c.b16 %v679, %v672
  %v890 = vpack.c.b16 %v680, %v673
  %v891 = vpack.c.b16 %v688, %v681
  %v892 = vpack.c.b16 %v689, %v682
  %v893 = vpack.c.b16 %v690, %v683
  %v894 = vpack.c.b16 %v691, %v684
  %v895 = vpack.c.b16 %v692, %v685
  %v896 = vpack.c.b16 %v693, %v686
  %v897 = vpack.c.b16 %v694, %v687
  %v898 = vpack.c.b16 %v702, %v695
  %v899 = vpack.c.b16 %v703, %v696
  %v900 = vpack.c.b16 %v704, %v697
  %v901 = vpack.c.b16 %v705, %v698
  %v902 = vpack.c.b16 %v706, %v699
  %v903 = vpack.c.b16 %v707, %v700
  %v904 = vpack.c.b16 %v708, %v701
  %v905 = vpack.c.b16 %v716, %v709
  %v906 = vpack.c.b16 %v717, %v710
  %v907 = vpack.c.b16 %v718, %v711
  %v908 = vpack.c.b16 %v719, %v712
  %v909 = vpack.c.b16 %v720, %v713
  %v910 = vpack.c.b16 %v721, %v714
  %v911 = vpack.c.b16 %v722, %v715
  %v912 = vpack.c.b16 %v730, %v723
  %v913 = vpack.c.b16 %v731, %v724
  %v914 = vpack.c.b16 %v732, %v725
  %v915 = vpack.c.b16 %v733, %v726
  %v916 = vpack.c.b16 %v734, %v727
  %v917 = vpack.c.b16 %v735, %v728
  %v918 = vpack.c.b16 %v736, %v729
  %v919 = vpack.c.b16 %v744, %v737
  %v920 = vpack.c.b16 %v745, %v738
  %v921 = vpack.c.b16 %v746, %v739
  %v922 = vpack.c.b16 %v747, %v740
  %v923 = vpack.c.b16 %v748, %v741
  %v924 = vpack.c.b16 %v749, %v742
  %v925 = vpack.c.b16 %v750, %v743
  %v926 = vpack.c.b16 %v758, %v751
  %v927 = vpack.c.b16 %v759, %v752
  %v928 = vpack.c.b16 %v760, %v753
  %v929 = vpack.c.b16 %v761, %v754
  %v930 = vpack.c.b16 %v762, %v755
  %v931 = vpack.c.b16 %v763, %v756
  %v932 = vpack.c.b16 %v764, %v757
  %1101 = vmatpush.bf16.msra.mxu0 %v814
  %1102 = vmatpush.bf16.msra.mxu0 %v807
  %1103 = vmatpush.bf16.msra.mxu0 %v800
  %1104 = vmatpush.bf16.msra.mxu0 %v793
  %1105 = vmatpush.bf16.msra.mxu0 %v786
  %1106 = vmatpush.bf16.msra.mxu0 %v779
  %1107 = vmatpush.bf16.msra.mxu0 %v772
  %1108 = vmatpush.bf16.msra.mxu0 %v765
  %1109 = vmatmul.bf16.gmra.mxu0 %v216
  %v1110 = vpop.f32.mrf.mxu0
  %v1111 = vadd.f32 %v223, %v1110
  %v1112 = vpop.f32.mrf.mxu0
  %1113 = vdwg.mxu0
  %1114 = vmatpush.bf16.msra.mxu0 %v870
  %1115 = vmatpush.bf16.msra.mxu0 %v863
  %1116 = vmatpush.bf16.msra.mxu0 %v856
  %1117 = vmatpush.bf16.msra.mxu0 %v849
  %1118 = vmatpush.bf16.msra.mxu0 %v842
  %1119 = vmatpush.bf16.msra.mxu0 %v835
  %1120 = vmatpush.bf16.msra.mxu0 %v828
  %1121 = vmatpush.bf16.msra.mxu0 %v821
  %1122 = vmatmul.bf16.gmra.mxu0 %v217
  %v1123 = vpop.f32.mrf.mxu0
  %v1124 = vadd.f32 %v1111, %v1123
  %v1125 = vpop.f32.mrf.mxu0
  %1126 = vdwg.mxu0
  %1127 = vmatpush.bf16.msra.mxu0 %v926
  %1128 = vmatpush.bf16.msra.mxu0 %v919
  %1129 = vmatpush.bf16.msra.mxu0 %v912
  %1130 = vmatpush.bf16.msra.mxu0 %v905
  %1131 = vmatpush.bf16.msra.mxu0 %v898
  %1132 = vmatpush.bf16.msra.mxu0 %v891
  %1133 = vmatpush.bf16.msra.mxu0 %v884
  %1134 = vmatpush.bf16.msra.mxu0 %v877
  %1135 = vmatmul.bf16.gmra.mxu0 %v218
  %v1136 = vpop.f32.mrf.mxu0
  %v1137 = vadd.f32 %v1124, %v1136
  %v1138 = vpop.f32.mrf.mxu0
  %1139 = vdwg.mxu0
  %1140 = vmatpush.bf16.msra.mxu0 %v815
  %1141 = vmatpush.bf16.msra.mxu0 %v808
  %1142 = vmatpush.bf16.msra.mxu0 %v801
  %1143 = vmatpush.bf16.msra.mxu0 %v794
  %1144 = vmatpush.bf16.msra.mxu0 %v787
  %1145 = vmatpush.bf16.msra.mxu0 %v780
  %1146 = vmatpush.bf16.msra.mxu0 %v773
  %1147 = vmatpush.bf16.msra.mxu0 %v766
  %1148 = vmatmul.bf16.gmra.mxu0 %v216
  %v1149 = vpop.f32.mrf.mxu0
  %v1150 = vadd.f32 %v224, %v1149
  %v1151 = vpop.f32.mrf.mxu0
  %1152 = vdwg.mxu0
  %1153 = vmatpush.bf16.msra.mxu0 %v871
  %1154 = vmatpush.bf16.msra.mxu0 %v864
  %1155 = vmatpush.bf16.msra.mxu0 %v857
  %1156 = vmatpush.bf16.msra.mxu0 %v850
  %1157 = vmatpush.bf16.msra.mxu0 %v843
  %1158 = vmatpush.bf16.msra.mxu0 %v836
  %1159 = vmatpush.bf16.msra.mxu0 %v829
  %1160 = vmatpush.bf16.msra.mxu0 %v822
  %1161 = vmatmul.bf16.gmra.mxu0 %v217
  %v1162 = vpop.f32.mrf.mxu0
  %v1163 = vadd.f32 %v1150, %v1162
  %v1164 = vpop.f32.mrf.mxu0
  %1165 = vdwg.mxu0
  %1166 = vmatpush.bf16.msra.mxu0 %v927
  %1167 = vmatpush.bf16.msra.mxu0 %v920
  %1168 = vmatpush.bf16.msra.mxu0 %v913
  %1169 = vmatpush.bf16.msra.mxu0 %v906
  %1170 = vmatpush.bf16.msra.mxu0 %v899
  %1171 = vmatpush.bf16.msra.mxu0 %v892
  %1172 = vmatpush.bf16.msra.mxu0 %v885
  %1173 = vmatpush.bf16.msra.mxu0 %v878
  %1174 = vmatmul.bf16.gmra.mxu0 %v218
  %v1175 = vpop.f32.mrf.mxu0
  %v1176 = vadd.f32 %v1163, %v1175
  %v1177 = vpop.f32.mrf.mxu0
  %1178 = vdwg.mxu0
  %1179 = vmatpush.bf16.msra.mxu0 %v816
  %1180 = vmatpush.bf16.msra.mxu0 %v809
  %1181 = vmatpush.bf16.msra.mxu0 %v802
  %1182 = vmatpush.bf16.msra.mxu0 %v795
  %1183 = vmatpush.bf16.msra.mxu0 %v788
  %1184 = vmatpush.bf16.msra.mxu0 %v781
  %1185 = vmatpush.bf16.msra.mxu0 %v774
  %1186 = vmatpush.bf16.msra.mxu0 %v767
  %1187 = vmatmul.bf16.gmra.mxu0 %v216
  %v1188 = vpop.f32.mrf.mxu0
  %v1189 = vadd.f32 %v225, %v1188
  %v1190 = vpop.f32.mrf.mxu0
  %1191 = vdwg.mxu0
  %1192 = vmatpush.bf16.msra.mxu0 %v872
  %1193 = vmatpush.bf16.msra.mxu0 %v865
  %1194 = vmatpush.bf16.msra.mxu0 %v858
  %1195 = vmatpush.bf16.msra.mxu0 %v851
  %1196 = vmatpush.bf16.msra.mxu0 %v844
  %1197 = vmatpush.bf16.msra.mxu0 %v837
  %1198 = vmatpush.bf16.msra.mxu0 %v830
  %1199 = vmatpush.bf16.msra.mxu0 %v823
  %1200 = vmatmul.bf16.gmra.mxu0 %v217
  %v1201 = vpop.f32.mrf.mxu0
  %v1202 = vadd.f32 %v1189, %v1201
  %v1203 = vpop.f32.mrf.mxu0
  %1204 = vdwg.mxu0
  %1205 = vmatpush.bf16.msra.mxu0 %v928
  %1206 = vmatpush.bf16.msra.mxu0 %v921
  %1207 = vmatpush.bf16.msra.mxu0 %v914
  %1208 = vmatpush.bf16.msra.mxu0 %v907
  %1209 = vmatpush.bf16.msra.mxu0 %v900
  %1210 = vmatpush.bf16.msra.mxu0 %v893
  %1211 = vmatpush.bf16.msra.mxu0 %v886
  %1212 = vmatpush.bf16.msra.mxu0 %v879
  %1213 = vmatmul.bf16.gmra.mxu0 %v218
  %v1214 = vpop.f32.mrf.mxu0
  %v1215 = vadd.f32 %v1202, %v1214
  %v1216 = vpop.f32.mrf.mxu0
  %1217 = vdwg.mxu0
  %1218 = vmatpush.bf16.msra.mxu0 %v817
  %1219 = vmatpush.bf16.msra.mxu0 %v810
  %1220 = vmatpush.bf16.msra.mxu0 %v803
  %1221 = vmatpush.bf16.msra.mxu0 %v796
  %1222 = vmatpush.bf16.msra.mxu0 %v789
  %1223 = vmatpush.bf16.msra.mxu0 %v782
  %1224 = vmatpush.bf16.msra.mxu0 %v775
  %1225 = vmatpush.bf16.msra.mxu0 %v768
  %1226 = vmatmul.bf16.gmra.mxu0 %v216
  %v1227 = vpop.f32.mrf.mxu0
  %v1228 = vadd.f32 %v226, %v1227
  %v1229 = vpop.f32.mrf.mxu0
  %1230 = vdwg.mxu0
  %1231 = vmatpush.bf16.msra.mxu0 %v873
  %1232 = vmatpush.bf16.msra.mxu0 %v866
  %1233 = vmatpush.bf16.msra.mxu0 %v859
  %1234 = vmatpush.bf16.msra.mxu0 %v852
  %1235 = vmatpush.bf16.msra.mxu0 %v845
  %1236 = vmatpush.bf16.msra.mxu0 %v838
  %1237 = vmatpush.bf16.msra.mxu0 %v831
  %1238 = vmatpush.bf16.msra.mxu0 %v824
  %1239 = vmatmul.bf16.gmra.mxu0 %v217
  %v1240 = vpop.f32.mrf.mxu0
  %v1241 = vadd.f32 %v1228, %v1240
  %v1242 = vpop.f32.mrf.mxu0
  %1243 = vdwg.mxu0
  %1244 = vmatpush.bf16.msra.mxu0 %v929
  %1245 = vmatpush.bf16.msra.mxu0 %v922
  %1246 = vmatpush.bf16.msra.mxu0 %v915
  %1247 = vmatpush.bf16.msra.mxu0 %v908
  %1248 = vmatpush.bf16.msra.mxu0 %v901
  %1249 = vmatpush.bf16.msra.mxu0 %v894
  %1250 = vmatpush.bf16.msra.mxu0 %v887
  %1251 = vmatpush.bf16.msra.mxu0 %v880
  %1252 = vmatmul.bf16.gmra.mxu0 %v218
  %v1253 = vpop.f32.mrf.mxu0
  %v1254 = vadd.f32 %v1241, %v1253
  %v1255 = vpop.f32.mrf.mxu0
  %1256 = vdwg.mxu0
  %1257 = vmatpush.bf16.msra.mxu0 %v818
  %1258 = vmatpush.bf16.msra.mxu0 %v811
  %1259 = vmatpush.bf16.msra.mxu0 %v804
  %1260 = vmatpush.bf16.msra.mxu0 %v797
  %1261 = vmatpush.bf16.msra.mxu0 %v790
  %1262 = vmatpush.bf16.msra.mxu0 %v783
  %1263 = vmatpush.bf16.msra.mxu0 %v776
  %1264 = vmatpush.bf16.msra.mxu0 %v769
  %1265 = vmatmul.bf16.gmra.mxu0 %v216
  %v1266 = vpop.f32.mrf.mxu0
  %v1267 = vadd.f32 %v227, %v1266
  %v1268 = vpop.f32.mrf.mxu0
  %1269 = vdwg.mxu0
  %1270 = vmatpush.bf16.msra.mxu0 %v874
  %1271 = vmatpush.bf16.msra.mxu0 %v867
  %1272 = vmatpush.bf16.msra.mxu0 %v860
  %1273 = vmatpush.bf16.msra.mxu0 %v853
  %1274 = vmatpush.bf16.msra.mxu0 %v846
  %1275 = vmatpush.bf16.msra.mxu0 %v839
  %1276 = vmatpush.bf16.msra.mxu0 %v832
  %1277 = vmatpush.bf16.msra.mxu0 %v825
  %1278 = vmatmul.bf16.gmra.mxu0 %v217
  %v1279 = vpop.f32.mrf.mxu0
  %v1280 = vadd.f32 %v1267, %v1279
  %v1281 = vpop.f32.mrf.mxu0
  %1282 = vdwg.mxu0
  %1283 = vmatpush.bf16.msra.mxu0 %v930
  %1284 = vmatpush.bf16.msra.mxu0 %v923
  %1285 = vmatpush.bf16.msra.mxu0 %v916
  %1286 = vmatpush.bf16.msra.mxu0 %v909
  %1287 = vmatpush.bf16.msra.mxu0 %v902
  %1288 = vmatpush.bf16.msra.mxu0 %v895
  %1289 = vmatpush.bf16.msra.mxu0 %v888
  %1290 = vmatpush.bf16.msra.mxu0 %v881
  %1291 = vmatmul.bf16.gmra.mxu0 %v218
  %v1292 = vpop.f32.mrf.mxu0
  %v1293 = vadd.f32 %v1280, %v1292
  %v1294 = vpop.f32.mrf.mxu0
  %1295 = vdwg.mxu0
  %1296 = vmatpush.bf16.msra.mxu0 %v819
  %1297 = vmatpush.bf16.msra.mxu0 %v812
  %1298 = vmatpush.bf16.msra.mxu0 %v805
  %1299 = vmatpush.bf16.msra.mxu0 %v798
  %1300 = vmatpush.bf16.msra.mxu0 %v791
  %1301 = vmatpush.bf16.msra.mxu0 %v784
  %1302 = vmatpush.bf16.msra.mxu0 %v777
  %1303 = vmatpush.bf16.msra.mxu0 %v770
  %1304 = vmatmul.bf16.gmra.mxu0 %v216
  %v1305 = vpop.f32.mrf.mxu0
  %v1306 = vadd.f32 %v228, %v1305
  %v1307 = vpop.f32.mrf.mxu0
  %1308 = vdwg.mxu0
  %1309 = vmatpush.bf16.msra.mxu0 %v875
  %1310 = vmatpush.bf16.msra.mxu0 %v868
  %1311 = vmatpush.bf16.msra.mxu0 %v861
  %1312 = vmatpush.bf16.msra.mxu0 %v854
  %1313 = vmatpush.bf16.msra.mxu0 %v847
  %1314 = vmatpush.bf16.msra.mxu0 %v840
  %1315 = vmatpush.bf16.msra.mxu0 %v833
  %1316 = vmatpush.bf16.msra.mxu0 %v826
  %1317 = vmatmul.bf16.gmra.mxu0 %v217
  %v1318 = vpop.f32.mrf.mxu0
  %v1319 = vadd.f32 %v1306, %v1318
  %v1320 = vpop.f32.mrf.mxu0
  %1321 = vdwg.mxu0
  %1322 = vmatpush.bf16.msra.mxu0 %v931
  %1323 = vmatpush.bf16.msra.mxu0 %v924
  %1324 = vmatpush.bf16.msra.mxu0 %v917
  %1325 = vmatpush.bf16.msra.mxu0 %v910
  %1326 = vmatpush.bf16.msra.mxu0 %v903
  %1327 = vmatpush.bf16.msra.mxu0 %v896
  %1328 = vmatpush.bf16.msra.mxu0 %v889
  %1329 = vmatpush.bf16.msra.mxu0 %v882
  %1330 = vmatmul.bf16.gmra.mxu0 %v218
  %v1331 = vpop.f32.mrf.mxu0
  %v1332 = vadd.f32 %v1319, %v1331
  %v1333 = vpop.f32.mrf.mxu0
  %1334 = vdwg.mxu0
  %1335 = vmatpush.bf16.msra.mxu0 %v820
  %1336 = vmatpush.bf16.msra.mxu0 %v813
  %1337 = vmatpush.bf16.msra.mxu0 %v806
  %1338 = vmatpush.bf16.msra.mxu0 %v799
  %1339 = vmatpush.bf16.msra.mxu0 %v792
  %1340 = vmatpush.bf16.msra.mxu0 %v785
  %1341 = vmatpush.bf16.msra.mxu0 %v778
  %1342 = vmatpush.bf16.msra.mxu0 %v771
  %1343 = vmatmul.bf16.gmra.mxu0 %v216
  %v1344 = vpop.f32.mrf.mxu0
  %v1345 = vadd.f32 %v229, %v1344
  %v1346 = vpop.f32.mrf.mxu0
  %1347 = vdwg.mxu0
  %1348 = vmatpush.bf16.msra.mxu0 %v876
  %1349 = vmatpush.bf16.msra.mxu0 %v869
  %1350 = vmatpush.bf16.msra.mxu0 %v862
  %1351 = vmatpush.bf16.msra.mxu0 %v855
  %1352 = vmatpush.bf16.msra.mxu0 %v848
  %1353 = vmatpush.bf16.msra.mxu0 %v841
  %1354 = vmatpush.bf16.msra.mxu0 %v834
  %1355 = vmatpush.bf16.msra.mxu0 %v827
  %1356 = vmatmul.bf16.gmra.mxu0 %v217
  %v1357 = vpop.f32.mrf.mxu0
  %v1358 = vadd.f32 %v1345, %v1357
  %v1359 = vpop.f32.mrf.mxu0
  %1360 = vdwg.mxu0
  %1361 = vmatpush.bf16.msra.mxu0 %v932
  %1362 = vmatpush.bf16.msra.mxu0 %v925
  %1363 = vmatpush.bf16.msra.mxu0 %v918
  %1364 = vmatpush.bf16.msra.mxu0 %v911
  %1365 = vmatpush.bf16.msra.mxu0 %v904
  %1366 = vmatpush.bf16.msra.mxu0 %v897
  %1367 = vmatpush.bf16.msra.mxu0 %v890
  %1368 = vmatpush.bf16.msra.mxu0 %v883
  %1369 = vmatmul.bf16.gmra.mxu0 %v218
  %v1370 = vpop.f32.mrf.mxu0
  %v1371 = vadd.f32 %v1358, %v1370
  %v1372 = vpop.f32.mrf.mxu0
  %1373 = vdwg.mxu0
  %v1374 = vmax.f32 %v1137, 0.0
  %v1375 = vmax.f32 %v1176, 0.0
  %v1376 = vmax.f32 %v1215, 0.0
  %v1377 = vmax.f32 %v1254, 0.0
  %v1378 = vmax.f32 %v1293, 0.0
  %v1379 = vmax.f32 %v1332, 0.0
  %v1380 = vmax.f32 %v1371, 0.0
  %v1381 = vld [vmem:[%s1 + $0x540] sm:$0xff]
  %v1382 = vld [vmem:[%s1 + $0x548] sm:$0xff]
  %v1383 = vld [vmem:[%s1 + $0x550] sm:$0xff]
  %v1384 = vld [vmem:[%s1 + $0x558] sm:$0xf]
  %v1385 = vld [vmem:[%s1 + $0x55c] sm:$0xff]
  %v1386 = vld [vmem:[%s1 + $0x564] sm:$0xff]
  %v1387 = vld [vmem:[%s1 + $0x56c] sm:$0xff]
  %v1388 = vld [vmem:[%s1 + $0x574] sm:$0xf]
  %v1389 = vld [vmem:[%s1 + $0x578] sm:$0xff]
  %v1390 = vld [vmem:[%s1 + $0x580] sm:$0xff]
  %v1391 = vld [vmem:[%s1 + $0x588] sm:$0xff]
  %v1392 = vld [vmem:[%s1 + $0x590] sm:$0xf]
  %v1393 = vld [vmem:[%s1 + $0x594] sm:$0xff]
  %v1394 = vld [vmem:[%s1 + $0x59c] sm:$0xff]
  %v1395 = vld [vmem:[%s1 + $0x5a4] sm:$0xff]
  %v1396 = vld [vmem:[%s1 + $0x5ac] sm:$0xf]
  %v1397 = vld [vmem:[%s1 + $0x5b0] sm:$0xff]
  %v1398 = vld [vmem:[%s1 + $0x5b8] sm:$0xff]
  %v1399 = vld [vmem:[%s1 + $0x5c0] sm:$0xff]
  %v1400 = vld [vmem:[%s1 + $0x5c8] sm:$0xf]
  %v1401 = vld [vmem:[%s1 + $0x5cc] sm:$0xff]
  %v1402 = vld [vmem:[%s1 + $0x5d4] sm:$0xff]
  %v1403 = vld [vmem:[%s1 + $0x5dc] sm:$0xff]
  %v1404 = vld [vmem:[%s1 + $0x5e4] sm:$0xf]
  %v1405 = vld [vmem:[%s1 + $0x5e8] sm:$0xff]
  %v1406 = vld [vmem:[%s1 + $0x5f0] sm:$0xff]
  %v1407 = vld [vmem:[%s1 + $0x5f8] sm:$0xff]
  %v1408 = vld [vmem:[%s1 + $0x600] sm:$0xf]
  %v1409 = vld [vmem:[%s1 + $0x604] sm:$0xff]
  %v1410 = vld [vmem:[%s1 + $0x60c] sm:$0xff]
  %v1411 = vld [vmem:[%s1 + $0x614] sm:$0xff]
  %v1412 = vld [vmem:[%s1 + $0x61c] sm:$0xf]
  %v1413 = vld [vmem:[%s1 + $0x620] sm:$0xff]
  %v1414 = vld [vmem:[%s1 + $0x628] sm:$0xff]
  %v1415 = vld [vmem:[%s1 + $0x630] sm:$0xff]
  %v1416 = vld [vmem:[%s1 + $0x638] sm:$0xf]
  %v1417 = vld [vmem:[%s1 + $0x63c] sm:$0xff]
  %v1418 = vld [vmem:[%s1 + $0x644] sm:$0xff]
  %v1419 = vld [vmem:[%s1 + $0x64c] sm:$0xff]
  %v1420 = vld [vmem:[%s1 + $0x654] sm:$0xf]
  %v1421 = vld [vmem:[%s1 + $0x658] sm:$0xff]
  %v1422 = vld [vmem:[%s1 + $0x660] sm:$0xff]
  %v1423 = vld [vmem:[%s1 + $0x668] sm:$0xff]
  %v1424 = vld [vmem:[%s1 + $0x670] sm:$0xf]
  %v1425 = vld [vmem:[%s1 + $0x674] sm:$0xff]
  %v1426 = vld [vmem:[%s1 + $0x67c] sm:$0xff]
  %v1427 = vld [vmem:[%s1 + $0x684] sm:$0xff]
  %v1428 = vld [vmem:[%s1 + $0x68c] sm:$0xf]
  %v1429 = vld [vmem:[%s1 + $0x690] sm:$0xff]
  %v1430 = vld [vmem:[%s1 + $0x698] sm:$0xff]
  %v1431 = vld [vmem:[%s1 + $0x6a0] sm:$0xff]
  %v1432 = vld [vmem:[%s1 + $0x6a8] sm:$0xf]
  %v1433 = vld [vmem:[%s1 + $0x6ac] sm:$0xff]
  %v1434 = vld [vmem:[%s1 + $0x6b4] sm:$0xff]
  %v1435 = vld [vmem:[%s1 + $0x6bc] sm:$0xff]
  %v1436 = vld [vmem:[%s1 + $0x6c4] sm:$0xf]
  %v1437 = vld [vmem:[%s1 + $0x6c8] sm:$0xff]
  %v1438 = vld [vmem:[%s1 + $0x6d0] sm:$0xff]
  %v1439 = vld [vmem:[%s1 + $0x6d8] sm:$0xff]
  %v1440 = vld [vmem:[%s1 + $0x6e0] sm:$0xf]
  %v1441 = vld [vmem:[%s1 + $0x6e4] sm:$0xff]
  %v1442 = vld [vmem:[%s1 + $0x6ec] sm:$0xff]
  %v1443 = vld [vmem:[%s1 + $0x6f4] sm:$0xff]
  %v1444 = vld [vmem:[%s1 + $0x6fc] sm:$0xf]
  %v1445 = vld [vmem:[%s1 + $0x700] sm:$0xff]
  %v1446 = vld [vmem:[%s1 + $0x708] sm:$0xff]
  %v1447 = vld [vmem:[%s1 + $0x710] sm:$0xff]
  %v1448 = vld [vmem:[%s1 + $0x718] sm:$0xf]
  %v1449 = vld [vmem:[%s1 + $0x71c] sm:$0xff]
  %v1450 = vld [vmem:[%s1 + $0x724] sm:$0xff]
  %v1451 = vld [vmem:[%s1 + $0x72c] sm:$0xff]
  %v1452 = vld [vmem:[%s1 + $0x734] sm:$0xf]
  %v1453 = vld [vmem:[%s1 + $0x738] sm:$0xff]
  %v1454 = vld [vmem:[%s1 + $0x740] sm:$0xff]
  %v1455 = vld [vmem:[%s1 + $0x748] sm:$0xff]
  %v1456 = vld [vmem:[%s1 + $0x750] sm:$0xf]
  %v1457 = vld [vmem:[%s1 + $0x754] sm:$0xff]
  %v1458 = vld [vmem:[%s1 + $0x75c] sm:$0xff]
  %v1459 = vld [vmem:[%s1 + $0x764] sm:$0xff]
  %v1460 = vld [vmem:[%s1 + $0x76c] sm:$0xf]
  %v1461 = vld [vmem:[%s1 + $0x770] sm:$0xff]
  %v1462 = vld [vmem:[%s1 + $0x778] sm:$0xff]
  %v1463 = vld [vmem:[%s1 + $0x780] sm:$0xff]
  %v1464 = vld [vmem:[%s1 + $0x788] sm:$0xf]
  %v1465 = vld [vmem:[%s1 + $0x78c] sm:$0xff]
  %v1466 = vld [vmem:[%s1 + $0x794] sm:$0xff]
  %v1467 = vld [vmem:[%s1 + $0x79c] sm:$0xff]
  %v1468 = vld [vmem:[%s1 + $0x7a4] sm:$0xf]
  %v1469 = vld [vmem:[%s1 + $0x7a8] sm:$0xff]
  %v1470 = vld [vmem:[%s1 + $0x7b0] sm:$0xff]
  %v1471 = vld [vmem:[%s1 + $0x7b8] sm:$0xff]
  %v1472 = vld [vmem:[%s1 + $0x7c0] sm:$0xf]
  %v1473 = vld [vmem:[%s1 + $0x7c4] sm:$0xff]
  %v1474 = vld [vmem:[%s1 + $0x7cc] sm:$0xff]
  %v1475 = vld [vmem:[%s1 + $0x7d4] sm:$0xff]
  %v1476 = vld [vmem:[%s1 + $0x7dc] sm:$0xf]
  %v1477 = vld [vmem:[%s1 + $0x7e0] sm:$0xff]
  %v1478 = vld [vmem:[%s1 + $0x7e8] sm:$0xff]
  %v1479 = vld [vmem:[%s1 + $0x7f0] sm:$0xff]
  %v1480 = vld [vmem:[%s1 + $0x7f8] sm:$0xf]
  %v1481 = vld [vmem:[%s1 + $0x7fc] sm:$0xff]
  %v1482 = vld [vmem:[%s1 + $0x804] sm:$0xff]
  %v1483 = vld [vmem:[%s1 + $0x80c] sm:$0xff]
  %v1484 = vld [vmem:[%s1 + $0x814] sm:$0xf]
  %v1485 = vld [vmem:[%s1 + $0x818] sm:$0xff]
  %v1486 = vld [vmem:[%s1 + $0x820] sm:$0xff]
  %v1487 = vld [vmem:[%s1 + $0x828] sm:$0xff]
  %v1488 = vld [vmem:[%s1 + $0x830] sm:$0xf]
  %v1489 = vld [vmem:[%s1 + $0x834] sm:$0xff]
  %v1490 = vld [vmem:[%s1 + $0x83c] sm:$0xff]
  %v1491 = vld [vmem:[%s1 + $0x844] sm:$0xff]
  %v1492 = vld [vmem:[%s1 + $0x84c] sm:$0xf]
  %v1493 = vld [vmem:[%s1 + $0x850] sm:$0xff]
  %v1494 = vld [vmem:[%s1 + $0x858] sm:$0xff]
  %v1495 = vld [vmem:[%s1 + $0x860] sm:$0xff]
  %v1496 = vld [vmem:[%s1 + $0x868] sm:$0xf]
  %v1497 = vld [vmem:[%s1 + $0x86c] sm:$0xff]
  %v1498 = vld [vmem:[%s1 + $0x874] sm:$0xff]
  %v1499 = vld [vmem:[%s1 + $0x87c] sm:$0xff]
  %v1500 = vld [vmem:[%s1 + $0x884] sm:$0xf]
  %v1501 = vld [vmem:[%s1 + $0x888] sm:$0xff]
  %v1502 = vld [vmem:[%s1 + $0x890] sm:$0xff]
  %v1503 = vld [vmem:[%s1 + $0x898] sm:$0xff]
  %v1504 = vld [vmem:[%s1 + $0x8a0] sm:$0xf]
  %v1505 = vld [vmem:[%s1 + $0x8a4] sm:$0xff]
  %v1506 = vld [vmem:[%s1 + $0x8ac] sm:$0xff]
  %v1507 = vld [vmem:[%s1 + $0x8b4] sm:$0xff]
  %v1508 = vld [vmem:[%s1 + $0x8bc] sm:$0xf]
  %v1509 = vld [vmem:[%s1 + $0x8c0] sm:$0xff]
  %v1510 = vld [vmem:[%s1 + $0x8c8] sm:$0xff]
  %v1511 = vld [vmem:[%s1 + $0x8d0] sm:$0xff]
  %v1512 = vld [vmem:[%s1 + $0x8d8] sm:$0xf]
  %v1513 = vld [vmem:[%s1 + $0x8dc] sm:$0xff]
  %v1514 = vld [vmem:[%s1 + $0x8e4] sm:$0xff]
  %v1515 = vld [vmem:[%s1 + $0x8ec] sm:$0xff]
  %v1516 = vld [vmem:[%s1 + $0x8f4] sm:$0xf]
  %v1517 = vld [vmem:[%s1 + $0x8f8] sm:$0xff]
  %v1518 = vld [vmem:[%s1 + $0x900] sm:$0xff]
  %v1519 = vld [vmem:[%s1 + $0x908] sm:$0xff]
  %v1520 = vld [vmem:[%s1 + $0x910] sm:$0xf]
  %v1521 = vld [vmem:[%s1 + $0x914] sm:$0xff]
  %v1522 = vld [vmem:[%s1 + $0x91c] sm:$0xff]
  %v1523 = vld [vmem:[%s1 + $0x924] sm:$0xff]
  %v1524 = vld [vmem:[%s1 + $0x92c] sm:$0xf]
  %v1525 = vld [vmem:[%s1 + $0x930] sm:$0xff]
  %v1526 = vld [vmem:[%s1 + $0x938] sm:$0xff]
  %v1527 = vld [vmem:[%s1 + $0x940] sm:$0xff]
  %v1528 = vld [vmem:[%s1 + $0x948] sm:$0xf]
  %v1529 = vld [vmem:[%s1 + $0x94c] sm:$0xff]
  %v1530 = vld [vmem:[%s1 + $0x954] sm:$0xff]
  %v1531 = vld [vmem:[%s1 + $0x95c] sm:$0xff]
  %v1532 = vld [vmem:[%s1 + $0x964] sm:$0xf]
  %v1533 = vld [vmem:[%s1 + $0x968] sm:$0xff]
  %v1534 = vld [vmem:[%s1 + $0x970] sm:$0xff]
  %v1535 = vld [vmem:[%s1 + $0x978] sm:$0xff]
  %v1536 = vld [vmem:[%s1 + $0x980] sm:$0xf]
  %v1537 = vld [vmem:[%s1 + $0x984] sm:$0xff]
  %v1538 = vld [vmem:[%s1 + $0x98c] sm:$0xff]
  %v1539 = vld [vmem:[%s1 + $0x994] sm:$0xff]
  %v1540 = vld [vmem:[%s1 + $0x99c] sm:$0xf]
  %v1541 = vld [vmem:[%s1 + $0x9a0] sm:$0xff]
  %v1542 = vld [vmem:[%s1 + $0x9a8] sm:$0xff]
  %v1543 = vld [vmem:[%s1 + $0x9b0] sm:$0xff]
  %v1544 = vld [vmem:[%s1 + $0x9b8] sm:$0xf]
  %v1545 = vld [vmem:[%s1 + $0x9bc] sm:$0xff]
  %v1546 = vld [vmem:[%s1 + $0x9c4] sm:$0xff]
  %v1547 = vld [vmem:[%s1 + $0x9cc] sm:$0xff]
  %v1548 = vld [vmem:[%s1 + $0x9d4] sm:$0xf]
  %v1549 = vld [vmem:[%s1 + $0x9d8] sm:$0xff]
  %v1550 = vld [vmem:[%s1 + $0x9e0] sm:$0xff]
  %v1551 = vld [vmem:[%s1 + $0x9e8] sm:$0xff]
  %v1552 = vld [vmem:[%s1 + $0x9f0] sm:$0xf]
  %v1553 = vld [vmem:[%s1 + $0x9f4] sm:$0xff]
  %v1554 = vld [vmem:[%s1 + $0x9fc] sm:$0xff]
  %v1555 = vld [vmem:[%s1 + $0xa04] sm:$0xff]
  %v1556 = vld [vmem:[%s1 + $0xa0c] sm:$0xf]
  %v1557 = vld [vmem:[%s1 + $0xa10] sm:$0xff]
  %v1558 = vld [vmem:[%s1 + $0xa18] sm:$0xff]
  %v1559 = vld [vmem:[%s1 + $0xa20] sm:$0xff]
  %v1560 = vld [vmem:[%s1 + $0xa28] sm:$0xf]
  %v1561 = vld [vmem:[%s1 + $0xa2c] sm:$0xff]
  %v1562 = vld [vmem:[%s1 + $0xa34] sm:$0xff]
  %v1563 = vld [vmem:[%s1 + $0xa3c] sm:$0xff]
  %v1564 = vld [vmem:[%s1 + $0xa44] sm:$0xf]
  %v1565 = vld [vmem:[%s1 + $0xa48] sm:$0xff]
  %v1566 = vld [vmem:[%s1 + $0xa50] sm:$0xff]
  %v1567 = vld [vmem:[%s1 + $0xa58] sm:$0xff]
  %v1568 = vld [vmem:[%s1 + $0xa60] sm:$0xf]
  %v1569 = vld [vmem:[%s1 + $0xa64] sm:$0xff]
  %v1570 = vld [vmem:[%s1 + $0xa6c] sm:$0xff]
  %v1571 = vld [vmem:[%s1 + $0xa74] sm:$0xff]
  %v1572 = vld [vmem:[%s1 + $0xa7c] sm:$0xf]
  %v1573 = vld [vmem:[%s1 + $0xa80] sm:$0xff]
  %v1574 = vld [vmem:[%s1 + $0xa88] sm:$0xff]
  %v1575 = vld [vmem:[%s1 + $0xa90] sm:$0xff]
  %v1576 = vld [vmem:[%s1 + $0xa98] sm:$0xf]
  %v1577 = vld [vmem:[%s1 + $0xa9c] sm:$0xff]
  %v1578 = vld [vmem:[%s1 + $0xaa4] sm:$0xff]
  %v1579 = vld [vmem:[%s1 + $0xaac] sm:$0xff]
  %v1580 = vld [vmem:[%s1 + $0xab4] sm:$0xf]
  %v1581 = vld [vmem:[%s1 + $0xab8] sm:$0xff]
  %v1582 = vld [vmem:[%s1 + $0xac0] sm:$0xff]
  %v1583 = vld [vmem:[%s1 + $0xac8] sm:$0xff]
  %v1584 = vld [vmem:[%s1 + $0xad0] sm:$0xf]
  %v1585 = vld [vmem:[%s1 + $0xad4] sm:$0xff]
  %v1586 = vld [vmem:[%s1 + $0xadc] sm:$0xff]
  %v1587 = vld [vmem:[%s1 + $0xae4] sm:$0xff]
  %v1588 = vld [vmem:[%s1 + $0xaec] sm:$0xf]
  %v1589 = vld [vmem:[%s1 + $0xaf0] sm:$0xff]
  %v1590 = vld [vmem:[%s1 + $0xaf8] sm:$0xff]
  %v1591 = vld [vmem:[%s1 + $0xb00] sm:$0xff]
  %v1592 = vld [vmem:[%s1 + $0xb08] sm:$0xf]
  %v1593 = vld [vmem:[%s1 + $0xb0c] sm:$0xff]
  %v1594 = vld [vmem:[%s1 + $0xb14] sm:$0xff]
  %v1595 = vld [vmem:[%s1 + $0xb1c] sm:$0xff]
  %v1596 = vld [vmem:[%s1 + $0xb24] sm:$0xf]
  %v1597 = vld [vmem:[%s1 + $0xb28] sm:$0xff]
  %v1598 = vld [vmem:[%s1 + $0xb30] sm:$0xff]
  %v1599 = vld [vmem:[%s1 + $0xb38] sm:$0xff]
  %v1600 = vld [vmem:[%s1 + $0xb40] sm:$0xf]
  %v1601 = vld [vmem:[%s1 + $0xb44] sm:$0xff]
  %v1602 = vld [vmem:[%s1 + $0xb4c] sm:$0xff]
  %v1603 = vld [vmem:[%s1 + $0xb54] sm:$0xff]
  %v1604 = vld [vmem:[%s1 + $0xb5c] sm:$0xf]
  %v1605 = vld [vmem:[%s1 + $0xb60] sm:$0xff]
  %v1606 = vld [vmem:[%s1 + $0xb68] sm:$0xff]
  %v1607 = vld [vmem:[%s1 + $0xb70] sm:$0xff]
  %v1608 = vld [vmem:[%s1 + $0xb78] sm:$0xf]
  %v1609 = vld [vmem:[%s1 + $0xb7c] sm:$0xff]
  %v1610 = vld [vmem:[%s1 + $0xb84] sm:$0xff]
  %v1611 = vld [vmem:[%s1 + $0xb8c] sm:$0xff]
  %v1612 = vld [vmem:[%s1 + $0xb94] sm:$0xf]
  %v1613 = vld [vmem:[%s1 + $0xb98] sm:$0xff]
  %v1614 = vld [vmem:[%s1 + $0xba0] sm:$0xff]
  %v1615 = vld [vmem:[%s1 + $0xba8] sm:$0xff]
  %v1616 = vld [vmem:[%s1 + $0xbb0] sm:$0xf]
  %v1617 = vld [vmem:[%s1 + $0xbb4] sm:$0xff]
  %v1618 = vld [vmem:[%s1 + $0xbbc] sm:$0xff]
  %v1619 = vld [vmem:[%s1 + $0xbc4] sm:$0xff]
  %v1620 = vld [vmem:[%s1 + $0xbcc] sm:$0xf]
  %v1621 = vld [vmem:[%s1 + $0xbd0] sm:$0xff]
  %v1622 = vld [vmem:[%s1 + $0xbd8] sm:$0xff]
  %v1623 = vld [vmem:[%s1 + $0xbe0] sm:$0xff]
  %v1624 = vld [vmem:[%s1 + $0xbe8] sm:$0xf]
  %v1625 = vld [vmem:[%s1 + $0xbec] sm:$0xff]
  %v1626 = vld [vmem:[%s1 + $0xbf4] sm:$0xff]
  %v1627 = vld [vmem:[%s1 + $0xbfc] sm:$0xff]
  %v1628 = vld [vmem:[%s1 + $0xc04] sm:$0xf]
  %v1629 = vld [vmem:[%s1 + $0xc08] sm:$0xff]
  %v1630 = vld [vmem:[%s1 + $0xc10] sm:$0xff]
  %v1631 = vld [vmem:[%s1 + $0xc18] sm:$0xff]
  %v1632 = vld [vmem:[%s1 + $0xc20] sm:$0xf]
  %v1633 = vld [vmem:[%s1 + $0xc24] sm:$0xff]
  %v1634 = vld [vmem:[%s1 + $0xc2c] sm:$0xff]
  %v1635 = vld [vmem:[%s1 + $0xc34] sm:$0xff]
  %v1636 = vld [vmem:[%s1 + $0xc3c] sm:$0xf]
  %v1637 = vld [vmem:[%s1 + $0xc40] sm:$0xff]
  %v1638 = vld [vmem:[%s1 + $0xc48] sm:$0xff]
  %v1639 = vld [vmem:[%s1 + $0xc50] sm:$0xff]
  %v1640 = vld [vmem:[%s1 + $0xc58] sm:$0xf]
  %v1641 = vld [vmem:[%s1 + $0xc5c] sm:$0xff]
  %v1642 = vld [vmem:[%s1 + $0xc64] sm:$0xff]
  %v1643 = vld [vmem:[%s1 + $0xc6c] sm:$0xff]
  %v1644 = vld [vmem:[%s1 + $0xc74] sm:$0xf]
  %v1645 = vld [vmem:[%s1 + $0xc78] sm:$0xff]
  %v1646 = vld [vmem:[%s1 + $0xc80] sm:$0xff]
  %v1647 = vld [vmem:[%s1 + $0xc88] sm:$0xff]
  %v1648 = vld [vmem:[%s1 + $0xc90] sm:$0xf]
  %v1649 = vld [vmem:[%s1 + $0xc94] sm:$0xff]
  %v1650 = vld [vmem:[%s1 + $0xc9c] sm:$0xff]
  %v1651 = vld [vmem:[%s1 + $0xca4] sm:$0xff]
  %v1652 = vld [vmem:[%s1 + $0xcac] sm:$0xf]
  %v1653 = vld [vmem:[%s1 + $0xcb0] sm:$0xff]
  %v1654 = vld [vmem:[%s1 + $0xcb8] sm:$0xff]
  %v1655 = vld [vmem:[%s1 + $0xcc0] sm:$0xff]
  %v1656 = vld [vmem:[%s1 + $0xcc8] sm:$0xf]
  %v1657 = vld [vmem:[%s1 + $0xccc] sm:$0xff]
  %v1658 = vld [vmem:[%s1 + $0xcd4] sm:$0xff]
  %v1659 = vld [vmem:[%s1 + $0xcdc] sm:$0xff]
  %v1660 = vld [vmem:[%s1 + $0xce4] sm:$0xf]
  %v1661 = vld [vmem:[%s1 + $0xce8] sm:$0xff]
  %v1662 = vld [vmem:[%s1 + $0xcf0] sm:$0xff]
  %v1663 = vld [vmem:[%s1 + $0xcf8] sm:$0xff]
  %v1664 = vld [vmem:[%s1 + $0xd00] sm:$0xf]
  %v1665 = vld [vmem:[%s1 + $0xd04] sm:$0xff]
  %v1666 = vld [vmem:[%s1 + $0xd0c] sm:$0xff]
  %v1667 = vld [vmem:[%s1 + $0xd14] sm:$0xff]
  %v1668 = vld [vmem:[%s1 + $0xd1c] sm:$0xf]
  %v1669 = vld [vmem:[%s1 + $0xd20] sm:$0xff]
  %v1670 = vld [vmem:[%s1 + $0xd28] sm:$0xff]
  %v1671 = vld [vmem:[%s1 + $0xd30] sm:$0xff]
  %v1672 = vld [vmem:[%s1 + $0xd38] sm:$0xf]
  %v1673 = vld [vmem:[%s1 + $0xd3c] sm:$0xff]
  %v1674 = vld [vmem:[%s1 + $0xd44] sm:$0xff]
  %v1675 = vld [vmem:[%s1 + $0xd4c] sm:$0xff]
  %v1676 = vld [vmem:[%s1 + $0xd54] sm:$0xf]
  %v1677 = vld [vmem:[%s1 + $0xd58] sm:$0xff]
  %v1678 = vld [vmem:[%s1 + $0xd60] sm:$0xff]
  %v1679 = vld [vmem:[%s1 + $0xd68] sm:$0xff]
  %v1680 = vld [vmem:[%s1 + $0xd70] sm:$0xf]
  %v1681 = vld [vmem:[%s1 + $0xd74] sm:$0xff]
  %v1682 = vld [vmem:[%s1 + $0xd7c] sm:$0xff]
  %v1683 = vld [vmem:[%s1 + $0xd84] sm:$0xff]
  %v1684 = vld [vmem:[%s1 + $0xd8c] sm:$0xf]
  %v1685 = vld [vmem:[%s1 + $0xd90] sm:$0xff]
  %v1686 = vld [vmem:[%s1 + $0xd98] sm:$0xff]
  %v1687 = vld [vmem:[%s1 + $0xda0] sm:$0xff]
  %v1688 = vld [vmem:[%s1 + $0xda8] sm:$0xf]
  %v1689 = vld [vmem:[%s1 + $0xdac] sm:$0xff]
  %v1690 = vld [vmem:[%s1 + $0xdb4] sm:$0xff]
  %v1691 = vld [vmem:[%s1 + $0xdbc] sm:$0xff]
  %v1692 = vld [vmem:[%s1 + $0xdc4] sm:$0xf]
  %v1693 = vld [vmem:[%s1 + $0xdc8] sm:$0xff]
  %v1694 = vld [vmem:[%s1 + $0xdd0] sm:$0xff]
  %v1695 = vld [vmem:[%s1 + $0xdd8] sm:$0xff]
  %v1696 = vld [vmem:[%s1 + $0xde0] sm:$0xf]
  %v1697 = vld [vmem:[%s1 + $0xde4] sm:$0xff]
  %v1698 = vld [vmem:[%s1 + $0xdec] sm:$0xff]
  %v1699 = vld [vmem:[%s1 + $0xdf4] sm:$0xff]
  %v1700 = vld [vmem:[%s1 + $0xdfc] sm:$0xf]
  %v1701 = vld [vmem:[%s1 + $0xe00] sm:$0xff]
  %v1702 = vld [vmem:[%s1 + $0xe08] sm:$0xff]
  %v1703 = vld [vmem:[%s1 + $0xe10] sm:$0xff]
  %v1704 = vld [vmem:[%s1 + $0xe18] sm:$0xf]
  %v1705 = vld [vmem:[%s1 + $0xe1c] sm:$0xff]
  %v1706 = vld [vmem:[%s1 + $0xe24] sm:$0xff]
  %v1707 = vld [vmem:[%s1 + $0xe2c] sm:$0xff]
  %v1708 = vld [vmem:[%s1 + $0xe34] sm:$0xf]
  %v1709 = vld [vmem:[%s1 + $0xe38] sm:$0xff]
  %v1710 = vld [vmem:[%s1 + $0xe40] sm:$0xff]
  %v1711 = vld [vmem:[%s1 + $0xe48] sm:$0xff]
  %v1712 = vld [vmem:[%s1 + $0xe50] sm:$0xf]
  %v1713 = vld [vmem:[%s1 + $0xe54] sm:$0xff]
  %v1714 = vld [vmem:[%s1 + $0xe5c] sm:$0xff]
  %v1715 = vld [vmem:[%s1 + $0xe64] sm:$0xff]
  %v1716 = vld [vmem:[%s1 + $0xe6c] sm:$0xf]
  %v1717 = vld [vmem:[%s1 + $0xe70] sm:$0xff]
  %v1718 = vld [vmem:[%s1 + $0xe78] sm:$0xff]
  %v1719 = vld [vmem:[%s1 + $0xe80] sm:$0xff]
  %v1720 = vld [vmem:[%s1 + $0xe88] sm:$0xf]
  %v1721 = vld [vmem:[%s1 + $0xe8c] sm:$0xff]
  %v1722 = vld [vmem:[%s1 + $0xe94] sm:$0xff]
  %v1723 = vld [vmem:[%s1 + $0xe9c] sm:$0xff]
  %v1724 = vld [vmem:[%s1 + $0xea4] sm:$0xf]
  %v1725 = vld [vmem:[%s1 + $0xea8] sm:$0xff]
  %v1726 = vld [vmem:[%s1 + $0xeb0] sm:$0xff]
  %v1727 = vld [vmem:[%s1 + $0xeb8] sm:$0xff]
  %v1728 = vld [vmem:[%s1 + $0xec0] sm:$0xf]
  %v1729 = vld [vmem:[%s1 + $0xec4] sm:$0xff]
  %v1730 = vld [vmem:[%s1 + $0xecc] sm:$0xff]
  %v1731 = vld [vmem:[%s1 + $0xed4] sm:$0xff]
  %v1732 = vld [vmem:[%s1 + $0xedc] sm:$0xf]
  %v1733 = vld [vmem:[%s1 + $0xee0] sm:$0xff]
  %v1734 = vld [vmem:[%s1 + $0xee8] sm:$0xff]
  %v1735 = vld [vmem:[%s1 + $0xef0] sm:$0xff]
  %v1736 = vld [vmem:[%s1 + $0xef8] sm:$0xf]
  %v1737 = vld [vmem:[%s1 + $0xefc] sm:$0xff]
  %v1738 = vld [vmem:[%s1 + $0xf04] sm:$0xff]
  %v1739 = vld [vmem:[%s1 + $0xf0c] sm:$0xff]
  %v1740 = vld [vmem:[%s1 + $0xf14] sm:$0xf]
  %v1741 = vld [vmem:[%s1 + $0xf18] sm:$0xff]
  %v1742 = vld [vmem:[%s1 + $0xf20] sm:$0xff]
  %v1743 = vld [vmem:[%s1 + $0xf28] sm:$0xff]
  %v1744 = vld [vmem:[%s1 + $0xf30] sm:$0xf]
  %v1745 = vld [vmem:[%s1 + $0xf34] sm:$0xff]
  %v1746 = vld [vmem:[%s1 + $0xf3c] sm:$0xff]
  %v1747 = vld [vmem:[%s1 + $0xf44] sm:$0xff]
  %v1748 = vld [vmem:[%s1 + $0xf4c] sm:$0xf]
  %v1749 = vld [vmem:[%s1 + $0xf50] sm:$0xff]
  %v1750 = vld [vmem:[%s1 + $0xf58] sm:$0xff]
  %v1751 = vld [vmem:[%s1 + $0xf60] sm:$0xff]
  %v1752 = vld [vmem:[%s1 + $0xf68] sm:$0xf]
  %v1753 = vld [vmem:[%s1 + $0xf6c] sm:$0xff]
  %v1754 = vld [vmem:[%s1 + $0xf74] sm:$0xff]
  %v1755 = vld [vmem:[%s1 + $0xf7c] sm:$0xff]
  %v1756 = vld [vmem:[%s1 + $0xf84] sm:$0xf]
  %v1757 = vld [vmem:[%s1 + $0xf88] sm:$0xff]
  %v1758 = vld [vmem:[%s1 + $0xf90] sm:$0xff]
  %v1759 = vld [vmem:[%s1 + $0xf98] sm:$0xff]
  %v1760 = vld [vmem:[%s1 + $0xfa0] sm:$0xf]
  %v1761 = vld [vmem:[%s1 + $0xfa4] sm:$0xff]
  %v1762 = vld [vmem:[%s1 + $0xfac] sm:$0xff]
  %v1763 = vld [vmem:[%s1 + $0xfb4] sm:$0xff]
  %v1764 = vld [vmem:[%s1 + $0xfbc] sm:$0xf]
  %v1765 = vld [vmem:[%s1 + $0xfc0] sm:$0xff]
  %v1766 = vld [vmem:[%s1 + $0xfc8] sm:$0xff]
  %v1767 = vld [vmem:[%s1 + $0xfd0] sm:$0xff]
  %v1768 = vld [vmem:[%s1 + $0xfd8] sm:$0xf]
  %v1769 = vld [vmem:[%s1 + $0xfdc] sm:$0xff]
  %v1770 = vld [vmem:[%s1 + $0xfe4] sm:$0xff]
  %v1771 = vld [vmem:[%s1 + $0xfec] sm:$0xff]
  %v1772 = vld [vmem:[%s1 + $0xff4] sm:$0xf]
  %v1773 = vld [vmem:[%s1 + $0xff8] sm:$0xff]
  %v1774 = vld [vmem:[%s1 + $0x1000] sm:$0xff]
  %v1775 = vld [vmem:[%s1 + $0x1008] sm:$0xff]
  %v1776 = vld [vmem:[%s1 + $0x1010] sm:$0xf]
  %v1777 = vld [vmem:[%s1 + $0x1014] sm:$0xff]
  %v1778 = vld [vmem:[%s1 + $0x101c] sm:$0xff]
  %v1779 = vld [vmem:[%s1 + $0x1024] sm:$0xff]
  %v1780 = vld [vmem:[%s1 + $0x102c] sm:$0xf]
  %v1781 = vpack.c.bf16 %v1374, %v1374
  %v1782 = vpack.c.bf16 %v1375, %v1375
  %v1783 = vpack.c.bf16 %v1376, %v1376
  %v1784 = vpack.c.bf16 %v1377, %v1377
  %v1785 = vpack.c.bf16 %v1378, %v1378
  %v1786 = vpack.c.bf16 %v1379, %v1379
  %v1787 = vpack.c.bf16 %v1380, %v1380
  %s1788 = scalar_lea.vmem %s4, 1
  %v1789 = vld [vmem:[%s1788] ss:$8 sm:$0xf]
  %v1790 = vld [vmem:[%s1788] ss:$8 sm:$0x70]
  %v1791 = vor.u32 %v1789, %v1790
  %v1793 = vperm.slane %v1791, 0
  %v1794 = vperm.slane %v1791, 1
  %v1795 = vperm.slane %v1791, 2
  %v1796 = vperm.slane %v1791, 3
  %v1797 = vperm.slane %v1791, 4
  %v1798 = vperm.slane %v1791, 5
  %v1799 = vperm.slane %v1791, 6
  %v2207 = vunpack.c.l.b16 %v1381
  %v2208 = vunpack.c.h.b16 %v1381
  %v2209 = vunpack.c.l.b16 %v1382
  %v2210 = vunpack.c.h.b16 %v1382
  %v2211 = vunpack.c.l.b16 %v1383
  %v2212 = vunpack.c.h.b16 %v1383
  %v2213 = vunpack.c.l.b16 %v1384
  %v2214 = vunpack.c.l.b16 %v1385
  %v2215 = vunpack.c.h.b16 %v1385
  %v2216 = vunpack.c.l.b16 %v1386
  %v2217 = vunpack.c.h.b16 %v1386
  %v2218 = vunpack.c.l.b16 %v1387
  %v2219 = vunpack.c.h.b16 %v1387
  %v2220 = vunpack.c.l.b16 %v1388
  %v2221 = vunpack.c.l.b16 %v1389
  %v2222 = vunpack.c.h.b16 %v1389
  %v2223 = vunpack.c.l.b16 %v1390
  %v2224 = vunpack.c.h.b16 %v1390
  %v2225 = vunpack.c.l.b16 %v1391
  %v2226 = vunpack.c.h.b16 %v1391
  %v2227 = vunpack.c.l.b16 %v1392
  %v2228 = vunpack.c.l.b16 %v1393
  %v2229 = vunpack.c.h.b16 %v1393
  %v2230 = vunpack.c.l.b16 %v1394
  %v2231 = vunpack.c.h.b16 %v1394
  %v2232 = vunpack.c.l.b16 %v1395
  %v2233 = vunpack.c.h.b16 %v1395
  %v2234 = vunpack.c.l.b16 %v1396
  %v2235 = vunpack.c.l.b16 %v1397
  %v2236 = vunpack.c.h.b16 %v1397
  %v2237 = vunpack.c.l.b16 %v1398
  %v2238 = vunpack.c.h.b16 %v1398
  %v2239 = vunpack.c.l.b16 %v1399
  %v2240 = vunpack.c.h.b16 %v1399
  %v2241 = vunpack.c.l.b16 %v1400
  %v2242 = vunpack.c.l.b16 %v1401
  %v2243 = vunpack.c.h.b16 %v1401
  %v2244 = vunpack.c.l.b16 %v1402
  %v2245 = vunpack.c.h.b16 %v1402
  %v2246 = vunpack.c.l.b16 %v1403
  %v2247 = vunpack.c.h.b16 %v1403
  %v2248 = vunpack.c.l.b16 %v1404
  %v2249 = vunpack.c.l.b16 %v1405
  %v2250 = vunpack.c.h.b16 %v1405
  %v2251 = vunpack.c.l.b16 %v1406
  %v2252 = vunpack.c.h.b16 %v1406
  %v2253 = vunpack.c.l.b16 %v1407
  %v2254 = vunpack.c.h.b16 %v1407
  %v2255 = vunpack.c.l.b16 %v1408
  %v2256 = vunpack.c.l.b16 %v1409
  %v2257 = vunpack.c.h.b16 %v1409
  %v2258 = vunpack.c.l.b16 %v1410
  %v2259 = vunpack.c.h.b16 %v1410
  %v2260 = vunpack.c.l.b16 %v1411
  %v2261 = vunpack.c.h.b16 %v1411
  %v2262 = vunpack.c.l.b16 %v1412
  %v2263 = vunpack.c.l.b16 %v1413
  %v2264 = vunpack.c.h.b16 %v1413
  %v2265 = vunpack.c.l.b16 %v1414
  %v2266 = vunpack.c.h.b16 %v1414
  %v2267 = vunpack.c.l.b16 %v1415
  %v2268 = vunpack.c.h.b16 %v1415
  %v2269 = vunpack.c.l.b16 %v1416
  %v2270 = vunpack.c.l.b16 %v1417
  %v2271 = vunpack.c.h.b16 %v1417
  %v2272 = vunpack.c.l.b16 %v1418
  %v2273 = vunpack.c.h.b16 %v1418
  %v2274 = vunpack.c.l.b16 %v1419
  %v2275 = vunpack.c.h.b16 %v1419
  %v2276 = vunpack.c.l.b16 %v1420
  %v2277 = vunpack.c.l.b16 %v1421
  %v2278 = vunpack.c.h.b16 %v1421
  %v2279 = vunpack.c.l.b16 %v1422
  %v2280 = vunpack.c.h.b16 %v1422
  %v2281 = vunpack.c.l.b16 %v1423
  %v2282 = vunpack.c.h.b16 %v1423
  %v2283 = vunpack.c.l.b16 %v1424
  %v2284 = vunpack.c.l.b16 %v1425
  %v2285 = vunpack.c.h.b16 %v1425
  %v2286 = vunpack.c.l.b16 %v1426
  %v2287 = vunpack.c.h.b16 %v1426
  %v2288 = vunpack.c.l.b16 %v1427
  %v2289 = vunpack.c.h.b16 %v1427
  %v2290 = vunpack.c.l.b16 %v1428
  %v2291 = vunpack.c.l.b16 %v1429
  %v2292 = vunpack.c.h.b16 %v1429
  %v2293 = vunpack.c.l.b16 %v1430
  %v2294 = vunpack.c.h.b16 %v1430
  %v2295 = vunpack.c.l.b16 %v1431
  %v2296 = vunpack.c.h.b16 %v1431
  %v2297 = vunpack.c.l.b16 %v1432
  %v2298 = vunpack.c.l.b16 %v1433
  %v2299 = vunpack.c.h.b16 %v1433
  %v2300 = vunpack.c.l.b16 %v1434
  %v2301 = vunpack.c.h.b16 %v1434
  %v2302 = vunpack.c.l.b16 %v1435
  %v2303 = vunpack.c.h.b16 %v1435
  %v2304 = vunpack.c.l.b16 %v1436
  %v2305 = vunpack.c.l.b16 %v1437
  %v2306 = vunpack.c.h.b16 %v1437
  %v2307 = vunpack.c.l.b16 %v1438
  %v2308 = vunpack.c.h.b16 %v1438
  %v2309 = vunpack.c.l.b16 %v1439
  %v2310 = vunpack.c.h.b16 %v1439
  %v2311 = vunpack.c.l.b16 %v1440
  %v2312 = vunpack.c.l.b16 %v1441
  %v2313 = vunpack.c.h.b16 %v1441
  %v2314 = vunpack.c.l.b16 %v1442
  %v2315 = vunpack.c.h.b16 %v1442
  %v2316 = vunpack.c.l.b16 %v1443
  %v2317 = vunpack.c.h.b16 %v1443
  %v2318 = vunpack.c.l.b16 %v1444
  %v2319 = vunpack.c.l.b16 %v1445
  %v2320 = vunpack.c.h.b16 %v1445
  %v2321 = vunpack.c.l.b16 %v1446
  %v2322 = vunpack.c.h.b16 %v1446
  %v2323 = vunpack.c.l.b16 %v1447
  %v2324 = vunpack.c.h.b16 %v1447
  %v2325 = vunpack.c.l.b16 %v1448
  %v2326 = vunpack.c.l.b16 %v1449
  %v2327 = vunpack.c.h.b16 %v1449
  %v2328 = vunpack.c.l.b16 %v1450
  %v2329 = vunpack.c.h.b16 %v1450
  %v2330 = vunpack.c.l.b16 %v1451
  %v2331 = vunpack.c.h.b16 %v1451
  %v2332 = vunpack.c.l.b16 %v1452
  %v2333 = vunpack.c.l.b16 %v1453
  %v2334 = vunpack.c.h.b16 %v1453
  %v2335 = vunpack.c.l.b16 %v1454
  %v2336 = vunpack.c.h.b16 %v1454
  %v2337 = vunpack.c.l.b16 %v1455
  %v2338 = vunpack.c.h.b16 %v1455
  %v2339 = vunpack.c.l.b16 %v1456
  %v2340 = vunpack.c.l.b16 %v1457
  %v2341 = vunpack.c.h.b16 %v1457
  %v2342 = vunpack.c.l.b16 %v1458
  %v2343 = vunpack.c.h.b16 %v1458
  %v2344 = vunpack.c.l.b16 %v1459
  %v2345 = vunpack.c.h.b16 %v1459
  %v2346 = vunpack.c.l.b16 %v1460
  %v2347 = vunpack.c.l.b16 %v1461
  %v2348 = vunpack.c.h.b16 %v1461
  %v2349 = vunpack.c.l.b16 %v1462
  %v2350 = vunpack.c.h.b16 %v1462
  %v2351 = vunpack.c.l.b16 %v1463
  %v2352 = vunpack.c.h.b16 %v1463
  %v2353 = vunpack.c.l.b16 %v1464
  %v2354 = vunpack.c.l.b16 %v1465
  %v2355 = vunpack.c.h.b16 %v1465
  %v2356 = vunpack.c.l.b16 %v1466
  %v2357 = vunpack.c.h.b16 %v1466
  %v2358 = vunpack.c.l.b16 %v1467
  %v2359 = vunpack.c.h.b16 %v1467
  %v2360 = vunpack.c.l.b16 %v1468
  %v2361 = vunpack.c.l.b16 %v1469
  %v2362 = vunpack.c.h.b16 %v1469
  %v2363 = vunpack.c.l.b16 %v1470
  %v2364 = vunpack.c.h.b16 %v1470
  %v2365 = vunpack.c.l.b16 %v1471
  %v2366 = vunpack.c.h.b16 %v1471
  %v2367 = vunpack.c.l.b16 %v1472
  %v2368 = vunpack.c.l.b16 %v1473
  %v2369 = vunpack.c.h.b16 %v1473
  %v2370 = vunpack.c.l.b16 %v1474
  %v2371 = vunpack.c.h.b16 %v1474
  %v2372 = vunpack.c.l.b16 %v1475
  %v2373 = vunpack.c.h.b16 %v1475
  %v2374 = vunpack.c.l.b16 %v1476
  %v2375 = vunpack.c.l.b16 %v1477
  %v2376 = vunpack.c.h.b16 %v1477
  %v2377 = vunpack.c.l.b16 %v1478
  %v2378 = vunpack.c.h.b16 %v1478
  %v2379 = vunpack.c.l.b16 %v1479
  %v2380 = vunpack.c.h.b16 %v1479
  %v2381 = vunpack.c.l.b16 %v1480
  %v2382 = vunpack.c.l.b16 %v1481
  %v2383 = vunpack.c.h.b16 %v1481
  %v2384 = vunpack.c.l.b16 %v1482
  %v2385 = vunpack.c.h.b16 %v1482
  %v2386 = vunpack.c.l.b16 %v1483
  %v2387 = vunpack.c.h.b16 %v1483
  %v2388 = vunpack.c.l.b16 %v1484
  %v2389 = vunpack.c.l.b16 %v1485
  %v2390 = vunpack.c.h.b16 %v1485
  %v2391 = vunpack.c.l.b16 %v1486
  %v2392 = vunpack.c.h.b16 %v1486
  %v2393 = vunpack.c.l.b16 %v1487
  %v2394 = vunpack.c.h.b16 %v1487
  %v2395 = vunpack.c.l.b16 %v1488
  %v2396 = vunpack.c.l.b16 %v1489
  %v2397 = vunpack.c.h.b16 %v1489
  %v2398 = vunpack.c.l.b16 %v1490
  %v2399 = vunpack.c.h.b16 %v1490
  %v2400 = vunpack.c.l.b16 %v1491
  %v2401 = vunpack.c.h.b16 %v1491
  %v2402 = vunpack.c.l.b16 %v1492
  %v2403 = vunpack.c.l.b16 %v1493
  %v2404 = vunpack.c.h.b16 %v1493
  %v2405 = vunpack.c.l.b16 %v1494
  %v2406 = vunpack.c.h.b16 %v1494
  %v2407 = vunpack.c.l.b16 %v1495
  %v2408 = vunpack.c.h.b16 %v1495
  %v2409 = vunpack.c.l.b16 %v1496
  %v2410 = vunpack.c.l.b16 %v1497
  %v2411 = vunpack.c.h.b16 %v1497
  %v2412 = vunpack.c.l.b16 %v1498
  %v2413 = vunpack.c.h.b16 %v1498
  %v2414 = vunpack.c.l.b16 %v1499
  %v2415 = vunpack.c.h.b16 %v1499
  %v2416 = vunpack.c.l.b16 %v1500
  %v2417 = vunpack.c.l.b16 %v1501
  %v2418 = vunpack.c.h.b16 %v1501
  %v2419 = vunpack.c.l.b16 %v1502
  %v2420 = vunpack.c.h.b16 %v1502
  %v2421 = vunpack.c.l.b16 %v1503
  %v2422 = vunpack.c.h.b16 %v1503
  %v2423 = vunpack.c.l.b16 %v1504
  %v2424 = vunpack.c.l.b16 %v1505
  %v2425 = vunpack.c.h.b16 %v1505
  %v2426 = vunpack.c.l.b16 %v1506
  %v2427 = vunpack.c.h.b16 %v1506
  %v2428 = vunpack.c.l.b16 %v1507
  %v2429 = vunpack.c.h.b16 %v1507
  %v2430 = vunpack.c.l.b16 %v1508
  %v2431 = vunpack.c.l.b16 %v1509
  %v2432 = vunpack.c.h.b16 %v1509
  %v2433 = vunpack.c.l.b16 %v1510
  %v2434 = vunpack.c.h.b16 %v1510
  %v2435 = vunpack.c.l.b16 %v1511
  %v2436 = vunpack.c.h.b16 %v1511
  %v2437 = vunpack.c.l.b16 %v1512
  %v2438 = vunpack.c.l.b16 %v1513
  %v2439 = vunpack.c.h.b16 %v1513
  %v2440 = vunpack.c.l.b16 %v1514
  %v2441 = vunpack.c.h.b16 %v1514
  %v2442 = vunpack.c.l.b16 %v1515
  %v2443 = vunpack.c.h.b16 %v1515
  %v2444 = vunpack.c.l.b16 %v1516
  %v2445 = vunpack.c.l.b16 %v1517
  %v2446 = vunpack.c.h.b16 %v1517
  %v2447 = vunpack.c.l.b16 %v1518
  %v2448 = vunpack.c.h.b16 %v1518
  %v2449 = vunpack.c.l.b16 %v1519
  %v2450 = vunpack.c.h.b16 %v1519
  %v2451 = vunpack.c.l.b16 %v1520
  %v2452 = vunpack.c.l.b16 %v1521
  %v2453 = vunpack.c.h.b16 %v1521
  %v2454 = vunpack.c.l.b16 %v1522
  %v2455 = vunpack.c.h.b16 %v1522
  %v2456 = vunpack.c.l.b16 %v1523
  %v2457 = vunpack.c.h.b16 %v1523
  %v2458 = vunpack.c.l.b16 %v1524
  %v2459 = vunpack.c.l.b16 %v1525
  %v2460 = vunpack.c.h.b16 %v1525
  %v2461 = vunpack.c.l.b16 %v1526
  %v2462 = vunpack.c.h.b16 %v1526
  %v2463 = vunpack.c.l.b16 %v1527
  %v2464 = vunpack.c.h.b16 %v1527
  %v2465 = vunpack.c.l.b16 %v1528
  %v2466 = vunpack.c.l.b16 %v1529
  %v2467 = vunpack.c.h.b16 %v1529
  %v2468 = vunpack.c.l.b16 %v1530
  %v2469 = vunpack.c.h.b16 %v1530
  %v2470 = vunpack.c.l.b16 %v1531
  %v2471 = vunpack.c.h.b16 %v1531
  %v2472 = vunpack.c.l.b16 %v1532
  %v2473 = vunpack.c.l.b16 %v1533
  %v2474 = vunpack.c.h.b16 %v1533
  %v2475 = vunpack.c.l.b16 %v1534
  %v2476 = vunpack.c.h.b16 %v1534
  %v2477 = vunpack.c.l.b16 %v1535
  %v2478 = vunpack.c.h.b16 %v1535
  %v2479 = vunpack.c.l.b16 %v1536
  %v2480 = vunpack.c.l.b16 %v1537
  %v2481 = vunpack.c.h.b16 %v1537
  %v2482 = vunpack.c.l.b16 %v1538
  %v2483 = vunpack.c.h.b16 %v1538
  %v2484 = vunpack.c.l.b16 %v1539
  %v2485 = vunpack.c.h.b16 %v1539
  %v2486 = vunpack.c.l.b16 %v1540
  %v2487 = vunpack.c.l.b16 %v1541
  %v2488 = vunpack.c.h.b16 %v1541
  %v2489 = vunpack.c.l.b16 %v1542
  %v2490 = vunpack.c.h.b16 %v1542
  %v2491 = vunpack.c.l.b16 %v1543
  %v2492 = vunpack.c.h.b16 %v1543
  %v2493 = vunpack.c.l.b16 %v1544
  %v2494 = vunpack.c.l.b16 %v1545
  %v2495 = vunpack.c.h.b16 %v1545
  %v2496 = vunpack.c.l.b16 %v1546
  %v2497 = vunpack.c.h.b16 %v1546
  %v2498 = vunpack.c.l.b16 %v1547
  %v2499 = vunpack.c.h.b16 %v1547
  %v2500 = vunpack.c.l.b16 %v1548
  %v2501 = vunpack.c.l.b16 %v1549
  %v2502 = vunpack.c.h.b16 %v1549
  %v2503 = vunpack.c.l.b16 %v1550
  %v2504 = vunpack.c.h.b16 %v1550
  %v2505 = vunpack.c.l.b16 %v1551
  %v2506 = vunpack.c.h.b16 %v1551
  %v2507 = vunpack.c.l.b16 %v1552
  %v2508 = vunpack.c.l.b16 %v1553
  %v2509 = vunpack.c.h.b16 %v1553
  %v2510 = vunpack.c.l.b16 %v1554
  %v2511 = vunpack.c.h.b16 %v1554
  %v2512 = vunpack.c.l.b16 %v1555
  %v2513 = vunpack.c.h.b16 %v1555
  %v2514 = vunpack.c.l.b16 %v1556
  %v2515 = vunpack.c.l.b16 %v1557
  %v2516 = vunpack.c.h.b16 %v1557
  %v2517 = vunpack.c.l.b16 %v1558
  %v2518 = vunpack.c.h.b16 %v1558
  %v2519 = vunpack.c.l.b16 %v1559
  %v2520 = vunpack.c.h.b16 %v1559
  %v2521 = vunpack.c.l.b16 %v1560
  %v2522 = vunpack.c.l.b16 %v1561
  %v2523 = vunpack.c.h.b16 %v1561
  %v2524 = vunpack.c.l.b16 %v1562
  %v2525 = vunpack.c.h.b16 %v1562
  %v2526 = vunpack.c.l.b16 %v1563
  %v2527 = vunpack.c.h.b16 %v1563
  %v2528 = vunpack.c.l.b16 %v1564
  %v2529 = vunpack.c.l.b16 %v1565
  %v2530 = vunpack.c.h.b16 %v1565
  %v2531 = vunpack.c.l.b16 %v1566
  %v2532 = vunpack.c.h.b16 %v1566
  %v2533 = vunpack.c.l.b16 %v1567
  %v2534 = vunpack.c.h.b16 %v1567
  %v2535 = vunpack.c.l.b16 %v1568
  %v2536 = vunpack.c.l.b16 %v1569
  %v2537 = vunpack.c.h.b16 %v1569
  %v2538 = vunpack.c.l.b16 %v1570
  %v2539 = vunpack.c.h.b16 %v1570
  %v2540 = vunpack.c.l.b16 %v1571
  %v2541 = vunpack.c.h.b16 %v1571
  %v2542 = vunpack.c.l.b16 %v1572
  %v2543 = vunpack.c.l.b16 %v1573
  %v2544 = vunpack.c.h.b16 %v1573
  %v2545 = vunpack.c.l.b16 %v1574
  %v2546 = vunpack.c.h.b16 %v1574
  %v2547 = vunpack.c.l.b16 %v1575
  %v2548 = vunpack.c.h.b16 %v1575
  %v2549 = vunpack.c.l.b16 %v1576
  %v2550 = vunpack.c.l.b16 %v1577
  %v2551 = vunpack.c.h.b16 %v1577
  %v2552 = vunpack.c.l.b16 %v1578
  %v2553 = vunpack.c.h.b16 %v1578
  %v2554 = vunpack.c.l.b16 %v1579
  %v2555 = vunpack.c.h.b16 %v1579
  %v2556 = vunpack.c.l.b16 %v1580
  %v2557 = vunpack.c.l.b16 %v1581
  %v2558 = vunpack.c.h.b16 %v1581
  %v2559 = vunpack.c.l.b16 %v1582
  %v2560 = vunpack.c.h.b16 %v1582
  %v2561 = vunpack.c.l.b16 %v1583
  %v2562 = vunpack.c.h.b16 %v1583
  %v2563 = vunpack.c.l.b16 %v1584
  %v2564 = vunpack.c.l.b16 %v1585
  %v2565 = vunpack.c.h.b16 %v1585
  %v2566 = vunpack.c.l.b16 %v1586
  %v2567 = vunpack.c.h.b16 %v1586
  %v2568 = vunpack.c.l.b16 %v1587
  %v2569 = vunpack.c.h.b16 %v1587
  %v2570 = vunpack.c.l.b16 %v1588
  %v2571 = vunpack.c.l.b16 %v1589
  %v2572 = vunpack.c.h.b16 %v1589
  %v2573 = vunpack.c.l.b16 %v1590
  %v2574 = vunpack.c.h.b16 %v1590
  %v2575 = vunpack.c.l.b16 %v1591
  %v2576 = vunpack.c.h.b16 %v1591
  %v2577 = vunpack.c.l.b16 %v1592
  %v2578 = vunpack.c.l.b16 %v1593
  %v2579 = vunpack.c.h.b16 %v1593
  %v2580 = vunpack.c.l.b16 %v1594
  %v2581 = vunpack.c.h.b16 %v1594
  %v2582 = vunpack.c.l.b16 %v1595
  %v2583 = vunpack.c.h.b16 %v1595
  %v2584 = vunpack.c.l.b16 %v1596
  %v2585 = vunpack.c.l.b16 %v1597
  %v2586 = vunpack.c.h.b16 %v1597
  %v2587 = vunpack.c.l.b16 %v1598
  %v2588 = vunpack.c.h.b16 %v1598
  %v2589 = vunpack.c.l.b16 %v1599
  %v2590 = vunpack.c.h.b16 %v1599
  %v2591 = vunpack.c.l.b16 %v1600
  %v2592 = vunpack.c.l.b16 %v1601
  %v2593 = vunpack.c.h.b16 %v1601
  %v2594 = vunpack.c.l.b16 %v1602
  %v2595 = vunpack.c.h.b16 %v1602
  %v2596 = vunpack.c.l.b16 %v1603
  %v2597 = vunpack.c.h.b16 %v1603
  %v2598 = vunpack.c.l.b16 %v1604
  %v2599 = vunpack.c.l.b16 %v1605
  %v2600 = vunpack.c.h.b16 %v1605
  %v2601 = vunpack.c.l.b16 %v1606
  %v2602 = vunpack.c.h.b16 %v1606
  %v2603 = vunpack.c.l.b16 %v1607
  %v2604 = vunpack.c.h.b16 %v1607
  %v2605 = vunpack.c.l.b16 %v1608
  %v2606 = vunpack.c.l.b16 %v1609
  %v2607 = vunpack.c.h.b16 %v1609
  %v2608 = vunpack.c.l.b16 %v1610
  %v2609 = vunpack.c.h.b16 %v1610
  %v2610 = vunpack.c.l.b16 %v1611
  %v2611 = vunpack.c.h.b16 %v1611
  %v2612 = vunpack.c.l.b16 %v1612
  %v2613 = vunpack.c.l.b16 %v1613
  %v2614 = vunpack.c.h.b16 %v1613
  %v2615 = vunpack.c.l.b16 %v1614
  %v2616 = vunpack.c.h.b16 %v1614
  %v2617 = vunpack.c.l.b16 %v1615
  %v2618 = vunpack.c.h.b16 %v1615
  %v2619 = vunpack.c.l.b16 %v1616
  %v2620 = vunpack.c.l.b16 %v1617
  %v2621 = vunpack.c.h.b16 %v1617
  %v2622 = vunpack.c.l.b16 %v1618
  %v2623 = vunpack.c.h.b16 %v1618
  %v2624 = vunpack.c.l.b16 %v1619
  %v2625 = vunpack.c.h.b16 %v1619
  %v2626 = vunpack.c.l.b16 %v1620
  %v2627 = vunpack.c.l.b16 %v1621
  %v2628 = vunpack.c.h.b16 %v1621
  %v2629 = vunpack.c.l.b16 %v1622
  %v2630 = vunpack.c.h.b16 %v1622
  %v2631 = vunpack.c.l.b16 %v1623
  %v2632 = vunpack.c.h.b16 %v1623
  %v2633 = vunpack.c.l.b16 %v1624
  %v2634 = vunpack.c.l.b16 %v1625
  %v2635 = vunpack.c.h.b16 %v1625
  %v2636 = vunpack.c.l.b16 %v1626
  %v2637 = vunpack.c.h.b16 %v1626
  %v2638 = vunpack.c.l.b16 %v1627
  %v2639 = vunpack.c.h.b16 %v1627
  %v2640 = vunpack.c.l.b16 %v1628
  %v2641 = vunpack.c.l.b16 %v1629
  %v2642 = vunpack.c.h.b16 %v1629
  %v2643 = vunpack.c.l.b16 %v1630
  %v2644 = vunpack.c.h.b16 %v1630
  %v2645 = vunpack.c.l.b16 %v1631
  %v2646 = vunpack.c.h.b16 %v1631
  %v2647 = vunpack.c.l.b16 %v1632
  %v2648 = vunpack.c.l.b16 %v1633
  %v2649 = vunpack.c.h.b16 %v1633
  %v2650 = vunpack.c.l.b16 %v1634
  %v2651 = vunpack.c.h.b16 %v1634
  %v2652 = vunpack.c.l.b16 %v1635
  %v2653 = vunpack.c.h.b16 %v1635
  %v2654 = vunpack.c.l.b16 %v1636
  %v2655 = vunpack.c.l.b16 %v1637
  %v2656 = vunpack.c.h.b16 %v1637
  %v2657 = vunpack.c.l.b16 %v1638
  %v2658 = vunpack.c.h.b16 %v1638
  %v2659 = vunpack.c.l.b16 %v1639
  %v2660 = vunpack.c.h.b16 %v1639
  %v2661 = vunpack.c.l.b16 %v1640
  %v2662 = vunpack.c.l.b16 %v1641
  %v2663 = vunpack.c.h.b16 %v1641
  %v2664 = vunpack.c.l.b16 %v1642
  %v2665 = vunpack.c.h.b16 %v1642
  %v2666 = vunpack.c.l.b16 %v1643
  %v2667 = vunpack.c.h.b16 %v1643
  %v2668 = vunpack.c.l.b16 %v1644
  %v2669 = vunpack.c.l.b16 %v1645
  %v2670 = vunpack.c.h.b16 %v1645
  %v2671 = vunpack.c.l.b16 %v1646
  %v2672 = vunpack.c.h.b16 %v1646
  %v2673 = vunpack.c.l.b16 %v1647
  %v2674 = vunpack.c.h.b16 %v1647
  %v2675 = vunpack.c.l.b16 %v1648
  %v2676 = vunpack.c.l.b16 %v1649
  %v2677 = vunpack.c.h.b16 %v1649
  %v2678 = vunpack.c.l.b16 %v1650
  %v2679 = vunpack.c.h.b16 %v1650
  %v2680 = vunpack.c.l.b16 %v1651
  %v2681 = vunpack.c.h.b16 %v1651
  %v2682 = vunpack.c.l.b16 %v1652
  %v2683 = vunpack.c.l.b16 %v1653
  %v2684 = vunpack.c.h.b16 %v1653
  %v2685 = vunpack.c.l.b16 %v1654
  %v2686 = vunpack.c.h.b16 %v1654
  %v2687 = vunpack.c.l.b16 %v1655
  %v2688 = vunpack.c.h.b16 %v1655
  %v2689 = vunpack.c.l.b16 %v1656
  %v2690 = vunpack.c.l.b16 %v1657
  %v2691 = vunpack.c.h.b16 %v1657
  %v2692 = vunpack.c.l.b16 %v1658
  %v2693 = vunpack.c.h.b16 %v1658
  %v2694 = vunpack.c.l.b16 %v1659
  %v2695 = vunpack.c.h.b16 %v1659
  %v2696 = vunpack.c.l.b16 %v1660
  %v2697 = vunpack.c.l.b16 %v1661
  %v2698 = vunpack.c.h.b16 %v1661
  %v2699 = vunpack.c.l.b16 %v1662
  %v2700 = vunpack.c.h.b16 %v1662
  %v2701 = vunpack.c.l.b16 %v1663
  %v2702 = vunpack.c.h.b16 %v1663
  %v2703 = vunpack.c.l.b16 %v1664
  %v2704 = vunpack.c.l.b16 %v1665
  %v2705 = vunpack.c.h.b16 %v1665
  %v2706 = vunpack.c.l.b16 %v1666
  %v2707 = vunpack.c.h.b16 %v1666
  %v2708 = vunpack.c.l.b16 %v1667
  %v2709 = vunpack.c.h.b16 %v1667
  %v2710 = vunpack.c.l.b16 %v1668
  %v2711 = vunpack.c.l.b16 %v1669
  %v2712 = vunpack.c.h.b16 %v1669
  %v2713 = vunpack.c.l.b16 %v1670
  %v2714 = vunpack.c.h.b16 %v1670
  %v2715 = vunpack.c.l.b16 %v1671
  %v2716 = vunpack.c.h.b16 %v1671
  %v2717 = vunpack.c.l.b16 %v1672
  %v2718 = vunpack.c.l.b16 %v1673
  %v2719 = vunpack.c.h.b16 %v1673
  %v2720 = vunpack.c.l.b16 %v1674
  %v2721 = vunpack.c.h.b16 %v1674
  %v2722 = vunpack.c.l.b16 %v1675
  %v2723 = vunpack.c.h.b16 %v1675
  %v2724 = vunpack.c.l.b16 %v1676
  %v2725 = vunpack.c.l.b16 %v1677
  %v2726 = vunpack.c.h.b16 %v1677
  %v2727 = vunpack.c.l.b16 %v1678
  %v2728 = vunpack.c.h.b16 %v1678
  %v2729 = vunpack.c.l.b16 %v1679
  %v2730 = vunpack.c.h.b16 %v1679
  %v2731 = vunpack.c.l.b16 %v1680
  %v2732 = vunpack.c.l.b16 %v1681
  %v2733 = vunpack.c.h.b16 %v1681
  %v2734 = vunpack.c.l.b16 %v1682
  %v2735 = vunpack.c.h.b16 %v1682
  %v2736 = vunpack.c.l.b16 %v1683
  %v2737 = vunpack.c.h.b16 %v1683
  %v2738 = vunpack.c.l.b16 %v1684
  %v2739 = vunpack.c.l.b16 %v1685
  %v2740 = vunpack.c.h.b16 %v1685
  %v2741 = vunpack.c.l.b16 %v1686
  %v2742 = vunpack.c.h.b16 %v1686
  %v2743 = vunpack.c.l.b16 %v1687
  %v2744 = vunpack.c.h.b16 %v1687
  %v2745 = vunpack.c.l.b16 %v1688
  %v2746 = vunpack.c.l.b16 %v1689
  %v2747 = vunpack.c.h.b16 %v1689
  %v2748 = vunpack.c.l.b16 %v1690
  %v2749 = vunpack.c.h.b16 %v1690
  %v2750 = vunpack.c.l.b16 %v1691
  %v2751 = vunpack.c.h.b16 %v1691
  %v2752 = vunpack.c.l.b16 %v1692
  %v2753 = vunpack.c.l.b16 %v1693
  %v2754 = vunpack.c.h.b16 %v1693
  %v2755 = vunpack.c.l.b16 %v1694
  %v2756 = vunpack.c.h.b16 %v1694
  %v2757 = vunpack.c.l.b16 %v1695
  %v2758 = vunpack.c.h.b16 %v1695
  %v2759 = vunpack.c.l.b16 %v1696
  %v2760 = vunpack.c.l.b16 %v1697
  %v2761 = vunpack.c.h.b16 %v1697
  %v2762 = vunpack.c.l.b16 %v1698
  %v2763 = vunpack.c.h.b16 %v1698
  %v2764 = vunpack.c.l.b16 %v1699
  %v2765 = vunpack.c.h.b16 %v1699
  %v2766 = vunpack.c.l.b16 %v1700
  %v2767 = vunpack.c.l.b16 %v1701
  %v2768 = vunpack.c.h.b16 %v1701
  %v2769 = vunpack.c.l.b16 %v1702
  %v2770 = vunpack.c.h.b16 %v1702
  %v2771 = vunpack.c.l.b16 %v1703
  %v2772 = vunpack.c.h.b16 %v1703
  %v2773 = vunpack.c.l.b16 %v1704
  %v2774 = vunpack.c.l.b16 %v1705
  %v2775 = vunpack.c.h.b16 %v1705
  %v2776 = vunpack.c.l.b16 %v1706
  %v2777 = vunpack.c.h.b16 %v1706
  %v2778 = vunpack.c.l.b16 %v1707
  %v2779 = vunpack.c.h.b16 %v1707
  %v2780 = vunpack.c.l.b16 %v1708
  %v2781 = vunpack.c.l.b16 %v1709
  %v2782 = vunpack.c.h.b16 %v1709
  %v2783 = vunpack.c.l.b16 %v1710
  %v2784 = vunpack.c.h.b16 %v1710
  %v2785 = vunpack.c.l.b16 %v1711
  %v2786 = vunpack.c.h.b16 %v1711
  %v2787 = vunpack.c.l.b16 %v1712
  %v2788 = vunpack.c.l.b16 %v1713
  %v2789 = vunpack.c.h.b16 %v1713
  %v2790 = vunpack.c.l.b16 %v1714
  %v2791 = vunpack.c.h.b16 %v1714
  %v2792 = vunpack.c.l.b16 %v1715
  %v2793 = vunpack.c.h.b16 %v1715
  %v2794 = vunpack.c.l.b16 %v1716
  %v2795 = vunpack.c.l.b16 %v1717
  %v2796 = vunpack.c.h.b16 %v1717
  %v2797 = vunpack.c.l.b16 %v1718
  %v2798 = vunpack.c.h.b16 %v1718
  %v2799 = vunpack.c.l.b16 %v1719
  %v2800 = vunpack.c.h.b16 %v1719
  %v2801 = vunpack.c.l.b16 %v1720
  %v2802 = vunpack.c.l.b16 %v1721
  %v2803 = vunpack.c.h.b16 %v1721
  %v2804 = vunpack.c.l.b16 %v1722
  %v2805 = vunpack.c.h.b16 %v1722
  %v2806 = vunpack.c.l.b16 %v1723
  %v2807 = vunpack.c.h.b16 %v1723
  %v2808 = vunpack.c.l.b16 %v1724
  %v2809 = vunpack.c.l.b16 %v1725
  %v2810 = vunpack.c.h.b16 %v1725
  %v2811 = vunpack.c.l.b16 %v1726
  %v2812 = vunpack.c.h.b16 %v1726
  %v2813 = vunpack.c.l.b16 %v1727
  %v2814 = vunpack.c.h.b16 %v1727
  %v2815 = vunpack.c.l.b16 %v1728
  %v2816 = vunpack.c.l.b16 %v1729
  %v2817 = vunpack.c.h.b16 %v1729
  %v2818 = vunpack.c.l.b16 %v1730
  %v2819 = vunpack.c.h.b16 %v1730
  %v2820 = vunpack.c.l.b16 %v1731
  %v2821 = vunpack.c.h.b16 %v1731
  %v2822 = vunpack.c.l.b16 %v1732
  %v2823 = vunpack.c.l.b16 %v1733
  %v2824 = vunpack.c.h.b16 %v1733
  %v2825 = vunpack.c.l.b16 %v1734
  %v2826 = vunpack.c.h.b16 %v1734
  %v2827 = vunpack.c.l.b16 %v1735
  %v2828 = vunpack.c.h.b16 %v1735
  %v2829 = vunpack.c.l.b16 %v1736
  %v2830 = vunpack.c.l.b16 %v1737
  %v2831 = vunpack.c.h.b16 %v1737
  %v2832 = vunpack.c.l.b16 %v1738
  %v2833 = vunpack.c.h.b16 %v1738
  %v2834 = vunpack.c.l.b16 %v1739
  %v2835 = vunpack.c.h.b16 %v1739
  %v2836 = vunpack.c.l.b16 %v1740
  %v2837 = vunpack.c.l.b16 %v1741
  %v2838 = vunpack.c.h.b16 %v1741
  %v2839 = vunpack.c.l.b16 %v1742
  %v2840 = vunpack.c.h.b16 %v1742
  %v2841 = vunpack.c.l.b16 %v1743
  %v2842 = vunpack.c.h.b16 %v1743
  %v2843 = vunpack.c.l.b16 %v1744
  %v2844 = vunpack.c.l.b16 %v1745
  %v2845 = vunpack.c.h.b16 %v1745
  %v2846 = vunpack.c.l.b16 %v1746
  %v2847 = vunpack.c.h.b16 %v1746
  %v2848 = vunpack.c.l.b16 %v1747
  %v2849 = vunpack.c.h.b16 %v1747
  %v2850 = vunpack.c.l.b16 %v1748
  %v2851 = vunpack.c.l.b16 %v1749
  %v2852 = vunpack.c.h.b16 %v1749
  %v2853 = vunpack.c.l.b16 %v1750
  %v2854 = vunpack.c.h.b16 %v1750
  %v2855 = vunpack.c.l.b16 %v1751
  %v2856 = vunpack.c.h.b16 %v1751
  %v2857 = vunpack.c.l.b16 %v1752
  %v2858 = vunpack.c.l.b16 %v1753
  %v2859 = vunpack.c.h.b16 %v1753
  %v2860 = vunpack.c.l.b16 %v1754
  %v2861 = vunpack.c.h.b16 %v1754
  %v2862 = vunpack.c.l.b16 %v1755
  %v2863 = vunpack.c.h.b16 %v1755
  %v2864 = vunpack.c.l.b16 %v1756
  %v2865 = vunpack.c.l.b16 %v1757
  %v2866 = vunpack.c.h.b16 %v1757
  %v2867 = vunpack.c.l.b16 %v1758
  %v2868 = vunpack.c.h.b16 %v1758
  %v2869 = vunpack.c.l.b16 %v1759
  %v2870 = vunpack.c.h.b16 %v1759
  %v2871 = vunpack.c.l.b16 %v1760
  %v2872 = vunpack.c.l.b16 %v1761
  %v2873 = vunpack.c.h.b16 %v1761
  %v2874 = vunpack.c.l.b16 %v1762
  %v2875 = vunpack.c.h.b16 %v1762
  %v2876 = vunpack.c.l.b16 %v1763
  %v2877 = vunpack.c.h.b16 %v1763
  %v2878 = vunpack.c.l.b16 %v1764
  %v2879 = vunpack.c.l.b16 %v1765
  %v2880 = vunpack.c.h.b16 %v1765
  %v2881 = vunpack.c.l.b16 %v1766
  %v2882 = vunpack.c.h.b16 %v1766
  %v2883 = vunpack.c.l.b16 %v1767
  %v2884 = vunpack.c.h.b16 %v1767
  %v2885 = vunpack.c.l.b16 %v1768
  %v2886 = vunpack.c.l.b16 %v1769
  %v2887 = vunpack.c.h.b16 %v1769
  %v2888 = vunpack.c.l.b16 %v1770
  %v2889 = vunpack.c.h.b16 %v1770
  %v2890 = vunpack.c.l.b16 %v1771
  %v2891 = vunpack.c.h.b16 %v1771
  %v2892 = vunpack.c.l.b16 %v1772
  %v2893 = vunpack.c.l.b16 %v1773
  %v2894 = vunpack.c.h.b16 %v1773
  %v2895 = vunpack.c.l.b16 %v1774
  %v2896 = vunpack.c.h.b16 %v1774
  %v2897 = vunpack.c.l.b16 %v1775
  %v2898 = vunpack.c.h.b16 %v1775
  %v2899 = vunpack.c.l.b16 %v1776
  %v2900 = vunpack.c.l.b16 %v1777
  %v2901 = vunpack.c.h.b16 %v1777
  %v2902 = vunpack.c.l.b16 %v1778
  %v2903 = vunpack.c.h.b16 %v1778
  %v2904 = vunpack.c.l.b16 %v1779
  %v2905 = vunpack.c.h.b16 %v1779
  %v2906 = vunpack.c.l.b16 %v1780
  %v2907 = vpack.c.b16 %v2214, %v2207
  %v2908 = vpack.c.b16 %v2215, %v2208
  %v2909 = vpack.c.b16 %v2216, %v2209
  %v2910 = vpack.c.b16 %v2217, %v2210
  %v2911 = vpack.c.b16 %v2218, %v2211
  %v2912 = vpack.c.b16 %v2219, %v2212
  %v2913 = vpack.c.b16 %v2220, %v2213
  %v2914 = vpack.c.b16 %v2228, %v2221
  %v2915 = vpack.c.b16 %v2229, %v2222
  %v2916 = vpack.c.b16 %v2230, %v2223
  %v2917 = vpack.c.b16 %v2231, %v2224
  %v2918 = vpack.c.b16 %v2232, %v2225
  %v2919 = vpack.c.b16 %v2233, %v2226
  %v2920 = vpack.c.b16 %v2234, %v2227
  %v2921 = vpack.c.b16 %v2242, %v2235
  %v2922 = vpack.c.b16 %v2243, %v2236
  %v2923 = vpack.c.b16 %v2244, %v2237
  %v2924 = vpack.c.b16 %v2245, %v2238
  %v2925 = vpack.c.b16 %v2246, %v2239
  %v2926 = vpack.c.b16 %v2247, %v2240
  %v2927 = vpack.c.b16 %v2248, %v2241
  %v2928 = vpack.c.b16 %v2256, %v2249
  %v2929 = vpack.c.b16 %v2257, %v2250
  %v2930 = vpack.c.b16 %v2258, %v2251
  %v2931 = vpack.c.b16 %v2259, %v2252
  %v2932 = vpack.c.b16 %v2260, %v2253
  %v2933 = vpack.c.b16 %v2261, %v2254
  %v2934 = vpack.c.b16 %v2262, %v2255
  %v2935 = vpack.c.b16 %v2270, %v2263
  %v2936 = vpack.c.b16 %v2271, %v2264
  %v2937 = vpack.c.b16 %v2272, %v2265
  %v2938 = vpack.c.b16 %v2273, %v2266
  %v2939 = vpack.c.b16 %v2274, %v2267
  %v2940 = vpack.c.b16 %v2275, %v2268
  %v2941 = vpack.c.b16 %v2276, %v2269
  %v2942 = vpack.c.b16 %v2284, %v2277
  %v2943 = vpack.c.b16 %v2285, %v2278
  %v2944 = vpack.c.b16 %v2286, %v2279
  %v2945 = vpack.c.b16 %v2287, %v2280
  %v2946 = vpack.c.b16 %v2288, %v2281
  %v2947 = vpack.c.b16 %v2289, %v2282
  %v2948 = vpack.c.b16 %v2290, %v2283
  %v2949 = vpack.c.b16 %v2298, %v2291
  %v2950 = vpack.c.b16 %v2299, %v2292
  %v2951 = vpack.c.b16 %v2300, %v2293
  %v2952 = vpack.c.b16 %v2301, %v2294
  %v2953 = vpack.c.b16 %v2302, %v2295
  %v2954 = vpack.c.b16 %v2303, %v2296
  %v2955 = vpack.c.b16 %v2304, %v2297
  %v2956 = vpack.c.b16 %v2312, %v2305
  %v2957 = vpack.c.b16 %v2313, %v2306
  %v2958 = vpack.c.b16 %v2314, %v2307
  %v2959 = vpack.c.b16 %v2315, %v2308
  %v2960 = vpack.c.b16 %v2316, %v2309
  %v2961 = vpack.c.b16 %v2317, %v2310
  %v2962 = vpack.c.b16 %v2318, %v2311
  %v2963 = vpack.c.b16 %v2326, %v2319
  %v2964 = vpack.c.b16 %v2327, %v2320
  %v2965 = vpack.c.b16 %v2328, %v2321
  %v2966 = vpack.c.b16 %v2329, %v2322
  %v2967 = vpack.c.b16 %v2330, %v2323
  %v2968 = vpack.c.b16 %v2331, %v2324
  %v2969 = vpack.c.b16 %v2332, %v2325
  %v2970 = vpack.c.b16 %v2340, %v2333
  %v2971 = vpack.c.b16 %v2341, %v2334
  %v2972 = vpack.c.b16 %v2342, %v2335
  %v2973 = vpack.c.b16 %v2343, %v2336
  %v2974 = vpack.c.b16 %v2344, %v2337
  %v2975 = vpack.c.b16 %v2345, %v2338
  %v2976 = vpack.c.b16 %v2346, %v2339
  %v2977 = vpack.c.b16 %v2354, %v2347
  %v2978 = vpack.c.b16 %v2355, %v2348
  %v2979 = vpack.c.b16 %v2356, %v2349
  %v2980 = vpack.c.b16 %v2357, %v2350
  %v2981 = vpack.c.b16 %v2358, %v2351
  %v2982 = vpack.c.b16 %v2359, %v2352
  %v2983 = vpack.c.b16 %v2360, %v2353
  %v2984 = vpack.c.b16 %v2368, %v2361
  %v2985 = vpack.c.b16 %v2369, %v2362
  %v2986 = vpack.c.b16 %v2370, %v2363
  %v2987 = vpack.c.b16 %v2371, %v2364
  %v2988 = vpack.c.b16 %v2372, %v2365
  %v2989 = vpack.c.b16 %v2373, %v2366
  %v2990 = vpack.c.b16 %v2374, %v2367
  %v2991 = vpack.c.b16 %v2382, %v2375
  %v2992 = vpack.c.b16 %v2383, %v2376
  %v2993 = vpack.c.b16 %v2384, %v2377
  %v2994 = vpack.c.b16 %v2385, %v2378
  %v2995 = vpack.c.b16 %v2386, %v2379
  %v2996 = vpack.c.b16 %v2387, %v2380
  %v2997 = vpack.c.b16 %v2388, %v2381
  %v2998 = vpack.c.b16 %v2396, %v2389
  %v2999 = vpack.c.b16 %v2397, %v2390
  %v3000 = vpack.c.b16 %v2398, %v2391
  %v3001 = vpack.c.b16 %v2399, %v2392
  %v3002 = vpack.c.b16 %v2400, %v2393
  %v3003 = vpack.c.b16 %v2401, %v2394
  %v3004 = vpack.c.b16 %v2402, %v2395
  %v3005 = vpack.c.b16 %v2410, %v2403
  %v3006 = vpack.c.b16 %v2411, %v2404
  %v3007 = vpack.c.b16 %v2412, %v2405
  %v3008 = vpack.c.b16 %v2413, %v2406
  %v3009 = vpack.c.b16 %v2414, %v2407
  %v3010 = vpack.c.b16 %v2415, %v2408
  %v3011 = vpack.c.b16 %v2416, %v2409
  %v3012 = vpack.c.b16 %v2424, %v2417
  %v3013 = vpack.c.b16 %v2425, %v2418
  %v3014 = vpack.c.b16 %v2426, %v2419
  %v3015 = vpack.c.b16 %v2427, %v2420
  %v3016 = vpack.c.b16 %v2428, %v2421
  %v3017 = vpack.c.b16 %v2429, %v2422
  %v3018 = vpack.c.b16 %v2430, %v2423
  %v3019 = vpack.c.b16 %v2438, %v2431
  %v3020 = vpack.c.b16 %v2439, %v2432
  %v3021 = vpack.c.b16 %v2440, %v2433
  %v3022 = vpack.c.b16 %v2441, %v2434
  %v3023 = vpack.c.b16 %v2442, %v2435
  %v3024 = vpack.c.b16 %v2443, %v2436
  %v3025 = vpack.c.b16 %v2444, %v2437
  %v3026 = vpack.c.b16 %v2452, %v2445
  %v3027 = vpack.c.b16 %v2453, %v2446
  %v3028 = vpack.c.b16 %v2454, %v2447
  %v3029 = vpack.c.b16 %v2455, %v2448
  %v3030 = vpack.c.b16 %v2456, %v2449
  %v3031 = vpack.c.b16 %v2457, %v2450
  %v3032 = vpack.c.b16 %v2458, %v2451
  %v3033 = vpack.c.b16 %v2466, %v2459
  %v3034 = vpack.c.b16 %v2467, %v2460
  %v3035 = vpack.c.b16 %v2468, %v2461
  %v3036 = vpack.c.b16 %v2469, %v2462
  %v3037 = vpack.c.b16 %v2470, %v2463
  %v3038 = vpack.c.b16 %v2471, %v2464
  %v3039 = vpack.c.b16 %v2472, %v2465
  %v3040 = vpack.c.b16 %v2480, %v2473
  %v3041 = vpack.c.b16 %v2481, %v2474
  %v3042 = vpack.c.b16 %v2482, %v2475
  %v3043 = vpack.c.b16 %v2483, %v2476
  %v3044 = vpack.c.b16 %v2484, %v2477
  %v3045 = vpack.c.b16 %v2485, %v2478
  %v3046 = vpack.c.b16 %v2486, %v2479
  %v3047 = vpack.c.b16 %v2494, %v2487
  %v3048 = vpack.c.b16 %v2495, %v2488
  %v3049 = vpack.c.b16 %v2496, %v2489
  %v3050 = vpack.c.b16 %v2497, %v2490
  %v3051 = vpack.c.b16 %v2498, %v2491
  %v3052 = vpack.c.b16 %v2499, %v2492
  %v3053 = vpack.c.b16 %v2500, %v2493
  %v3054 = vpack.c.b16 %v2508, %v2501
  %v3055 = vpack.c.b16 %v2509, %v2502
  %v3056 = vpack.c.b16 %v2510, %v2503
  %v3057 = vpack.c.b16 %v2511, %v2504
  %v3058 = vpack.c.b16 %v2512, %v2505
  %v3059 = vpack.c.b16 %v2513, %v2506
  %v3060 = vpack.c.b16 %v2514, %v2507
  %v3061 = vpack.c.b16 %v2522, %v2515
  %v3062 = vpack.c.b16 %v2523, %v2516
  %v3063 = vpack.c.b16 %v2524, %v2517
  %v3064 = vpack.c.b16 %v2525, %v2518
  %v3065 = vpack.c.b16 %v2526, %v2519
  %v3066 = vpack.c.b16 %v2527, %v2520
  %v3067 = vpack.c.b16 %v2528, %v2521
  %v3068 = vpack.c.b16 %v2536, %v2529
  %v3069 = vpack.c.b16 %v2537, %v2530
  %v3070 = vpack.c.b16 %v2538, %v2531
  %v3071 = vpack.c.b16 %v2539, %v2532
  %v3072 = vpack.c.b16 %v2540, %v2533
  %v3073 = vpack.c.b16 %v2541, %v2534
  %v3074 = vpack.c.b16 %v2542, %v2535
  %v3075 = vpack.c.b16 %v2550, %v2543
  %v3076 = vpack.c.b16 %v2551, %v2544
  %v3077 = vpack.c.b16 %v2552, %v2545
  %v3078 = vpack.c.b16 %v2553, %v2546
  %v3079 = vpack.c.b16 %v2554, %v2547
  %v3080 = vpack.c.b16 %v2555, %v2548
  %v3081 = vpack.c.b16 %v2556, %v2549
  %v3082 = vpack.c.b16 %v2564, %v2557
  %v3083 = vpack.c.b16 %v2565, %v2558
  %v3084 = vpack.c.b16 %v2566, %v2559
  %v3085 = vpack.c.b16 %v2567, %v2560
  %v3086 = vpack.c.b16 %v2568, %v2561
  %v3087 = vpack.c.b16 %v2569, %v2562
  %v3088 = vpack.c.b16 %v2570, %v2563
  %v3089 = vpack.c.b16 %v2578, %v2571
  %v3090 = vpack.c.b16 %v2579, %v2572
  %v3091 = vpack.c.b16 %v2580, %v2573
  %v3092 = vpack.c.b16 %v2581, %v2574
  %v3093 = vpack.c.b16 %v2582, %v2575
  %v3094 = vpack.c.b16 %v2583, %v2576
  %v3095 = vpack.c.b16 %v2584, %v2577
  %v3096 = vpack.c.b16 %v2592, %v2585
  %v3097 = vpack.c.b16 %v2593, %v2586
  %v3098 = vpack.c.b16 %v2594, %v2587
  %v3099 = vpack.c.b16 %v2595, %v2588
  %v3100 = vpack.c.b16 %v2596, %v2589
  %v3101 = vpack.c.b16 %v2597, %v2590
  %v3102 = vpack.c.b16 %v2598, %v2591
  %v3103 = vpack.c.b16 %v2606, %v2599
  %v3104 = vpack.c.b16 %v2607, %v2600
  %v3105 = vpack.c.b16 %v2608, %v2601
  %v3106 = vpack.c.b16 %v2609, %v2602
  %v3107 = vpack.c.b16 %v2610, %v2603
  %v3108 = vpack.c.b16 %v2611, %v2604
  %v3109 = vpack.c.b16 %v2612, %v2605
  %v3110 = vpack.c.b16 %v2620, %v2613
  %v3111 = vpack.c.b16 %v2621, %v2614
  %v3112 = vpack.c.b16 %v2622, %v2615
  %v3113 = vpack.c.b16 %v2623, %v2616
  %v3114 = vpack.c.b16 %v2624, %v2617
  %v3115 = vpack.c.b16 %v2625, %v2618
  %v3116 = vpack.c.b16 %v2626, %v2619
  %v3117 = vpack.c.b16 %v2634, %v2627
  %v3118 = vpack.c.b16 %v2635, %v2628
  %v3119 = vpack.c.b16 %v2636, %v2629
  %v3120 = vpack.c.b16 %v2637, %v2630
  %v3121 = vpack.c.b16 %v2638, %v2631
  %v3122 = vpack.c.b16 %v2639, %v2632
  %v3123 = vpack.c.b16 %v2640, %v2633
  %v3124 = vpack.c.b16 %v2648, %v2641
  %v3125 = vpack.c.b16 %v2649, %v2642
  %v3126 = vpack.c.b16 %v2650, %v2643
  %v3127 = vpack.c.b16 %v2651, %v2644
  %v3128 = vpack.c.b16 %v2652, %v2645
  %v3129 = vpack.c.b16 %v2653, %v2646
  %v3130 = vpack.c.b16 %v2654, %v2647
  %v3131 = vpack.c.b16 %v2662, %v2655
  %v3132 = vpack.c.b16 %v2663, %v2656
  %v3133 = vpack.c.b16 %v2664, %v2657
  %v3134 = vpack.c.b16 %v2665, %v2658
  %v3135 = vpack.c.b16 %v2666, %v2659
  %v3136 = vpack.c.b16 %v2667, %v2660
  %v3137 = vpack.c.b16 %v2668, %v2661
  %v3138 = vpack.c.b16 %v2676, %v2669
  %v3139 = vpack.c.b16 %v2677, %v2670
  %v3140 = vpack.c.b16 %v2678, %v2671
  %v3141 = vpack.c.b16 %v2679, %v2672
  %v3142 = vpack.c.b16 %v2680, %v2673
  %v3143 = vpack.c.b16 %v2681, %v2674
  %v3144 = vpack.c.b16 %v2682, %v2675
  %v3145 = vpack.c.b16 %v2690, %v2683
  %v3146 = vpack.c.b16 %v2691, %v2684
  %v3147 = vpack.c.b16 %v2692, %v2685
  %v3148 = vpack.c.b16 %v2693, %v2686
  %v3149 = vpack.c.b16 %v2694, %v2687
  %v3150 = vpack.c.b16 %v2695, %v2688
  %v3151 = vpack.c.b16 %v2696, %v2689
  %v3152 = vpack.c.b16 %v2704, %v2697
  %v3153 = vpack.c.b16 %v2705, %v2698
  %v3154 = vpack.c.b16 %v2706, %v2699
  %v3155 = vpack.c.b16 %v2707, %v2700
  %v3156 = vpack.c.b16 %v2708, %v2701
  %v3157 = vpack.c.b16 %v2709, %v2702
  %v3158 = vpack.c.b16 %v2710, %v2703
  %v3159 = vpack.c.b16 %v2718, %v2711
  %v3160 = vpack.c.b16 %v2719, %v2712
  %v3161 = vpack.c.b16 %v2720, %v2713
  %v3162 = vpack.c.b16 %v2721, %v2714
  %v3163 = vpack.c.b16 %v2722, %v2715
  %v3164 = vpack.c.b16 %v2723, %v2716
  %v3165 = vpack.c.b16 %v2724, %v2717
  %v3166 = vpack.c.b16 %v2732, %v2725
  %v3167 = vpack.c.b16 %v2733, %v2726
  %v3168 = vpack.c.b16 %v2734, %v2727
  %v3169 = vpack.c.b16 %v2735, %v2728
  %v3170 = vpack.c.b16 %v2736, %v2729
  %v3171 = vpack.c.b16 %v2737, %v2730
  %v3172 = vpack.c.b16 %v2738, %v2731
  %v3173 = vpack.c.b16 %v2746, %v2739
  %v3174 = vpack.c.b16 %v2747, %v2740
  %v3175 = vpack.c.b16 %v2748, %v2741
  %v3176 = vpack.c.b16 %v2749, %v2742
  %v3177 = vpack.c.b16 %v2750, %v2743
  %v3178 = vpack.c.b16 %v2751, %v2744
  %v3179 = vpack.c.b16 %v2752, %v2745
  %v3180 = vpack.c.b16 %v2760, %v2753
  %v3181 = vpack.c.b16 %v2761, %v2754
  %v3182 = vpack.c.b16 %v2762, %v2755
  %v3183 = vpack.c.b16 %v2763, %v2756
  %v3184 = vpack.c.b16 %v2764, %v2757
  %v3185 = vpack.c.b16 %v2765, %v2758
  %v3186 = vpack.c.b16 %v2766, %v2759
  %v3187 = vpack.c.b16 %v2774, %v2767
  %v3188 = vpack.c.b16 %v2775, %v2768
  %v3189 = vpack.c.b16 %v2776, %v2769
  %v3190 = vpack.c.b16 %v2777, %v2770
  %v3191 = vpack.c.b16 %v2778, %v2771
  %v3192 = vpack.c.b16 %v2779, %v2772
  %v3193 = vpack.c.b16 %v2780, %v2773
  %v3194 = vpack.c.b16 %v2788, %v2781
  %v3195 = vpack.c.b16 %v2789, %v2782
  %v3196 = vpack.c.b16 %v2790, %v2783
  %v3197 = vpack.c.b16 %v2791, %v2784
  %v3198 = vpack.c.b16 %v2792, %v2785
  %v3199 = vpack.c.b16 %v2793, %v2786
  %v3200 = vpack.c.b16 %v2794, %v2787
  %v3201 = vpack.c.b16 %v2802, %v2795
  %v3202 = vpack.c.b16 %v2803, %v2796
  %v3203 = vpack.c.b16 %v2804, %v2797
  %v3204 = vpack.c.b16 %v2805, %v2798
  %v3205 = vpack.c.b16 %v2806, %v2799
  %v3206 = vpack.c.b16 %v2807, %v2800
  %v3207 = vpack.c.b16 %v2808, %v2801
  %v3208 = vpack.c.b16 %v2816, %v2809
  %v3209 = vpack.c.b16 %v2817, %v2810
  %v3210 = vpack.c.b16 %v2818, %v2811
  %v3211 = vpack.c.b16 %v2819, %v2812
  %v3212 = vpack.c.b16 %v2820, %v2813
  %v3213 = vpack.c.b16 %v2821, %v2814
  %v3214 = vpack.c.b16 %v2822, %v2815
  %v3215 = vpack.c.b16 %v2830, %v2823
  %v3216 = vpack.c.b16 %v2831, %v2824
  %v3217 = vpack.c.b16 %v2832, %v2825
  %v3218 = vpack.c.b16 %v2833, %v2826
  %v3219 = vpack.c.b16 %v2834, %v2827
  %v3220 = vpack.c.b16 %v2835, %v2828
  %v3221 = vpack.c.b16 %v2836, %v2829
  %v3222 = vpack.c.b16 %v2844, %v2837
  %v3223 = vpack.c.b16 %v2845, %v2838
  %v3224 = vpack.c.b16 %v2846, %v2839
  %v3225 = vpack.c.b16 %v2847, %v2840
  %v3226 = vpack.c.b16 %v2848, %v2841
  %v3227 = vpack.c.b16 %v2849, %v2842
  %v3228 = vpack.c.b16 %v2850, %v2843
  %v3229 = vpack.c.b16 %v2858, %v2851
  %v3230 = vpack.c.b16 %v2859, %v2852
  %v3231 = vpack.c.b16 %v2860, %v2853
  %v3232 = vpack.c.b16 %v2861, %v2854
  %v3233 = vpack.c.b16 %v2862, %v2855
  %v3234 = vpack.c.b16 %v2863, %v2856
  %v3235 = vpack.c.b16 %v2864, %v2857
  %v3236 = vpack.c.b16 %v2872, %v2865
  %v3237 = vpack.c.b16 %v2873, %v2866
  %v3238 = vpack.c.b16 %v2874, %v2867
  %v3239 = vpack.c.b16 %v2875, %v2868
  %v3240 = vpack.c.b16 %v2876, %v2869
  %v3241 = vpack.c.b16 %v2877, %v2870
  %v3242 = vpack.c.b16 %v2878, %v2871
  %v3243 = vpack.c.b16 %v2886, %v2879
  %v3244 = vpack.c.b16 %v2887, %v2880
  %v3245 = vpack.c.b16 %v2888, %v2881
  %v3246 = vpack.c.b16 %v2889, %v2882
  %v3247 = vpack.c.b16 %v2890, %v2883
  %v3248 = vpack.c.b16 %v2891, %v2884
  %v3249 = vpack.c.b16 %v2892, %v2885
  %v3250 = vpack.c.b16 %v2900, %v2893
  %v3251 = vpack.c.b16 %v2901, %v2894
  %v3252 = vpack.c.b16 %v2902, %v2895
  %v3253 = vpack.c.b16 %v2903, %v2896
  %v3254 = vpack.c.b16 %v2904, %v2897
  %v3255 = vpack.c.b16 %v2905, %v2898
  %v3256 = vpack.c.b16 %v2906, %v2899
  %vm3607 = vcmask 261120
  %v3609 = vsel %vm3607, %v1787, 0
  %3611 = vmatpush.bf16.msra.mxu0 %v2956
  %3612 = vmatpush.bf16.msra.mxu0 %v2949
  %3613 = vmatpush.bf16.msra.mxu0 %v2942
  %3614 = vmatpush.bf16.msra.mxu0 %v2935
  %3615 = vmatpush.bf16.msra.mxu0 %v2928
  %3616 = vmatpush.bf16.msra.mxu0 %v2921
  %3617 = vmatpush.bf16.msra.mxu0 %v2914
  %3618 = vmatpush.bf16.msra.mxu0 %v2907
  %3619 = vmatmul.bf16.gmra.mxu0 %v1781
  %v3620 = vpop.f32.mrf.mxu0
  %v3621 = vadd.f32 %v1793, %v3620
  %v3622 = vpop.f32.mrf.mxu0
  %3623 = vdwg.mxu0
  %3624 = vmatpush.bf16.msra.mxu0 %v3012
  %3625 = vmatpush.bf16.msra.mxu0 %v3005
  %3626 = vmatpush.bf16.msra.mxu0 %v2998
  %3627 = vmatpush.bf16.msra.mxu0 %v2991
  %3628 = vmatpush.bf16.msra.mxu0 %v2984
  %3629 = vmatpush.bf16.msra.mxu0 %v2977
  %3630 = vmatpush.bf16.msra.mxu0 %v2970
  %3631 = vmatpush.bf16.msra.mxu0 %v2963
  %3632 = vmatmul.bf16.gmra.mxu0 %v1782
  %v3633 = vpop.f32.mrf.mxu0
  %v3634 = vadd.f32 %v3621, %v3633
  %v3635 = vpop.f32.mrf.mxu0
  %3636 = vdwg.mxu0
  %3637 = vmatpush.bf16.msra.mxu0 %v3068
  %3638 = vmatpush.bf16.msra.mxu0 %v3061
  %3639 = vmatpush.bf16.msra.mxu0 %v3054
  %3640 = vmatpush.bf16.msra.mxu0 %v3047
  %3641 = vmatpush.bf16.msra.mxu0 %v3040
  %3642 = vmatpush.bf16.msra.mxu0 %v3033
  %3643 = vmatpush.bf16.msra.mxu0 %v3026
  %3644 = vmatpush.bf16.msra.mxu0 %v3019
  %3645 = vmatmul.bf16.gmra.mxu0 %v1783
  %v3646 = vpop.f32.mrf.mxu0
  %v3647 = vadd.f32 %v3634, %v3646
  %v3648 = vpop.f32.mrf.mxu0
  %3649 = vdwg.mxu0
  %3650 = vmatpush.bf16.msra.mxu0 %v3124
  %3651 = vmatpush.bf16.msra.mxu0 %v3117
  %3652 = vmatpush.bf16.msra.mxu0 %v3110
  %3653 = vmatpush.bf16.msra.mxu0 %v3103
  %3654 = vmatpush.bf16.msra.mxu0 %v3096
  %3655 = vmatpush.bf16.msra.mxu0 %v3089
  %3656 = vmatpush.bf16.msra.mxu0 %v3082
  %3657 = vmatpush.bf16.msra.mxu0 %v3075
  %3658 = vmatmul.bf16.gmra.mxu0 %v1784
  %v3659 = vpop.f32.mrf.mxu0
  %v3660 = vadd.f32 %v3647, %v3659
  %v3661 = vpop.f32.mrf.mxu0
  %3662 = vdwg.mxu0
  %3663 = vmatpush.bf16.msra.mxu0 %v3180
  %3664 = vmatpush.bf16.msra.mxu0 %v3173
  %3665 = vmatpush.bf16.msra.mxu0 %v3166
  %3666 = vmatpush.bf16.msra.mxu0 %v3159
  %3667 = vmatpush.bf16.msra.mxu0 %v3152
  %3668 = vmatpush.bf16.msra.mxu0 %v3145
  %3669 = vmatpush.bf16.msra.mxu0 %v3138
  %3670 = vmatpush.bf16.msra.mxu0 %v3131
  %3671 = vmatmul.bf16.gmra.mxu0 %v1785
  %v3672 = vpop.f32.mrf.mxu0
  %v3673 = vadd.f32 %v3660, %v3672
  %v3674 = vpop.f32.mrf.mxu0
  %3675 = vdwg.mxu0
  %3676 = vmatpush.bf16.msra.mxu0 %v3236
  %3677 = vmatpush.bf16.msra.mxu0 %v3229
  %3678 = vmatpush.bf16.msra.mxu0 %v3222
  %3679 = vmatpush.bf16.msra.mxu0 %v3215
  %3680 = vmatpush.bf16.msra.mxu0 %v3208
  %3681 = vmatpush.bf16.msra.mxu0 %v3201
  %3682 = vmatpush.bf16.msra.mxu0 %v3194
  %3683 = vmatpush.bf16.msra.mxu0 %v3187
  %3684 = vmatmul.bf16.gmra.mxu0 %v1786
  %v3685 = vpop.f32.mrf.mxu0
  %v3686 = vadd.f32 %v3673, %v3685
  %v3687 = vpop.f32.mrf.mxu0
  %3688 = vdwg.mxu0
  %3689 = vmatpush.bf16.msra.mxu0 0
  %3690 = vmatpush.bf16.msra.mxu0 0
  %3691 = vmatpush.bf16.msra.mxu0 0
  %3692 = vmatpush.bf16.msra.mxu0 0
  %3693 = vmatpush.bf16.msra.mxu0 0
  %3694 = vmatpush.bf16.msra.mxu0 0
  %3695 = vmatpush.bf16.msra.mxu0 %v3250
  %3696 = vmatpush.bf16.msra.mxu0 %v3243
  %3697 = vmatmul.bf16.gmra.mxu0 %v3609
  %v3698 = vpop.f32.mrf.mxu0
  %v3699 = vadd.f32 %v3686, %v3698
  %v3700 = vpop.f32.mrf.mxu0
  %3701 = vdwg.mxu0
  %3702 = vmatpush.bf16.msra.mxu0 %v2957
  %3703 = vmatpush.bf16.msra.mxu0 %v2950
  %3704 = vmatpush.bf16.msra.mxu0 %v2943
  %3705 = vmatpush.bf16.msra.mxu0 %v2936
  %3706 = vmatpush.bf16.msra.mxu0 %v2929
  %3707 = vmatpush.bf16.msra.mxu0 %v2922
  %3708 = vmatpush.bf16.msra.mxu0 %v2915
  %3709 = vmatpush.bf16.msra.mxu0 %v2908
  %3710 = vmatmul.bf16.gmra.mxu0 %v1781
  %v3711 = vpop.f32.mrf.mxu0
  %v3712 = vadd.f32 %v1794, %v3711
  %v3713 = vpop.f32.mrf.mxu0
  %3714 = vdwg.mxu0
  %3715 = vmatpush.bf16.msra.mxu0 %v3013
  %3716 = vmatpush.bf16.msra.mxu0 %v3006
  %3717 = vmatpush.bf16.msra.mxu0 %v2999
  %3718 = vmatpush.bf16.msra.mxu0 %v2992
  %3719 = vmatpush.bf16.msra.mxu0 %v2985
  %3720 = vmatpush.bf16.msra.mxu0 %v2978
  %3721 = vmatpush.bf16.msra.mxu0 %v2971
  %3722 = vmatpush.bf16.msra.mxu0 %v2964
  %3723 = vmatmul.bf16.gmra.mxu0 %v1782
  %v3724 = vpop.f32.mrf.mxu0
  %v3725 = vadd.f32 %v3712, %v3724
  %v3726 = vpop.f32.mrf.mxu0
  %3727 = vdwg.mxu0
  %3728 = vmatpush.bf16.msra.mxu0 %v3069
  %3729 = vmatpush.bf16.msra.mxu0 %v3062
  %3730 = vmatpush.bf16.msra.mxu0 %v3055
  %3731 = vmatpush.bf16.msra.mxu0 %v3048
  %3732 = vmatpush.bf16.msra.mxu0 %v3041
  %3733 = vmatpush.bf16.msra.mxu0 %v3034
  %3734 = vmatpush.bf16.msra.mxu0 %v3027
  %3735 = vmatpush.bf16.msra.mxu0 %v3020
  %3736 = vmatmul.bf16.gmra.mxu0 %v1783
  %v3737 = vpop.f32.mrf.mxu0
  %v3738 = vadd.f32 %v3725, %v3737
  %v3739 = vpop.f32.mrf.mxu0
  %3740 = vdwg.mxu0
  %3741 = vmatpush.bf16.msra.mxu0 %v3125
  %3742 = vmatpush.bf16.msra.mxu0 %v3118
  %3743 = vmatpush.bf16.msra.mxu0 %v3111
  %3744 = vmatpush.bf16.msra.mxu0 %v3104
  %3745 = vmatpush.bf16.msra.mxu0 %v3097
  %3746 = vmatpush.bf16.msra.mxu0 %v3090
  %3747 = vmatpush.bf16.msra.mxu0 %v3083
  %3748 = vmatpush.bf16.msra.mxu0 %v3076
  %3749 = vmatmul.bf16.gmra.mxu0 %v1784
  %v3750 = vpop.f32.mrf.mxu0
  %v3751 = vadd.f32 %v3738, %v3750
  %v3752 = vpop.f32.mrf.mxu0
  %3753 = vdwg.mxu0
  %3754 = vmatpush.bf16.msra.mxu0 %v3181
  %3755 = vmatpush.bf16.msra.mxu0 %v3174
  %3756 = vmatpush.bf16.msra.mxu0 %v3167
  %3757 = vmatpush.bf16.msra.mxu0 %v3160
  %3758 = vmatpush.bf16.msra.mxu0 %v3153
  %3759 = vmatpush.bf16.msra.mxu0 %v3146
  %3760 = vmatpush.bf16.msra.mxu0 %v3139
  %3761 = vmatpush.bf16.msra.mxu0 %v3132
  %3762 = vmatmul.bf16.gmra.mxu0 %v1785
  %v3763 = vpop.f32.mrf.mxu0
  %v3764 = vadd.f32 %v3751, %v3763
  %v3765 = vpop.f32.mrf.mxu0
  %3766 = vdwg.mxu0
  %3767 = vmatpush.bf16.msra.mxu0 %v3237
  %3768 = vmatpush.bf16.msra.mxu0 %v3230
  %3769 = vmatpush.bf16.msra.mxu0 %v3223
  %3770 = vmatpush.bf16.msra.mxu0 %v3216
  %3771 = vmatpush.bf16.msra.mxu0 %v3209
  %3772 = vmatpush.bf16.msra.mxu0 %v3202
  %3773 = vmatpush.bf16.msra.mxu0 %v3195
  %3774 = vmatpush.bf16.msra.mxu0 %v3188
  %3775 = vmatmul.bf16.gmra.mxu0 %v1786
  %v3776 = vpop.f32.mrf.mxu0
  %v3777 = vadd.f32 %v3764, %v3776
  %v3778 = vpop.f32.mrf.mxu0
  %3779 = vdwg.mxu0
  %3780 = vmatpush.bf16.msra.mxu0 0
  %3781 = vmatpush.bf16.msra.mxu0 0
  %3782 = vmatpush.bf16.msra.mxu0 0
  %3783 = vmatpush.bf16.msra.mxu0 0
  %3784 = vmatpush.bf16.msra.mxu0 0
  %3785 = vmatpush.bf16.msra.mxu0 0
  %3786 = vmatpush.bf16.msra.mxu0 %v3251
  %3787 = vmatpush.bf16.msra.mxu0 %v3244
  %3788 = vmatmul.bf16.gmra.mxu0 %v3609
  %v3789 = vpop.f32.mrf.mxu0
  %v3790 = vadd.f32 %v3777, %v3789
  %v3791 = vpop.f32.mrf.mxu0
  %3792 = vdwg.mxu0
  %3793 = vmatpush.bf16.msra.mxu0 %v2958
  %3794 = vmatpush.bf16.msra.mxu0 %v2951
  %3795 = vmatpush.bf16.msra.mxu0 %v2944
  %3796 = vmatpush.bf16.msra.mxu0 %v2937
  %3797 = vmatpush.bf16.msra.mxu0 %v2930
  %3798 = vmatpush.bf16.msra.mxu0 %v2923
  %3799 = vmatpush.bf16.msra.mxu0 %v2916
  %3800 = vmatpush.bf16.msra.mxu0 %v2909
  %3801 = vmatmul.bf16.gmra.mxu0 %v1781
  %v3802 = vpop.f32.mrf.mxu0
  %v3803 = vadd.f32 %v1795, %v3802
  %v3804 = vpop.f32.mrf.mxu0
  %3805 = vdwg.mxu0
  %3806 = vmatpush.bf16.msra.mxu0 %v3014
  %3807 = vmatpush.bf16.msra.mxu0 %v3007
  %3808 = vmatpush.bf16.msra.mxu0 %v3000
  %3809 = vmatpush.bf16.msra.mxu0 %v2993
  %3810 = vmatpush.bf16.msra.mxu0 %v2986
  %3811 = vmatpush.bf16.msra.mxu0 %v2979
  %3812 = vmatpush.bf16.msra.mxu0 %v2972
  %3813 = vmatpush.bf16.msra.mxu0 %v2965
  %3814 = vmatmul.bf16.gmra.mxu0 %v1782
  %v3815 = vpop.f32.mrf.mxu0
  %v3816 = vadd.f32 %v3803, %v3815
  %v3817 = vpop.f32.mrf.mxu0
  %3818 = vdwg.mxu0
  %3819 = vmatpush.bf16.msra.mxu0 %v3070
  %3820 = vmatpush.bf16.msra.mxu0 %v3063
  %3821 = vmatpush.bf16.msra.mxu0 %v3056
  %3822 = vmatpush.bf16.msra.mxu0 %v3049
  %3823 = vmatpush.bf16.msra.mxu0 %v3042
  %3824 = vmatpush.bf16.msra.mxu0 %v3035
  %3825 = vmatpush.bf16.msra.mxu0 %v3028
  %3826 = vmatpush.bf16.msra.mxu0 %v3021
  %3827 = vmatmul.bf16.gmra.mxu0 %v1783
  %v3828 = vpop.f32.mrf.mxu0
  %v3829 = vadd.f32 %v3816, %v3828
  %v3830 = vpop.f32.mrf.mxu0
  %3831 = vdwg.mxu0
  %3832 = vmatpush.bf16.msra.mxu0 %v3126
  %3833 = vmatpush.bf16.msra.mxu0 %v3119
  %3834 = vmatpush.bf16.msra.mxu0 %v3112
  %3835 = vmatpush.bf16.msra.mxu0 %v3105
  %3836 = vmatpush.bf16.msra.mxu0 %v3098
  %3837 = vmatpush.bf16.msra.mxu0 %v3091
  %3838 = vmatpush.bf16.msra.mxu0 %v3084
  %3839 = vmatpush.bf16.msra.mxu0 %v3077
  %3840 = vmatmul.bf16.gmra.mxu0 %v1784
  %v3841 = vpop.f32.mrf.mxu0
  %v3842 = vadd.f32 %v3829, %v3841
  %v3843 = vpop.f32.mrf.mxu0
  %3844 = vdwg.mxu0
  %3845 = vmatpush.bf16.msra.mxu0 %v3182
  %3846 = vmatpush.bf16.msra.mxu0 %v3175
  %3847 = vmatpush.bf16.msra.mxu0 %v3168
  %3848 = vmatpush.bf16.msra.mxu0 %v3161
  %3849 = vmatpush.bf16.msra.mxu0 %v3154
  %3850 = vmatpush.bf16.msra.mxu0 %v3147
  %3851 = vmatpush.bf16.msra.mxu0 %v3140
  %3852 = vmatpush.bf16.msra.mxu0 %v3133
  %3853 = vmatmul.bf16.gmra.mxu0 %v1785
  %v3854 = vpop.f32.mrf.mxu0
  %v3855 = vadd.f32 %v3842, %v3854
  %v3856 = vpop.f32.mrf.mxu0
  %3857 = vdwg.mxu0
  %3858 = vmatpush.bf16.msra.mxu0 %v3238
  %3859 = vmatpush.bf16.msra.mxu0 %v3231
  %3860 = vmatpush.bf16.msra.mxu0 %v3224
  %3861 = vmatpush.bf16.msra.mxu0 %v3217
  %3862 = vmatpush.bf16.msra.mxu0 %v3210
  %3863 = vmatpush.bf16.msra.mxu0 %v3203
  %3864 = vmatpush.bf16.msra.mxu0 %v3196
  %3865 = vmatpush.bf16.msra.mxu0 %v3189
  %3866 = vmatmul.bf16.gmra.mxu0 %v1786
  %v3867 = vpop.f32.mrf.mxu0
  %v3868 = vadd.f32 %v3855, %v3867
  %v3869 = vpop.f32.mrf.mxu0
  %3870 = vdwg.mxu0
  %3871 = vmatpush.bf16.msra.mxu0 0
  %3872 = vmatpush.bf16.msra.mxu0 0
  %3873 = vmatpush.bf16.msra.mxu0 0
  %3874 = vmatpush.bf16.msra.mxu0 0
  %3875 = vmatpush.bf16.msra.mxu0 0
  %3876 = vmatpush.bf16.msra.mxu0 0
  %3877 = vmatpush.bf16.msra.mxu0 %v3252
  %3878 = vmatpush.bf16.msra.mxu0 %v3245
  %3879 = vmatmul.bf16.gmra.mxu0 %v3609
  %v3880 = vpop.f32.mrf.mxu0
  %v3881 = vadd.f32 %v3868, %v3880
  %v3882 = vpop.f32.mrf.mxu0
  %3883 = vdwg.mxu0
  %3884 = vmatpush.bf16.msra.mxu0 %v2959
  %3885 = vmatpush.bf16.msra.mxu0 %v2952
  %3886 = vmatpush.bf16.msra.mxu0 %v2945
  %3887 = vmatpush.bf16.msra.mxu0 %v2938
  %3888 = vmatpush.bf16.msra.mxu0 %v2931
  %3889 = vmatpush.bf16.msra.mxu0 %v2924
  %3890 = vmatpush.bf16.msra.mxu0 %v2917
  %3891 = vmatpush.bf16.msra.mxu0 %v2910
  %3892 = vmatmul.bf16.gmra.mxu0 %v1781
  %v3893 = vpop.f32.mrf.mxu0
  %v3894 = vadd.f32 %v1796, %v3893
  %v3895 = vpop.f32.mrf.mxu0
  %3896 = vdwg.mxu0
  %3897 = vmatpush.bf16.msra.mxu0 %v3015
  %3898 = vmatpush.bf16.msra.mxu0 %v3008
  %3899 = vmatpush.bf16.msra.mxu0 %v3001
  %3900 = vmatpush.bf16.msra.mxu0 %v2994
  %3901 = vmatpush.bf16.msra.mxu0 %v2987
  %3902 = vmatpush.bf16.msra.mxu0 %v2980
  %3903 = vmatpush.bf16.msra.mxu0 %v2973
  %3904 = vmatpush.bf16.msra.mxu0 %v2966
  %3905 = vmatmul.bf16.gmra.mxu0 %v1782
  %v3906 = vpop.f32.mrf.mxu0
  %v3907 = vadd.f32 %v3894, %v3906
  %v3908 = vpop.f32.mrf.mxu0
  %3909 = vdwg.mxu0
  %3910 = vmatpush.bf16.msra.mxu0 %v3071
  %3911 = vmatpush.bf16.msra.mxu0 %v3064
  %3912 = vmatpush.bf16.msra.mxu0 %v3057
  %3913 = vmatpush.bf16.msra.mxu0 %v3050
  %3914 = vmatpush.bf16.msra.mxu0 %v3043
  %3915 = vmatpush.bf16.msra.mxu0 %v3036
  %3916 = vmatpush.bf16.msra.mxu0 %v3029
  %3917 = vmatpush.bf16.msra.mxu0 %v3022
  %3918 = vmatmul.bf16.gmra.mxu0 %v1783
  %v3919 = vpop.f32.mrf.mxu0
  %v3920 = vadd.f32 %v3907, %v3919
  %v3921 = vpop.f32.mrf.mxu0
  %3922 = vdwg.mxu0
  %3923 = vmatpush.bf16.msra.mxu0 %v3127
  %3924 = vmatpush.bf16.msra.mxu0 %v3120
  %3925 = vmatpush.bf16.msra.mxu0 %v3113
  %3926 = vmatpush.bf16.msra.mxu0 %v3106
  %3927 = vmatpush.bf16.msra.mxu0 %v3099
  %3928 = vmatpush.bf16.msra.mxu0 %v3092
  %3929 = vmatpush.bf16.msra.mxu0 %v3085
  %3930 = vmatpush.bf16.msra.mxu0 %v3078
  %3931 = vmatmul.bf16.gmra.mxu0 %v1784
  %v3932 = vpop.f32.mrf.mxu0
  %v3933 = vadd.f32 %v3920, %v3932
  %v3934 = vpop.f32.mrf.mxu0
  %3935 = vdwg.mxu0
  %3936 = vmatpush.bf16.msra.mxu0 %v3183
  %3937 = vmatpush.bf16.msra.mxu0 %v3176
  %3938 = vmatpush.bf16.msra.mxu0 %v3169
  %3939 = vmatpush.bf16.msra.mxu0 %v3162
  %3940 = vmatpush.bf16.msra.mxu0 %v3155
  %3941 = vmatpush.bf16.msra.mxu0 %v3148
  %3942 = vmatpush.bf16.msra.mxu0 %v3141
  %3943 = vmatpush.bf16.msra.mxu0 %v3134
  %3944 = vmatmul.bf16.gmra.mxu0 %v1785
  %v3945 = vpop.f32.mrf.mxu0
  %v3946 = vadd.f32 %v3933, %v3945
  %v3947 = vpop.f32.mrf.mxu0
  %3948 = vdwg.mxu0
  %3949 = vmatpush.bf16.msra.mxu0 %v3239
  %3950 = vmatpush.bf16.msra.mxu0 %v3232
  %3951 = vmatpush.bf16.msra.mxu0 %v3225
  %3952 = vmatpush.bf16.msra.mxu0 %v3218
  %3953 = vmatpush.bf16.msra.mxu0 %v3211
  %3954 = vmatpush.bf16.msra.mxu0 %v3204
  %3955 = vmatpush.bf16.msra.mxu0 %v3197
  %3956 = vmatpush.bf16.msra.mxu0 %v3190
  %3957 = vmatmul.bf16.gmra.mxu0 %v1786
  %v3958 = vpop.f32.mrf.mxu0
  %v3959 = vadd.f32 %v3946, %v3958
  %v3960 = vpop.f32.mrf.mxu0
  %3961 = vdwg.mxu0
  %3962 = vmatpush.bf16.msra.mxu0 0
  %3963 = vmatpush.bf16.msra.mxu0 0
  %3964 = vmatpush.bf16.msra.mxu0 0
  %3965 = vmatpush.bf16.msra.mxu0 0
  %3966 = vmatpush.bf16.msra.mxu0 0
  %3967 = vmatpush.bf16.msra.mxu0 0
  %3968 = vmatpush.bf16.msra.mxu0 %v3253
  %3969 = vmatpush.bf16.msra.mxu0 %v3246
  %3970 = vmatmul.bf16.gmra.mxu0 %v3609
  %v3971 = vpop.f32.mrf.mxu0
  %v3972 = vadd.f32 %v3959, %v3971
  %v3973 = vpop.f32.mrf.mxu0
  %3974 = vdwg.mxu0
  %3975 = vmatpush.bf16.msra.mxu0 %v2960
  %3976 = vmatpush.bf16.msra.mxu0 %v2953
  %3977 = vmatpush.bf16.msra.mxu0 %v2946
  %3978 = vmatpush.bf16.msra.mxu0 %v2939
  %3979 = vmatpush.bf16.msra.mxu0 %v2932
  %3980 = vmatpush.bf16.msra.mxu0 %v2925
  %3981 = vmatpush.bf16.msra.mxu0 %v2918
  %3982 = vmatpush.bf16.msra.mxu0 %v2911
  %3983 = vmatmul.bf16.gmra.mxu0 %v1781
  %v3984 = vpop.f32.mrf.mxu0
  %v3985 = vadd.f32 %v1797, %v3984
  %v3986 = vpop.f32.mrf.mxu0
  %3987 = vdwg.mxu0
  %3988 = vmatpush.bf16.msra.mxu0 %v3016
  %3989 = vmatpush.bf16.msra.mxu0 %v3009
  %3990 = vmatpush.bf16.msra.mxu0 %v3002
  %3991 = vmatpush.bf16.msra.mxu0 %v2995
  %3992 = vmatpush.bf16.msra.mxu0 %v2988
  %3993 = vmatpush.bf16.msra.mxu0 %v2981
  %3994 = vmatpush.bf16.msra.mxu0 %v2974
  %3995 = vmatpush.bf16.msra.mxu0 %v2967
  %3996 = vmatmul.bf16.gmra.mxu0 %v1782
  %v3997 = vpop.f32.mrf.mxu0
  %v3998 = vadd.f32 %v3985, %v3997
  %v3999 = vpop.f32.mrf.mxu0
  %4000 = vdwg.mxu0
  %4001 = vmatpush.bf16.msra.mxu0 %v3072
  %4002 = vmatpush.bf16.msra.mxu0 %v3065
  %4003 = vmatpush.bf16.msra.mxu0 %v3058
  %4004 = vmatpush.bf16.msra.mxu0 %v3051
  %4005 = vmatpush.bf16.msra.mxu0 %v3044
  %4006 = vmatpush.bf16.msra.mxu0 %v3037
  %4007 = vmatpush.bf16.msra.mxu0 %v3030
  %4008 = vmatpush.bf16.msra.mxu0 %v3023
  %4009 = vmatmul.bf16.gmra.mxu0 %v1783
  %v4010 = vpop.f32.mrf.mxu0
  %v4011 = vadd.f32 %v3998, %v4010
  %v4012 = vpop.f32.mrf.mxu0
  %4013 = vdwg.mxu0
  %4014 = vmatpush.bf16.msra.mxu0 %v3128
  %4015 = vmatpush.bf16.msra.mxu0 %v3121
  %4016 = vmatpush.bf16.msra.mxu0 %v3114
  %4017 = vmatpush.bf16.msra.mxu0 %v3107
  %4018 = vmatpush.bf16.msra.mxu0 %v3100
  %4019 = vmatpush.bf16.msra.mxu0 %v3093
  %4020 = vmatpush.bf16.msra.mxu0 %v3086
  %4021 = vmatpush.bf16.msra.mxu0 %v3079
  %4022 = vmatmul.bf16.gmra.mxu0 %v1784
  %v4023 = vpop.f32.mrf.mxu0
  %v4024 = vadd.f32 %v4011, %v4023
  %v4025 = vpop.f32.mrf.mxu0
  %4026 = vdwg.mxu0
  %4027 = vmatpush.bf16.msra.mxu0 %v3184
  %4028 = vmatpush.bf16.msra.mxu0 %v3177
  %4029 = vmatpush.bf16.msra.mxu0 %v3170
  %4030 = vmatpush.bf16.msra.mxu0 %v3163
  %4031 = vmatpush.bf16.msra.mxu0 %v3156
  %4032 = vmatpush.bf16.msra.mxu0 %v3149
  %4033 = vmatpush.bf16.msra.mxu0 %v3142
  %4034 = vmatpush.bf16.msra.mxu0 %v3135
  %4035 = vmatmul.bf16.gmra.mxu0 %v1785
  %v4036 = vpop.f32.mrf.mxu0
  %v4037 = vadd.f32 %v4024, %v4036
  %v4038 = vpop.f32.mrf.mxu0
  %4039 = vdwg.mxu0
  %4040 = vmatpush.bf16.msra.mxu0 %v3240
  %4041 = vmatpush.bf16.msra.mxu0 %v3233
  %4042 = vmatpush.bf16.msra.mxu0 %v3226
  %4043 = vmatpush.bf16.msra.mxu0 %v3219
  %4044 = vmatpush.bf16.msra.mxu0 %v3212
  %4045 = vmatpush.bf16.msra.mxu0 %v3205
  %4046 = vmatpush.bf16.msra.mxu0 %v3198
  %4047 = vmatpush.bf16.msra.mxu0 %v3191
  %4048 = vmatmul.bf16.gmra.mxu0 %v1786
  %v4049 = vpop.f32.mrf.mxu0
  %v4050 = vadd.f32 %v4037, %v4049
  %v4051 = vpop.f32.mrf.mxu0
  %4052 = vdwg.mxu0
  %4053 = vmatpush.bf16.msra.mxu0 0
  %4054 = vmatpush.bf16.msra.mxu0 0
  %4055 = vmatpush.bf16.msra.mxu0 0
  %4056 = vmatpush.bf16.msra.mxu0 0
  %4057 = vmatpush.bf16.msra.mxu0 0
  %4058 = vmatpush.bf16.msra.mxu0 0
  %4059 = vmatpush.bf16.msra.mxu0 %v3254
  %4060 = vmatpush.bf16.msra.mxu0 %v3247
  %4061 = vmatmul.bf16.gmra.mxu0 %v3609
  %v4062 = vpop.f32.mrf.mxu0
  %v4063 = vadd.f32 %v4050, %v4062
  %v4064 = vpop.f32.mrf.mxu0
  %4065 = vdwg.mxu0
  %4066 = vmatpush.bf16.msra.mxu0 %v2961
  %4067 = vmatpush.bf16.msra.mxu0 %v2954
  %4068 = vmatpush.bf16.msra.mxu0 %v2947
  %4069 = vmatpush.bf16.msra.mxu0 %v2940
  %4070 = vmatpush.bf16.msra.mxu0 %v2933
  %4071 = vmatpush.bf16.msra.mxu0 %v2926
  %4072 = vmatpush.bf16.msra.mxu0 %v2919
  %4073 = vmatpush.bf16.msra.mxu0 %v2912
  %4074 = vmatmul.bf16.gmra.mxu0 %v1781
  %v4075 = vpop.f32.mrf.mxu0
  %v4076 = vadd.f32 %v1798, %v4075
  %v4077 = vpop.f32.mrf.mxu0
  %4078 = vdwg.mxu0
  %4079 = vmatpush.bf16.msra.mxu0 %v3017
  %4080 = vmatpush.bf16.msra.mxu0 %v3010
  %4081 = vmatpush.bf16.msra.mxu0 %v3003
  %4082 = vmatpush.bf16.msra.mxu0 %v2996
  %4083 = vmatpush.bf16.msra.mxu0 %v2989
  %4084 = vmatpush.bf16.msra.mxu0 %v2982
  %4085 = vmatpush.bf16.msra.mxu0 %v2975
  %4086 = vmatpush.bf16.msra.mxu0 %v2968
  %4087 = vmatmul.bf16.gmra.mxu0 %v1782
  %v4088 = vpop.f32.mrf.mxu0
  %v4089 = vadd.f32 %v4076, %v4088
  %v4090 = vpop.f32.mrf.mxu0
  %4091 = vdwg.mxu0
  %4092 = vmatpush.bf16.msra.mxu0 %v3073
  %4093 = vmatpush.bf16.msra.mxu0 %v3066
  %4094 = vmatpush.bf16.msra.mxu0 %v3059
  %4095 = vmatpush.bf16.msra.mxu0 %v3052
  %4096 = vmatpush.bf16.msra.mxu0 %v3045
  %4097 = vmatpush.bf16.msra.mxu0 %v3038
  %4098 = vmatpush.bf16.msra.mxu0 %v3031
  %4099 = vmatpush.bf16.msra.mxu0 %v3024
  %4100 = vmatmul.bf16.gmra.mxu0 %v1783
  %v4101 = vpop.f32.mrf.mxu0
  %v4102 = vadd.f32 %v4089, %v4101
  %v4103 = vpop.f32.mrf.mxu0
  %4104 = vdwg.mxu0
  %4105 = vmatpush.bf16.msra.mxu0 %v3129
  %4106 = vmatpush.bf16.msra.mxu0 %v3122
  %4107 = vmatpush.bf16.msra.mxu0 %v3115
  %4108 = vmatpush.bf16.msra.mxu0 %v3108
  %4109 = vmatpush.bf16.msra.mxu0 %v3101
  %4110 = vmatpush.bf16.msra.mxu0 %v3094
  %4111 = vmatpush.bf16.msra.mxu0 %v3087
  %4112 = vmatpush.bf16.msra.mxu0 %v3080
  %4113 = vmatmul.bf16.gmra.mxu0 %v1784
  %v4114 = vpop.f32.mrf.mxu0
  %v4115 = vadd.f32 %v4102, %v4114
  %v4116 = vpop.f32.mrf.mxu0
  %4117 = vdwg.mxu0
  %4118 = vmatpush.bf16.msra.mxu0 %v3185
  %4119 = vmatpush.bf16.msra.mxu0 %v3178
  %4120 = vmatpush.bf16.msra.mxu0 %v3171
  %4121 = vmatpush.bf16.msra.mxu0 %v3164
  %4122 = vmatpush.bf16.msra.mxu0 %v3157
  %4123 = vmatpush.bf16.msra.mxu0 %v3150
  %4124 = vmatpush.bf16.msra.mxu0 %v3143
  %4125 = vmatpush.bf16.msra.mxu0 %v3136
  %4126 = vmatmul.bf16.gmra.mxu0 %v1785
  %v4127 = vpop.f32.mrf.mxu0
  %v4128 = vadd.f32 %v4115, %v4127
  %v4129 = vpop.f32.mrf.mxu0
  %4130 = vdwg.mxu0
  %4131 = vmatpush.bf16.msra.mxu0 %v3241
  %4132 = vmatpush.bf16.msra.mxu0 %v3234
  %4133 = vmatpush.bf16.msra.mxu0 %v3227
  %4134 = vmatpush.bf16.msra.mxu0 %v3220
  %4135 = vmatpush.bf16.msra.mxu0 %v3213
  %4136 = vmatpush.bf16.msra.mxu0 %v3206
  %4137 = vmatpush.bf16.msra.mxu0 %v3199
  %4138 = vmatpush.bf16.msra.mxu0 %v3192
  %4139 = vmatmul.bf16.gmra.mxu0 %v1786
  %v4140 = vpop.f32.mrf.mxu0
  %v4141 = vadd.f32 %v4128, %v4140
  %v4142 = vpop.f32.mrf.mxu0
  %4143 = vdwg.mxu0
  %4144 = vmatpush.bf16.msra.mxu0 0
  %4145 = vmatpush.bf16.msra.mxu0 0
  %4146 = vmatpush.bf16.msra.mxu0 0
  %4147 = vmatpush.bf16.msra.mxu0 0
  %4148 = vmatpush.bf16.msra.mxu0 0
  %4149 = vmatpush.bf16.msra.mxu0 0
  %4150 = vmatpush.bf16.msra.mxu0 %v3255
  %4151 = vmatpush.bf16.msra.mxu0 %v3248
  %4152 = vmatmul.bf16.gmra.mxu0 %v3609
  %v4153 = vpop.f32.mrf.mxu0
  %v4154 = vadd.f32 %v4141, %v4153
  %v4155 = vpop.f32.mrf.mxu0
  %4156 = vdwg.mxu0
  %4157 = vmatpush.bf16.msra.mxu0 %v2962
  %4158 = vmatpush.bf16.msra.mxu0 %v2955
  %4159 = vmatpush.bf16.msra.mxu0 %v2948
  %4160 = vmatpush.bf16.msra.mxu0 %v2941
  %4161 = vmatpush.bf16.msra.mxu0 %v2934
  %4162 = vmatpush.bf16.msra.mxu0 %v2927
  %4163 = vmatpush.bf16.msra.mxu0 %v2920
  %4164 = vmatpush.bf16.msra.mxu0 %v2913
  %4165 = vmatmul.bf16.gmra.mxu0 %v1781
  %v4166 = vpop.f32.mrf.mxu0
  %v4167 = vadd.f32 %v1799, %v4166
  %v4168 = vpop.f32.mrf.mxu0
  %4169 = vdwg.mxu0
  %4170 = vmatpush.bf16.msra.mxu0 %v3018
  %4171 = vmatpush.bf16.msra.mxu0 %v3011
  %4172 = vmatpush.bf16.msra.mxu0 %v3004
  %4173 = vmatpush.bf16.msra.mxu0 %v2997
  %4174 = vmatpush.bf16.msra.mxu0 %v2990
  %4175 = vmatpush.bf16.msra.mxu0 %v2983
  %4176 = vmatpush.bf16.msra.mxu0 %v2976
  %4177 = vmatpush.bf16.msra.mxu0 %v2969
  %4178 = vmatmul.bf16.gmra.mxu0 %v1782
  %v4179 = vpop.f32.mrf.mxu0
  %v4180 = vadd.f32 %v4167, %v4179
  %v4181 = vpop.f32.mrf.mxu0
  %4182 = vdwg.mxu0
  %4183 = vmatpush.bf16.msra.mxu0 %v3074
  %4184 = vmatpush.bf16.msra.mxu0 %v3067
  %4185 = vmatpush.bf16.msra.mxu0 %v3060
  %4186 = vmatpush.bf16.msra.mxu0 %v3053
  %4187 = vmatpush.bf16.msra.mxu0 %v3046
  %4188 = vmatpush.bf16.msra.mxu0 %v3039
  %4189 = vmatpush.bf16.msra.mxu0 %v3032
  %4190 = vmatpush.bf16.msra.mxu0 %v3025
  %4191 = vmatmul.bf16.gmra.mxu0 %v1783
  %v4192 = vpop.f32.mrf.mxu0
  %v4193 = vadd.f32 %v4180, %v4192
  %v4194 = vpop.f32.mrf.mxu0
  %4195 = vdwg.mxu0
  %4196 = vmatpush.bf16.msra.mxu0 %v3130
  %4197 = vmatpush.bf16.msra.mxu0 %v3123
  %4198 = vmatpush.bf16.msra.mxu0 %v3116
  %4199 = vmatpush.bf16.msra.mxu0 %v3109
  %4200 = vmatpush.bf16.msra.mxu0 %v3102
  %4201 = vmatpush.bf16.msra.mxu0 %v3095
  %4202 = vmatpush.bf16.msra.mxu0 %v3088
  %4203 = vmatpush.bf16.msra.mxu0 %v3081
  %4204 = vmatmul.bf16.gmra.mxu0 %v1784
  %v4205 = vpop.f32.mrf.mxu0
  %v4206 = vadd.f32 %v4193, %v4205
  %v4207 = vpop.f32.mrf.mxu0
  %4208 = vdwg.mxu0
  %4209 = vmatpush.bf16.msra.mxu0 %v3186
  %4210 = vmatpush.bf16.msra.mxu0 %v3179
  %4211 = vmatpush.bf16.msra.mxu0 %v3172
  %4212 = vmatpush.bf16.msra.mxu0 %v3165
  %4213 = vmatpush.bf16.msra.mxu0 %v3158
  %4214 = vmatpush.bf16.msra.mxu0 %v3151
  %4215 = vmatpush.bf16.msra.mxu0 %v3144
  %4216 = vmatpush.bf16.msra.mxu0 %v3137
  %4217 = vmatmul.bf16.gmra.mxu0 %v1785
  %v4218 = vpop.f32.mrf.mxu0
  %v4219 = vadd.f32 %v4206, %v4218
  %v4220 = vpop.f32.mrf.mxu0
  %4221 = vdwg.mxu0
  %4222 = vmatpush.bf16.msra.mxu0 %v3242
  %4223 = vmatpush.bf16.msra.mxu0 %v3235
  %4224 = vmatpush.bf16.msra.mxu0 %v3228
  %4225 = vmatpush.bf16.msra.mxu0 %v3221
  %4226 = vmatpush.bf16.msra.mxu0 %v3214
  %4227 = vmatpush.bf16.msra.mxu0 %v3207
  %4228 = vmatpush.bf16.msra.mxu0 %v3200
  %4229 = vmatpush.bf16.msra.mxu0 %v3193
  %4230 = vmatmul.bf16.gmra.mxu0 %v1786
  %v4231 = vpop.f32.mrf.mxu0
  %v4232 = vadd.f32 %v4219, %v4231
  %v4233 = vpop.f32.mrf.mxu0
  %4234 = vdwg.mxu0
  %4235 = vmatpush.bf16.msra.mxu0 0
  %4236 = vmatpush.bf16.msra.mxu0 0
  %4237 = vmatpush.bf16.msra.mxu0 0
  %4238 = vmatpush.bf16.msra.mxu0 0
  %4239 = vmatpush.bf16.msra.mxu0 0
  %4240 = vmatpush.bf16.msra.mxu0 0
  %4241 = vmatpush.bf16.msra.mxu0 %v3256
  %4242 = vmatpush.bf16.msra.mxu0 %v3249
  %4243 = vmatmul.bf16.gmra.mxu0 %v3609
  %v4244 = vpop.f32.mrf.mxu0
  %v4245 = vadd.f32 %v4232, %v4244
  %v4246 = vpop.f32.mrf.mxu0
  %4247 = vdwg.mxu0
  %v4248 = vmax.f32 %v3699, 0.0
  %v4249 = vmax.f32 %v3790, 0.0
  %v4250 = vmax.f32 %v3881, 0.0
  %v4251 = vmax.f32 %v3972, 0.0
  %v4252 = vmax.f32 %v4063, 0.0
  %v4253 = vmax.f32 %v4154, 0.0
  %v4254 = vmax.f32 %v4245, 0.0
  %v4255 = vld [vmem:[%s2] sm:$0xff]
  %v4256 = vld [vmem:[%s2 + $0x8] sm:$0xff]
  %v4257 = vld [vmem:[%s2 + $0x10] sm:$0xff]
  %v4258 = vld [vmem:[%s2 + $0x18] sm:$0xff]
  %v4259 = vld [vmem:[%s2 + $0x20] sm:$0xff]
  %v4260 = vld [vmem:[%s2 + $0x28] sm:$0xff]
  %v4261 = vld [vmem:[%s2 + $0x30] sm:$0xff]
  %v4262 = vld [vmem:[%s2 + $0x38] sm:$0xff]
  %v4263 = vld [vmem:[%s2 + $0x40] sm:$0xff]
  %v4264 = vld [vmem:[%s2 + $0x48] sm:$0xff]
  %v4265 = vld [vmem:[%s2 + $0x50] sm:$0xff]
  %v4266 = vld [vmem:[%s2 + $0x58] sm:$0xff]
  %v4267 = vld [vmem:[%s2 + $0x60] sm:$0xff]
  %v4268 = vld [vmem:[%s2 + $0x68] sm:$0xff]
  %v4269 = vld [vmem:[%s2 + $0x70] sm:$0xff]
  %v4270 = vld [vmem:[%s2 + $0x78] sm:$0xff]
  %v4271 = vld [vmem:[%s2 + $0x80] sm:$0xff]
  %v4272 = vld [vmem:[%s2 + $0x88] sm:$0xff]
  %v4273 = vld [vmem:[%s2 + $0x90] sm:$0xff]
  %v4274 = vld [vmem:[%s2 + $0x98] sm:$0xff]
  %v4275 = vld [vmem:[%s2 + $0xa0] sm:$0xff]
  %v4276 = vld [vmem:[%s2 + $0xa8] sm:$0xff]
  %v4277 = vld [vmem:[%s2 + $0xb0] sm:$0xff]
  %v4278 = vld [vmem:[%s2 + $0xb8] sm:$0xff]
  %v4279 = vld [vmem:[%s2 + $0xc0] sm:$0xff]
  %v4280 = vld [vmem:[%s2 + $0xc8] sm:$0xff]
  %v4281 = vld [vmem:[%s2 + $0xd0] sm:$0xff]
  %v4282 = vld [vmem:[%s2 + $0xd8] sm:$0xff]
  %v4283 = vld [vmem:[%s2 + $0xe0] sm:$0xff]
  %v4284 = vld [vmem:[%s2 + $0xe8] sm:$0xff]
  %v4285 = vld [vmem:[%s2 + $0xf0] sm:$0xff]
  %v4286 = vld [vmem:[%s2 + $0xf8] sm:$0xff]
  %v4287 = vld [vmem:[%s2 + $0x100] sm:$0xff]
  %v4288 = vld [vmem:[%s2 + $0x108] sm:$0xff]
  %v4289 = vld [vmem:[%s2 + $0x110] sm:$0xff]
  %v4290 = vld [vmem:[%s2 + $0x118] sm:$0xff]
  %v4291 = vld [vmem:[%s2 + $0x120] sm:$0xff]
  %v4292 = vld [vmem:[%s2 + $0x128] sm:$0xff]
  %v4293 = vld [vmem:[%s2 + $0x130] sm:$0xff]
  %v4294 = vld [vmem:[%s2 + $0x138] sm:$0xff]
  %v4295 = vld [vmem:[%s2 + $0x140] sm:$0xff]
  %v4296 = vld [vmem:[%s2 + $0x148] sm:$0xff]
  %v4297 = vld [vmem:[%s2 + $0x150] sm:$0xff]
  %v4298 = vld [vmem:[%s2 + $0x158] sm:$0xff]
  %v4299 = vld [vmem:[%s2 + $0x160] sm:$0xff]
  %v4300 = vld [vmem:[%s2 + $0x168] sm:$0xff]
  %v4301 = vld [vmem:[%s2 + $0x170] sm:$0xff]
  %v4302 = vld [vmem:[%s2 + $0x178] sm:$0xff]
  %v4303 = vld [vmem:[%s2 + $0x180] sm:$0xff]
  %v4304 = vld [vmem:[%s2 + $0x188] sm:$0xff]
  %v4305 = vld [vmem:[%s2 + $0x190] sm:$0xff]
  %v4306 = vld [vmem:[%s2 + $0x198] sm:$0xff]
  %v4307 = vld [vmem:[%s2 + $0x1a0] sm:$0xff]
  %v4308 = vld [vmem:[%s2 + $0x1a8] sm:$0xff]
  %v4309 = vld [vmem:[%s2 + $0x1b0] sm:$0xff]
  %v4310 = vld [vmem:[%s2 + $0x1b8] sm:$0xff]
  %v4311 = vld [vmem:[%s2 + $0x1c0] sm:$0xff]
  %v4312 = vld [vmem:[%s2 + $0x1c8] sm:$0xff]
  %v4313 = vld [vmem:[%s2 + $0x1d0] sm:$0xff]
  %v4314 = vld [vmem:[%s2 + $0x1d8] sm:$0xff]
  %v4315 = vld [vmem:[%s2 + $0x1e0] sm:$0xff]
  %v4316 = vld [vmem:[%s2 + $0x1e8] sm:$0xff]
  %v4317 = vld [vmem:[%s2 + $0x1f0] sm:$0xff]
  %v4318 = vld [vmem:[%s2 + $0x1f8] sm:$0xff]
  %v4319 = vld [vmem:[%s2 + $0x200] sm:$0xff]
  %v4320 = vld [vmem:[%s2 + $0x208] sm:$0xff]
  %v4321 = vld [vmem:[%s2 + $0x210] sm:$0xff]
  %v4322 = vld [vmem:[%s2 + $0x218] sm:$0xff]
  %v4323 = vld [vmem:[%s2 + $0x220] sm:$0xff]
  %v4324 = vld [vmem:[%s2 + $0x228] sm:$0xff]
  %v4325 = vld [vmem:[%s2 + $0x230] sm:$0xff]
  %v4326 = vld [vmem:[%s2 + $0x238] sm:$0xff]
  %v4327 = vld [vmem:[%s2 + $0x240] sm:$0xff]
  %v4328 = vld [vmem:[%s2 + $0x248] sm:$0xff]
  %v4329 = vld [vmem:[%s2 + $0x250] sm:$0xff]
  %v4330 = vld [vmem:[%s2 + $0x258] sm:$0xff]
  %v4331 = vld [vmem:[%s2 + $0x260] sm:$0xff]
  %v4332 = vld [vmem:[%s2 + $0x268] sm:$0xff]
  %v4333 = vld [vmem:[%s2 + $0x270] sm:$0xff]
  %v4334 = vld [vmem:[%s2 + $0x278] sm:$0xff]
  %v4335 = vld [vmem:[%s2 + $0x280] sm:$0xff]
  %v4336 = vld [vmem:[%s2 + $0x288] sm:$0xff]
  %v4337 = vld [vmem:[%s2 + $0x290] sm:$0xff]
  %v4338 = vld [vmem:[%s2 + $0x298] sm:$0xff]
  %v4339 = vld [vmem:[%s2 + $0x2a0] sm:$0xff]
  %v4340 = vld [vmem:[%s2 + $0x2a8] sm:$0xff]
  %v4341 = vld [vmem:[%s2 + $0x2b0] sm:$0xff]
  %v4342 = vld [vmem:[%s2 + $0x2b8] sm:$0xff]
  %v4343 = vld [vmem:[%s2 + $0x2c0] sm:$0xff]
  %v4344 = vld [vmem:[%s2 + $0x2c8] sm:$0xff]
  %v4345 = vld [vmem:[%s2 + $0x2d0] sm:$0xff]
  %v4346 = vld [vmem:[%s2 + $0x2d8] sm:$0xff]
  %v4347 = vld [vmem:[%s2 + $0x2e0] sm:$0xff]
  %v4348 = vld [vmem:[%s2 + $0x2e8] sm:$0xff]
  %v4349 = vld [vmem:[%s2 + $0x2f0] sm:$0xff]
  %v4350 = vld [vmem:[%s2 + $0x2f8] sm:$0xff]
  %v4351 = vld [vmem:[%s2 + $0x300] sm:$0xff]
  %v4352 = vld [vmem:[%s2 + $0x308] sm:$0xff]
  %v4353 = vld [vmem:[%s2 + $0x310] sm:$0xff]
  %v4354 = vld [vmem:[%s2 + $0x318] sm:$0xff]
  %v4355 = vpack.c.bf16 %v4248, %v4248
  %v4356 = vpack.c.bf16 %v4249, %v4249
  %v4357 = vpack.c.bf16 %v4250, %v4250
  %v4358 = vpack.c.bf16 %v4251, %v4251
  %v4359 = vpack.c.bf16 %v4252, %v4252
  %v4360 = vpack.c.bf16 %v4253, %v4253
  %v4361 = vpack.c.bf16 %v4254, %v4254
  %s4362 = scalar_lea.vmem %s4, 2
  %v4363 = vld [vmem:[%s4362] ss:$8 sm:$0x3]
  %v4365 = vperm.slane %v4363, 0
  %v4366 = vperm.slane %v4363, 1
  %v4469 = vunpack.c.l.b16 %v4255
  %v4470 = vunpack.c.h.b16 %v4255
  %v4471 = vunpack.c.l.b16 %v4256
  %v4472 = vunpack.c.h.b16 %v4256
  %v4473 = vunpack.c.l.b16 %v4257
  %v4474 = vunpack.c.h.b16 %v4257
  %v4475 = vunpack.c.l.b16 %v4258
  %v4476 = vunpack.c.h.b16 %v4258
  %v4477 = vunpack.c.l.b16 %v4259
  %v4478 = vunpack.c.h.b16 %v4259
  %v4479 = vunpack.c.l.b16 %v4260
  %v4480 = vunpack.c.h.b16 %v4260
  %v4481 = vunpack.c.l.b16 %v4261
  %v4482 = vunpack.c.h.b16 %v4261
  %v4483 = vunpack.c.l.b16 %v4262
  %v4484 = vunpack.c.h.b16 %v4262
  %v4485 = vunpack.c.l.b16 %v4263
  %v4486 = vunpack.c.h.b16 %v4263
  %v4487 = vunpack.c.l.b16 %v4264
  %v4488 = vunpack.c.h.b16 %v4264
  %v4489 = vunpack.c.l.b16 %v4265
  %v4490 = vunpack.c.h.b16 %v4265
  %v4491 = vunpack.c.l.b16 %v4266
  %v4492 = vunpack.c.h.b16 %v4266
  %v4493 = vunpack.c.l.b16 %v4267
  %v4494 = vunpack.c.h.b16 %v4267
  %v4495 = vunpack.c.l.b16 %v4268
  %v4496 = vunpack.c.h.b16 %v4268
  %v4497 = vunpack.c.l.b16 %v4269
  %v4498 = vunpack.c.h.b16 %v4269
  %v4499 = vunpack.c.l.b16 %v4270
  %v4500 = vunpack.c.h.b16 %v4270
  %v4501 = vunpack.c.l.b16 %v4271
  %v4502 = vunpack.c.h.b16 %v4271
  %v4503 = vunpack.c.l.b16 %v4272
  %v4504 = vunpack.c.h.b16 %v4272
  %v4505 = vunpack.c.l.b16 %v4273
  %v4506 = vunpack.c.h.b16 %v4273
  %v4507 = vunpack.c.l.b16 %v4274
  %v4508 = vunpack.c.h.b16 %v4274
  %v4509 = vunpack.c.l.b16 %v4275
  %v4510 = vunpack.c.h.b16 %v4275
  %v4511 = vunpack.c.l.b16 %v4276
  %v4512 = vunpack.c.h.b16 %v4276
  %v4513 = vunpack.c.l.b16 %v4277
  %v4514 = vunpack.c.h.b16 %v4277
  %v4515 = vunpack.c.l.b16 %v4278
  %v4516 = vunpack.c.h.b16 %v4278
  %v4517 = vunpack.c.l.b16 %v4279
  %v4518 = vunpack.c.h.b16 %v4279
  %v4519 = vunpack.c.l.b16 %v4280
  %v4520 = vunpack.c.h.b16 %v4280
  %v4521 = vunpack.c.l.b16 %v4281
  %v4522 = vunpack.c.h.b16 %v4281
  %v4523 = vunpack.c.l.b16 %v4282
  %v4524 = vunpack.c.h.b16 %v4282
  %v4525 = vunpack.c.l.b16 %v4283
  %v4526 = vunpack.c.h.b16 %v4283
  %v4527 = vunpack.c.l.b16 %v4284
  %v4528 = vunpack.c.h.b16 %v4284
  %v4529 = vunpack.c.l.b16 %v4285
  %v4530 = vunpack.c.h.b16 %v4285
  %v4531 = vunpack.c.l.b16 %v4286
  %v4532 = vunpack.c.h.b16 %v4286
  %v4533 = vunpack.c.l.b16 %v4287
  %v4534 = vunpack.c.h.b16 %v4287
  %v4535 = vunpack.c.l.b16 %v4288
  %v4536 = vunpack.c.h.b16 %v4288
  %v4537 = vunpack.c.l.b16 %v4289
  %v4538 = vunpack.c.h.b16 %v4289
  %v4539 = vunpack.c.l.b16 %v4290
  %v4540 = vunpack.c.h.b16 %v4290
  %v4541 = vunpack.c.l.b16 %v4291
  %v4542 = vunpack.c.h.b16 %v4291
  %v4543 = vunpack.c.l.b16 %v4292
  %v4544 = vunpack.c.h.b16 %v4292
  %v4545 = vunpack.c.l.b16 %v4293
  %v4546 = vunpack.c.h.b16 %v4293
  %v4547 = vunpack.c.l.b16 %v4294
  %v4548 = vunpack.c.h.b16 %v4294
  %v4549 = vunpack.c.l.b16 %v4295
  %v4550 = vunpack.c.h.b16 %v4295
  %v4551 = vunpack.c.l.b16 %v4296
  %v4552 = vunpack.c.h.b16 %v4296
  %v4553 = vunpack.c.l.b16 %v4297
  %v4554 = vunpack.c.h.b16 %v4297
  %v4555 = vunpack.c.l.b16 %v4298
  %v4556 = vunpack.c.h.b16 %v4298
  %v4557 = vunpack.c.l.b16 %v4299
  %v4558 = vunpack.c.h.b16 %v4299
  %v4559 = vunpack.c.l.b16 %v4300
  %v4560 = vunpack.c.h.b16 %v4300
  %v4561 = vunpack.c.l.b16 %v4301
  %v4562 = vunpack.c.h.b16 %v4301
  %v4563 = vunpack.c.l.b16 %v4302
  %v4564 = vunpack.c.h.b16 %v4302
  %v4565 = vunpack.c.l.b16 %v4303
  %v4566 = vunpack.c.h.b16 %v4303
  %v4567 = vunpack.c.l.b16 %v4304
  %v4568 = vunpack.c.h.b16 %v4304
  %v4569 = vunpack.c.l.b16 %v4305
  %v4570 = vunpack.c.h.b16 %v4305
  %v4571 = vunpack.c.l.b16 %v4306
  %v4572 = vunpack.c.h.b16 %v4306
  %v4573 = vunpack.c.l.b16 %v4307
  %v4574 = vunpack.c.h.b16 %v4307
  %v4575 = vunpack.c.l.b16 %v4308
  %v4576 = vunpack.c.h.b16 %v4308
  %v4577 = vunpack.c.l.b16 %v4309
  %v4578 = vunpack.c.h.b16 %v4309
  %v4579 = vunpack.c.l.b16 %v4310
  %v4580 = vunpack.c.h.b16 %v4310
  %v4581 = vunpack.c.l.b16 %v4311
  %v4582 = vunpack.c.h.b16 %v4311
  %v4583 = vunpack.c.l.b16 %v4312
  %v4584 = vunpack.c.h.b16 %v4312
  %v4585 = vunpack.c.l.b16 %v4313
  %v4586 = vunpack.c.h.b16 %v4313
  %v4587 = vunpack.c.l.b16 %v4314
  %v4588 = vunpack.c.h.b16 %v4314
  %v4589 = vunpack.c.l.b16 %v4315
  %v4590 = vunpack.c.h.b16 %v4315
  %v4591 = vunpack.c.l.b16 %v4316
  %v4592 = vunpack.c.h.b16 %v4316
  %v4593 = vunpack.c.l.b16 %v4317
  %v4594 = vunpack.c.h.b16 %v4317
  %v4595 = vunpack.c.l.b16 %v4318
  %v4596 = vunpack.c.h.b16 %v4318
  %v4597 = vunpack.c.l.b16 %v4319
  %v4598 = vunpack.c.h.b16 %v4319
  %v4599 = vunpack.c.l.b16 %v4320
  %v4600 = vunpack.c.h.b16 %v4320
  %v4601 = vunpack.c.l.b16 %v4321
  %v4602 = vunpack.c.h.b16 %v4321
  %v4603 = vunpack.c.l.b16 %v4322
  %v4604 = vunpack.c.h.b16 %v4322
  %v4605 = vunpack.c.l.b16 %v4323
  %v4606 = vunpack.c.h.b16 %v4323
  %v4607 = vunpack.c.l.b16 %v4324
  %v4608 = vunpack.c.h.b16 %v4324
  %v4609 = vunpack.c.l.b16 %v4325
  %v4610 = vunpack.c.h.b16 %v4325
  %v4611 = vunpack.c.l.b16 %v4326
  %v4612 = vunpack.c.h.b16 %v4326
  %v4613 = vunpack.c.l.b16 %v4327
  %v4614 = vunpack.c.h.b16 %v4327
  %v4615 = vunpack.c.l.b16 %v4328
  %v4616 = vunpack.c.h.b16 %v4328
  %v4617 = vunpack.c.l.b16 %v4329
  %v4618 = vunpack.c.h.b16 %v4329
  %v4619 = vunpack.c.l.b16 %v4330
  %v4620 = vunpack.c.h.b16 %v4330
  %v4621 = vunpack.c.l.b16 %v4331
  %v4622 = vunpack.c.h.b16 %v4331
  %v4623 = vunpack.c.l.b16 %v4332
  %v4624 = vunpack.c.h.b16 %v4332
  %v4625 = vunpack.c.l.b16 %v4333
  %v4626 = vunpack.c.h.b16 %v4333
  %v4627 = vunpack.c.l.b16 %v4334
  %v4628 = vunpack.c.h.b16 %v4334
  %v4629 = vunpack.c.l.b16 %v4335
  %v4630 = vunpack.c.h.b16 %v4335
  %v4631 = vunpack.c.l.b16 %v4336
  %v4632 = vunpack.c.h.b16 %v4336
  %v4633 = vunpack.c.l.b16 %v4337
  %v4634 = vunpack.c.h.b16 %v4337
  %v4635 = vunpack.c.l.b16 %v4338
  %v4636 = vunpack.c.h.b16 %v4338
  %v4637 = vunpack.c.l.b16 %v4339
  %v4638 = vunpack.c.h.b16 %v4339
  %v4639 = vunpack.c.l.b16 %v4340
  %v4640 = vunpack.c.h.b16 %v4340
  %v4641 = vunpack.c.l.b16 %v4341
  %v4642 = vunpack.c.h.b16 %v4341
  %v4643 = vunpack.c.l.b16 %v4342
  %v4644 = vunpack.c.h.b16 %v4342
  %v4645 = vunpack.c.l.b16 %v4343
  %v4646 = vunpack.c.h.b16 %v4343
  %v4647 = vunpack.c.l.b16 %v4344
  %v4648 = vunpack.c.h.b16 %v4344
  %v4649 = vunpack.c.l.b16 %v4345
  %v4650 = vunpack.c.h.b16 %v4345
  %v4651 = vunpack.c.l.b16 %v4346
  %v4652 = vunpack.c.h.b16 %v4346
  %v4653 = vunpack.c.l.b16 %v4347
  %v4654 = vunpack.c.h.b16 %v4347
  %v4655 = vunpack.c.l.b16 %v4348
  %v4656 = vunpack.c.h.b16 %v4348
  %v4657 = vunpack.c.l.b16 %v4349
  %v4658 = vunpack.c.h.b16 %v4349
  %v4659 = vunpack.c.l.b16 %v4350
  %v4660 = vunpack.c.h.b16 %v4350
  %v4661 = vunpack.c.l.b16 %v4351
  %v4662 = vunpack.c.h.b16 %v4351
  %v4663 = vunpack.c.l.b16 %v4352
  %v4664 = vunpack.c.h.b16 %v4352
  %v4665 = vunpack.c.l.b16 %v4353
  %v4666 = vunpack.c.h.b16 %v4353
  %v4667 = vunpack.c.l.b16 %v4354
  %v4668 = vunpack.c.h.b16 %v4354
  %v4669 = vpack.c.b16 %v4471, %v4469
  %v4670 = vpack.c.b16 %v4472, %v4470
  %v4671 = vpack.c.b16 %v4475, %v4473
  %v4672 = vpack.c.b16 %v4476, %v4474
  %v4673 = vpack.c.b16 %v4479, %v4477
  %v4674 = vpack.c.b16 %v4480, %v4478
  %v4675 = vpack.c.b16 %v4483, %v4481
  %v4676 = vpack.c.b16 %v4484, %v4482
  %v4677 = vpack.c.b16 %v4487, %v4485
  %v4678 = vpack.c.b16 %v4488, %v4486
  %v4679 = vpack.c.b16 %v4491, %v4489
  %v4680 = vpack.c.b16 %v4492, %v4490
  %v4681 = vpack.c.b16 %v4495, %v4493
  %v4682 = vpack.c.b16 %v4496, %v4494
  %v4683 = vpack.c.b16 %v4499, %v4497
  %v4684 = vpack.c.b16 %v4500, %v4498
  %v4685 = vpack.c.b16 %v4503, %v4501
  %v4686 = vpack.c.b16 %v4504, %v4502
  %v4687 = vpack.c.b16 %v4507, %v4505
  %v4688 = vpack.c.b16 %v4508, %v4506
  %v4689 = vpack.c.b16 %v4511, %v4509
  %v4690 = vpack.c.b16 %v4512, %v4510
  %v4691 = vpack.c.b16 %v4515, %v4513
  %v4692 = vpack.c.b16 %v4516, %v4514
  %v4693 = vpack.c.b16 %v4519, %v4517
  %v4694 = vpack.c.b16 %v4520, %v4518
  %v4695 = vpack.c.b16 %v4523, %v4521
  %v4696 = vpack.c.b16 %v4524, %v4522
  %v4697 = vpack.c.b16 %v4527, %v4525
  %v4698 = vpack.c.b16 %v4528, %v4526
  %v4699 = vpack.c.b16 %v4531, %v4529
  %v4700 = vpack.c.b16 %v4532, %v4530
  %v4701 = vpack.c.b16 %v4535, %v4533
  %v4702 = vpack.c.b16 %v4536, %v4534
  %v4703 = vpack.c.b16 %v4539, %v4537
  %v4704 = vpack.c.b16 %v4540, %v4538
  %v4705 = vpack.c.b16 %v4543, %v4541
  %v4706 = vpack.c.b16 %v4544, %v4542
  %v4707 = vpack.c.b16 %v4547, %v4545
  %v4708 = vpack.c.b16 %v4548, %v4546
  %v4709 = vpack.c.b16 %v4551, %v4549
  %v4710 = vpack.c.b16 %v4552, %v4550
  %v4711 = vpack.c.b16 %v4555, %v4553
  %v4712 = vpack.c.b16 %v4556, %v4554
  %v4713 = vpack.c.b16 %v4559, %v4557
  %v4714 = vpack.c.b16 %v4560, %v4558
  %v4715 = vpack.c.b16 %v4563, %v4561
  %v4716 = vpack.c.b16 %v4564, %v4562
  %v4717 = vpack.c.b16 %v4567, %v4565
  %v4718 = vpack.c.b16 %v4568, %v4566
  %v4719 = vpack.c.b16 %v4571, %v4569
  %v4720 = vpack.c.b16 %v4572, %v4570
  %v4721 = vpack.c.b16 %v4575, %v4573
  %v4722 = vpack.c.b16 %v4576, %v4574
  %v4723 = vpack.c.b16 %v4579, %v4577
  %v4724 = vpack.c.b16 %v4580, %v4578
  %v4725 = vpack.c.b16 %v4583, %v4581
  %v4726 = vpack.c.b16 %v4584, %v4582
  %v4727 = vpack.c.b16 %v4587, %v4585
  %v4728 = vpack.c.b16 %v4588, %v4586
  %v4729 = vpack.c.b16 %v4591, %v4589
  %v4730 = vpack.c.b16 %v4592, %v4590
  %v4731 = vpack.c.b16 %v4595, %v4593
  %v4732 = vpack.c.b16 %v4596, %v4594
  %v4733 = vpack.c.b16 %v4599, %v4597
  %v4734 = vpack.c.b16 %v4600, %v4598
  %v4735 = vpack.c.b16 %v4603, %v4601
  %v4736 = vpack.c.b16 %v4604, %v4602
  %v4737 = vpack.c.b16 %v4607, %v4605
  %v4738 = vpack.c.b16 %v4608, %v4606
  %v4739 = vpack.c.b16 %v4611, %v4609
  %v4740 = vpack.c.b16 %v4612, %v4610
  %v4741 = vpack.c.b16 %v4615, %v4613
  %v4742 = vpack.c.b16 %v4616, %v4614
  %v4743 = vpack.c.b16 %v4619, %v4617
  %v4744 = vpack.c.b16 %v4620, %v4618
  %v4745 = vpack.c.b16 %v4623, %v4621
  %v4746 = vpack.c.b16 %v4624, %v4622
  %v4747 = vpack.c.b16 %v4627, %v4625
  %v4748 = vpack.c.b16 %v4628, %v4626
  %v4749 = vpack.c.b16 %v4631, %v4629
  %v4750 = vpack.c.b16 %v4632, %v4630
  %v4751 = vpack.c.b16 %v4635, %v4633
  %v4752 = vpack.c.b16 %v4636, %v4634
  %v4753 = vpack.c.b16 %v4639, %v4637
  %v4754 = vpack.c.b16 %v4640, %v4638
  %v4755 = vpack.c.b16 %v4643, %v4641
  %v4756 = vpack.c.b16 %v4644, %v4642
  %v4757 = vpack.c.b16 %v4647, %v4645
  %v4758 = vpack.c.b16 %v4648, %v4646
  %v4759 = vpack.c.b16 %v4651, %v4649
  %v4760 = vpack.c.b16 %v4652, %v4650
  %v4761 = vpack.c.b16 %v4655, %v4653
  %v4762 = vpack.c.b16 %v4656, %v4654
  %v4763 = vpack.c.b16 %v4659, %v4657
  %v4764 = vpack.c.b16 %v4660, %v4658
  %v4765 = vpack.c.b16 %v4663, %v4661
  %v4766 = vpack.c.b16 %v4664, %v4662
  %v4767 = vpack.c.b16 %v4667, %v4665
  %v4768 = vpack.c.b16 %v4668, %v4666
  %v4870 = vsel %vm3607, %v4361, 0
  %4872 = vmatpush.bf16.msra.mxu0 %v4683
  %4873 = vmatpush.bf16.msra.mxu0 %v4681
  %4874 = vmatpush.bf16.msra.mxu0 %v4679
  %4875 = vmatpush.bf16.msra.mxu0 %v4677
  %4876 = vmatpush.bf16.msra.mxu0 %v4675
  %4877 = vmatpush.bf16.msra.mxu0 %v4673
  %4878 = vmatpush.bf16.msra.mxu0 %v4671
  %4879 = vmatpush.bf16.msra.mxu0 %v4669
  %4880 = vmatmul.bf16.gmra.mxu0 %v4355
  %v4881 = vpop.f32.mrf.mxu0
  %v4882 = vadd.f32 %v4365, %v4881
  %v4883 = vpop.f32.mrf.mxu0
  %4884 = vdwg.mxu0
  %4885 = vmatpush.bf16.msra.mxu0 %v4699
  %4886 = vmatpush.bf16.msra.mxu0 %v4697
  %4887 = vmatpush.bf16.msra.mxu0 %v4695
  %4888 = vmatpush.bf16.msra.mxu0 %v4693
  %4889 = vmatpush.bf16.msra.mxu0 %v4691
  %4890 = vmatpush.bf16.msra.mxu0 %v4689
  %4891 = vmatpush.bf16.msra.mxu0 %v4687
  %4892 = vmatpush.bf16.msra.mxu0 %v4685
  %4893 = vmatmul.bf16.gmra.mxu0 %v4356
  %v4894 = vpop.f32.mrf.mxu0
  %v4895 = vadd.f32 %v4882, %v4894
  %v4896 = vpop.f32.mrf.mxu0
  %4897 = vdwg.mxu0
  %4898 = vmatpush.bf16.msra.mxu0 %v4715
  %4899 = vmatpush.bf16.msra.mxu0 %v4713
  %4900 = vmatpush.bf16.msra.mxu0 %v4711
  %4901 = vmatpush.bf16.msra.mxu0 %v4709
  %4902 = vmatpush.bf16.msra.mxu0 %v4707
  %4903 = vmatpush.bf16.msra.mxu0 %v4705
  %4904 = vmatpush.bf16.msra.mxu0 %v4703
  %4905 = vmatpush.bf16.msra.mxu0 %v4701
  %4906 = vmatmul.bf16.gmra.mxu0 %v4357
  %v4907 = vpop.f32.mrf.mxu0
  %v4908 = vadd.f32 %v4895, %v4907
  %v4909 = vpop.f32.mrf.mxu0
  %4910 = vdwg.mxu0
  %4911 = vmatpush.bf16.msra.mxu0 %v4731
  %4912 = vmatpush.bf16.msra.mxu0 %v4729
  %4913 = vmatpush.bf16.msra.mxu0 %v4727
  %4914 = vmatpush.bf16.msra.mxu0 %v4725
  %4915 = vmatpush.bf16.msra.mxu0 %v4723
  %4916 = vmatpush.bf16.msra.mxu0 %v4721
  %4917 = vmatpush.bf16.msra.mxu0 %v4719
  %4918 = vmatpush.bf16.msra.mxu0 %v4717
  %4919 = vmatmul.bf16.gmra.mxu0 %v4358
  %v4920 = vpop.f32.mrf.mxu0
  %v4921 = vadd.f32 %v4908, %v4920
  %v4922 = vpop.f32.mrf.mxu0
  %4923 = vdwg.mxu0
  %4924 = vmatpush.bf16.msra.mxu0 %v4747
  %4925 = vmatpush.bf16.msra.mxu0 %v4745
  %4926 = vmatpush.bf16.msra.mxu0 %v4743
  %4927 = vmatpush.bf16.msra.mxu0 %v4741
  %4928 = vmatpush.bf16.msra.mxu0 %v4739
  %4929 = vmatpush.bf16.msra.mxu0 %v4737
  %4930 = vmatpush.bf16.msra.mxu0 %v4735
  %4931 = vmatpush.bf16.msra.mxu0 %v4733
  %4932 = vmatmul.bf16.gmra.mxu0 %v4359
  %v4933 = vpop.f32.mrf.mxu0
  %v4934 = vadd.f32 %v4921, %v4933
  %v4935 = vpop.f32.mrf.mxu0
  %4936 = vdwg.mxu0
  %4937 = vmatpush.bf16.msra.mxu0 %v4763
  %4938 = vmatpush.bf16.msra.mxu0 %v4761
  %4939 = vmatpush.bf16.msra.mxu0 %v4759
  %4940 = vmatpush.bf16.msra.mxu0 %v4757
  %4941 = vmatpush.bf16.msra.mxu0 %v4755
  %4942 = vmatpush.bf16.msra.mxu0 %v4753
  %4943 = vmatpush.bf16.msra.mxu0 %v4751
  %4944 = vmatpush.bf16.msra.mxu0 %v4749
  %4945 = vmatmul.bf16.gmra.mxu0 %v4360
  %v4946 = vpop.f32.mrf.mxu0
  %v4947 = vadd.f32 %v4934, %v4946
  %v4948 = vpop.f32.mrf.mxu0
  %4949 = vdwg.mxu0
  %4950 = vmatpush.bf16.msra.mxu0 0
  %4951 = vmatpush.bf16.msra.mxu0 0
  %4952 = vmatpush.bf16.msra.mxu0 0
  %4953 = vmatpush.bf16.msra.mxu0 0
  %4954 = vmatpush.bf16.msra.mxu0 0
  %4955 = vmatpush.bf16.msra.mxu0 0
  %4956 = vmatpush.bf16.msra.mxu0 %v4767
  %4957 = vmatpush.bf16.msra.mxu0 %v4765
  %4958 = vmatmul.bf16.gmra.mxu0 %v4870
  %v4959 = vpop.f32.mrf.mxu0
  %v4960 = vadd.f32 %v4947, %v4959
  %v4961 = vpop.f32.mrf.mxu0
  %4962 = vdwg.mxu0
  %4963 = vmatpush.bf16.msra.mxu0 %v4684
  %4964 = vmatpush.bf16.msra.mxu0 %v4682
  %4965 = vmatpush.bf16.msra.mxu0 %v4680
  %4966 = vmatpush.bf16.msra.mxu0 %v4678
  %4967 = vmatpush.bf16.msra.mxu0 %v4676
  %4968 = vmatpush.bf16.msra.mxu0 %v4674
  %4969 = vmatpush.bf16.msra.mxu0 %v4672
  %4970 = vmatpush.bf16.msra.mxu0 %v4670
  %4971 = vmatmul.bf16.gmra.mxu0 %v4355
  %v4972 = vpop.f32.mrf.mxu0
  %v4973 = vadd.f32 %v4366, %v4972
  %v4974 = vpop.f32.mrf.mxu0
  %4975 = vdwg.mxu0
  %4976 = vmatpush.bf16.msra.mxu0 %v4700
  %4977 = vmatpush.bf16.msra.mxu0 %v4698
  %4978 = vmatpush.bf16.msra.mxu0 %v4696
  %4979 = vmatpush.bf16.msra.mxu0 %v4694
  %4980 = vmatpush.bf16.msra.mxu0 %v4692
  %4981 = vmatpush.bf16.msra.mxu0 %v4690
  %4982 = vmatpush.bf16.msra.mxu0 %v4688
  %4983 = vmatpush.bf16.msra.mxu0 %v4686
  %4984 = vmatmul.bf16.gmra.mxu0 %v4356
  %v4985 = vpop.f32.mrf.mxu0
  %v4986 = vadd.f32 %v4973, %v4985
  %v4987 = vpop.f32.mrf.mxu0
  %4988 = vdwg.mxu0
  %4989 = vmatpush.bf16.msra.mxu0 %v4716
  %4990 = vmatpush.bf16.msra.mxu0 %v4714
  %4991 = vmatpush.bf16.msra.mxu0 %v4712
  %4992 = vmatpush.bf16.msra.mxu0 %v4710
  %4993 = vmatpush.bf16.msra.mxu0 %v4708
  %4994 = vmatpush.bf16.msra.mxu0 %v4706
  %4995 = vmatpush.bf16.msra.mxu0 %v4704
  %4996 = vmatpush.bf16.msra.mxu0 %v4702
  %4997 = vmatmul.bf16.gmra.mxu0 %v4357
  %v4998 = vpop.f32.mrf.mxu0
  %v4999 = vadd.f32 %v4986, %v4998
  %v5000 = vpop.f32.mrf.mxu0
  %5001 = vdwg.mxu0
  %5002 = vmatpush.bf16.msra.mxu0 %v4732
  %5003 = vmatpush.bf16.msra.mxu0 %v4730
  %5004 = vmatpush.bf16.msra.mxu0 %v4728
  %5005 = vmatpush.bf16.msra.mxu0 %v4726
  %5006 = vmatpush.bf16.msra.mxu0 %v4724
  %5007 = vmatpush.bf16.msra.mxu0 %v4722
  %5008 = vmatpush.bf16.msra.mxu0 %v4720
  %5009 = vmatpush.bf16.msra.mxu0 %v4718
  %5010 = vmatmul.bf16.gmra.mxu0 %v4358
  %v5011 = vpop.f32.mrf.mxu0
  %v5012 = vadd.f32 %v4999, %v5011
  %v5013 = vpop.f32.mrf.mxu0
  %5014 = vdwg.mxu0
  %5015 = vmatpush.bf16.msra.mxu0 %v4748
  %5016 = vmatpush.bf16.msra.mxu0 %v4746
  %5017 = vmatpush.bf16.msra.mxu0 %v4744
  %5018 = vmatpush.bf16.msra.mxu0 %v4742
  %5019 = vmatpush.bf16.msra.mxu0 %v4740
  %5020 = vmatpush.bf16.msra.mxu0 %v4738
  %5021 = vmatpush.bf16.msra.mxu0 %v4736
  %5022 = vmatpush.bf16.msra.mxu0 %v4734
  %5023 = vmatmul.bf16.gmra.mxu0 %v4359
  %v5024 = vpop.f32.mrf.mxu0
  %v5025 = vadd.f32 %v5012, %v5024
  %v5026 = vpop.f32.mrf.mxu0
  %5027 = vdwg.mxu0
  %5028 = vmatpush.bf16.msra.mxu0 %v4764
  %5029 = vmatpush.bf16.msra.mxu0 %v4762
  %5030 = vmatpush.bf16.msra.mxu0 %v4760
  %5031 = vmatpush.bf16.msra.mxu0 %v4758
  %5032 = vmatpush.bf16.msra.mxu0 %v4756
  %5033 = vmatpush.bf16.msra.mxu0 %v4754
  %5034 = vmatpush.bf16.msra.mxu0 %v4752
  %5035 = vmatpush.bf16.msra.mxu0 %v4750
  %5036 = vmatmul.bf16.gmra.mxu0 %v4360
  %v5037 = vpop.f32.mrf.mxu0
  %v5038 = vadd.f32 %v5025, %v5037
  %v5039 = vpop.f32.mrf.mxu0
  %5040 = vdwg.mxu0
  %5041 = vmatpush.bf16.msra.mxu0 0
  %5042 = vmatpush.bf16.msra.mxu0 0
  %5043 = vmatpush.bf16.msra.mxu0 0
  %5044 = vmatpush.bf16.msra.mxu0 0
  %5045 = vmatpush.bf16.msra.mxu0 0
  %5046 = vmatpush.bf16.msra.mxu0 0
  %5047 = vmatpush.bf16.msra.mxu0 %v4768
  %5048 = vmatpush.bf16.msra.mxu0 %v4766
  %5049 = vmatmul.bf16.gmra.mxu0 %v4870
  %v5050 = vpop.f32.mrf.mxu0
  %v5051 = vadd.f32 %v5038, %v5050
  %v5052 = vpop.f32.mrf.mxu0
  %5053 = vdwg.mxu0
  %v5054 = vmax.f32 %v4960, 0.0
  %v5055 = vmax.f32 %v5051, 0.0
  %v5056 = vld [vmem:[%s2 + $0x320] sm:$0xff]
  %v5057 = vld [vmem:[%s2 + $0x328] sm:$0xff]
  %v5058 = vld [vmem:[%s2 + $0x330] sm:$0xff]
  %v5059 = vld [vmem:[%s2 + $0x338] sm:$0xff]
  %v5060 = vld [vmem:[%s2 + $0x340] sm:$0xff]
  %v5061 = vld [vmem:[%s2 + $0x348] sm:$0xff]
  %v5062 = vld [vmem:[%s2 + $0x350] sm:$0xff]
  %v5063 = vld [vmem:[%s2 + $0x358] sm:$0xff]
  %v5064 = vld [vmem:[%s2 + $0x360] sm:$0xff]
  %v5065 = vld [vmem:[%s2 + $0x368] sm:$0xff]
  %v5066 = vld [vmem:[%s2 + $0x370] sm:$0xff]
  %v5067 = vld [vmem:[%s2 + $0x378] sm:$0xff]
  %v5068 = vld [vmem:[%s2 + $0x380] sm:$0xff]
  %v5069 = vld [vmem:[%s2 + $0x388] sm:$0xff]
  %v5070 = vld [vmem:[%s2 + $0x390] sm:$0xff]
  %v5071 = vld [vmem:[%s2 + $0x398] sm:$0xff]
  %v5072 = vld [vmem:[%s2 + $0x3a0] sm:$0xff]
  %v5073 = vld [vmem:[%s2 + $0x3a8] sm:$0xff]
  %v5074 = vld [vmem:[%s2 + $0x3b0] sm:$0xff]
  %v5075 = vld [vmem:[%s2 + $0x3b8] sm:$0xff]
  %v5076 = vld [vmem:[%s2 + $0x3c0] sm:$0xff]
  %v5077 = vld [vmem:[%s2 + $0x3c8] sm:$0xff]
  %v5078 = vld [vmem:[%s2 + $0x3d0] sm:$0xff]
  %v5079 = vld [vmem:[%s2 + $0x3d8] sm:$0xff]
  %v5080 = vld [vmem:[%s2 + $0x3e0] sm:$0xff]
  %v5081 = vld [vmem:[%s2 + $0x3e8] sm:$0xff]
  %v5082 = vld [vmem:[%s2 + $0x3f0] sm:$0xff]
  %v5083 = vld [vmem:[%s2 + $0x3f8] sm:$0xff]
  %v5084 = vld [vmem:[%s2 + $0x400] sm:$0xff]
  %v5085 = vld [vmem:[%s2 + $0x408] sm:$0xff]
  %v5086 = vld [vmem:[%s2 + $0x410] sm:$0xff]
  %v5087 = vld [vmem:[%s2 + $0x418] sm:$0xff]
  %v5088 = vpack.c.bf16 %v5054, %v5054
  %v5089 = vpack.c.bf16 %v5055, %v5055
  %s5090 = scalar_lea.vmem %s4, 3
  %v5091 = vld [vmem:[%s5090] ss:$8 sm:$0x3]
  %v5093 = vperm.slane %v5091, 0
  %v5094 = vperm.slane %v5091, 1
  %v5129 = vunpack.c.l.b16 %v5056
  %v5130 = vunpack.c.h.b16 %v5056
  %v5131 = vunpack.c.l.b16 %v5057
  %v5132 = vunpack.c.h.b16 %v5057
  %v5133 = vunpack.c.l.b16 %v5058
  %v5134 = vunpack.c.h.b16 %v5058
  %v5135 = vunpack.c.l.b16 %v5059
  %v5136 = vunpack.c.h.b16 %v5059
  %v5137 = vunpack.c.l.b16 %v5060
  %v5138 = vunpack.c.h.b16 %v5060
  %v5139 = vunpack.c.l.b16 %v5061
  %v5140 = vunpack.c.h.b16 %v5061
  %v5141 = vunpack.c.l.b16 %v5062
  %v5142 = vunpack.c.h.b16 %v5062
  %v5143 = vunpack.c.l.b16 %v5063
  %v5144 = vunpack.c.h.b16 %v5063
  %v5145 = vunpack.c.l.b16 %v5064
  %v5146 = vunpack.c.h.b16 %v5064
  %v5147 = vunpack.c.l.b16 %v5065
  %v5148 = vunpack.c.h.b16 %v5065
  %v5149 = vunpack.c.l.b16 %v5066
  %v5150 = vunpack.c.h.b16 %v5066
  %v5151 = vunpack.c.l.b16 %v5067
  %v5152 = vunpack.c.h.b16 %v5067
  %v5153 = vunpack.c.l.b16 %v5068
  %v5154 = vunpack.c.h.b16 %v5068
  %v5155 = vunpack.c.l.b16 %v5069
  %v5156 = vunpack.c.h.b16 %v5069
  %v5157 = vunpack.c.l.b16 %v5070
  %v5158 = vunpack.c.h.b16 %v5070
  %v5159 = vunpack.c.l.b16 %v5071
  %v5160 = vunpack.c.h.b16 %v5071
  %v5161 = vunpack.c.l.b16 %v5072
  %v5162 = vunpack.c.h.b16 %v5072
  %v5163 = vunpack.c.l.b16 %v5073
  %v5164 = vunpack.c.h.b16 %v5073
  %v5165 = vunpack.c.l.b16 %v5074
  %v5166 = vunpack.c.h.b16 %v5074
  %v5167 = vunpack.c.l.b16 %v5075
  %v5168 = vunpack.c.h.b16 %v5075
  %v5169 = vunpack.c.l.b16 %v5076
  %v5170 = vunpack.c.h.b16 %v5076
  %v5171 = vunpack.c.l.b16 %v5077
  %v5172 = vunpack.c.h.b16 %v5077
  %v5173 = vunpack.c.l.b16 %v5078
  %v5174 = vunpack.c.h.b16 %v5078
  %v5175 = vunpack.c.l.b16 %v5079
  %v5176 = vunpack.c.h.b16 %v5079
  %v5177 = vunpack.c.l.b16 %v5080
  %v5178 = vunpack.c.h.b16 %v5080
  %v5179 = vunpack.c.l.b16 %v5081
  %v5180 = vunpack.c.h.b16 %v5081
  %v5181 = vunpack.c.l.b16 %v5082
  %v5182 = vunpack.c.h.b16 %v5082
  %v5183 = vunpack.c.l.b16 %v5083
  %v5184 = vunpack.c.h.b16 %v5083
  %v5185 = vunpack.c.l.b16 %v5084
  %v5186 = vunpack.c.h.b16 %v5084
  %v5187 = vunpack.c.l.b16 %v5085
  %v5188 = vunpack.c.h.b16 %v5085
  %v5189 = vunpack.c.l.b16 %v5086
  %v5190 = vunpack.c.h.b16 %v5086
  %v5191 = vunpack.c.l.b16 %v5087
  %v5192 = vunpack.c.h.b16 %v5087
  %v5193 = vpack.c.b16 %v5131, %v5129
  %v5194 = vpack.c.b16 %v5132, %v5130
  %v5195 = vpack.c.b16 %v5135, %v5133
  %v5196 = vpack.c.b16 %v5136, %v5134
  %v5197 = vpack.c.b16 %v5139, %v5137
  %v5198 = vpack.c.b16 %v5140, %v5138
  %v5199 = vpack.c.b16 %v5143, %v5141
  %v5200 = vpack.c.b16 %v5144, %v5142
  %v5201 = vpack.c.b16 %v5147, %v5145
  %v5202 = vpack.c.b16 %v5148, %v5146
  %v5203 = vpack.c.b16 %v5151, %v5149
  %v5204 = vpack.c.b16 %v5152, %v5150
  %v5205 = vpack.c.b16 %v5155, %v5153
  %v5206 = vpack.c.b16 %v5156, %v5154
  %v5207 = vpack.c.b16 %v5159, %v5157
  %v5208 = vpack.c.b16 %v5160, %v5158
  %v5209 = vpack.c.b16 %v5163, %v5161
  %v5210 = vpack.c.b16 %v5164, %v5162
  %v5211 = vpack.c.b16 %v5167, %v5165
  %v5212 = vpack.c.b16 %v5168, %v5166
  %v5213 = vpack.c.b16 %v5171, %v5169
  %v5214 = vpack.c.b16 %v5172, %v5170
  %v5215 = vpack.c.b16 %v5175, %v5173
  %v5216 = vpack.c.b16 %v5176, %v5174
  %v5217 = vpack.c.b16 %v5179, %v5177
  %v5218 = vpack.c.b16 %v5180, %v5178
  %v5219 = vpack.c.b16 %v5183, %v5181
  %v5220 = vpack.c.b16 %v5184, %v5182
  %v5221 = vpack.c.b16 %v5187, %v5185
  %v5222 = vpack.c.b16 %v5188, %v5186
  %v5223 = vpack.c.b16 %v5191, %v5189
  %v5224 = vpack.c.b16 %v5192, %v5190
  %5257 = vmatpush.bf16.msra.mxu0 %v5207
  %5258 = vmatpush.bf16.msra.mxu0 %v5205
  %5259 = vmatpush.bf16.msra.mxu0 %v5203
  %5260 = vmatpush.bf16.msra.mxu0 %v5201
  %5261 = vmatpush.bf16.msra.mxu0 %v5199
  %5262 = vmatpush.bf16.msra.mxu0 %v5197
  %5263 = vmatpush.bf16.msra.mxu0 %v5195
  %5264 = vmatpush.bf16.msra.mxu0 %v5193
  %5265 = vmatmul.bf16.gmra.mxu0 %v5088
  %v5266 = vpop.f32.mrf.mxu0
  %v5267 = vadd.f32 %v5093, %v5266
  %v5268 = vpop.f32.mrf.mxu0
  %5269 = vdwg.mxu0
  %5270 = vmatpush.bf16.msra.mxu0 %v5223
  %5271 = vmatpush.bf16.msra.mxu0 %v5221
  %5272 = vmatpush.bf16.msra.mxu0 %v5219
  %5273 = vmatpush.bf16.msra.mxu0 %v5217
  %5274 = vmatpush.bf16.msra.mxu0 %v5215
  %5275 = vmatpush.bf16.msra.mxu0 %v5213
  %5276 = vmatpush.bf16.msra.mxu0 %v5211
  %5277 = vmatpush.bf16.msra.mxu0 %v5209
  %5278 = vmatmul.bf16.gmra.mxu0 %v5089
  %v5279 = vpop.f32.mrf.mxu0
  %v5280 = vadd.f32 %v5267, %v5279
  %v5281 = vpop.f32.mrf.mxu0
  %5282 = vdwg.mxu0
  %5283 = vmatpush.bf16.msra.mxu0 %v5208
  %5284 = vmatpush.bf16.msra.mxu0 %v5206
  %5285 = vmatpush.bf16.msra.mxu0 %v5204
  %5286 = vmatpush.bf16.msra.mxu0 %v5202
  %5287 = vmatpush.bf16.msra.mxu0 %v5200
  %5288 = vmatpush.bf16.msra.mxu0 %v5198
  %5289 = vmatpush.bf16.msra.mxu0 %v5196
  %5290 = vmatpush.bf16.msra.mxu0 %v5194
  %5291 = vmatmul.bf16.gmra.mxu0 %v5088
  %v5292 = vpop.f32.mrf.mxu0
  %v5293 = vadd.f32 %v5094, %v5292
  %v5294 = vpop.f32.mrf.mxu0
  %5295 = vdwg.mxu0
  %5296 = vmatpush.bf16.msra.mxu0 %v5224
  %5297 = vmatpush.bf16.msra.mxu0 %v5222
  %5298 = vmatpush.bf16.msra.mxu0 %v5220
  %5299 = vmatpush.bf16.msra.mxu0 %v5218
  %5300 = vmatpush.bf16.msra.mxu0 %v5216
  %5301 = vmatpush.bf16.msra.mxu0 %v5214
  %5302 = vmatpush.bf16.msra.mxu0 %v5212
  %5303 = vmatpush.bf16.msra.mxu0 %v5210
  %5304 = vmatmul.bf16.gmra.mxu0 %v5089
  %v5305 = vpop.f32.mrf.mxu0
  %v5306 = vadd.f32 %v5293, %v5305
  %v5307 = vpop.f32.mrf.mxu0
  %5308 = vdwg.mxu0
  %v5309 = vmax.f32 %v5280, 0.0
  %v5310 = vmax.f32 %v5306, 0.0
  %v5311 = vld [vmem:[%s3] sm:$0xf]
  %v5312 = vld [vmem:[%s3 + $0x4] sm:$0xf]
  %v5313 = vld [vmem:[%s3 + $0x8] sm:$0xf]
  %v5314 = vld [vmem:[%s3 + $0xc] sm:$0xf]
  %v5315 = vld [vmem:[%s3 + $0x10] sm:$0xf]
  %v5316 = vld [vmem:[%s3 + $0x14] sm:$0xf]
  %v5317 = vld [vmem:[%s3 + $0x18] sm:$0xf]
  %v5318 = vld [vmem:[%s3 + $0x1c] sm:$0xf]
  %v5319 = vld [vmem:[%s3 + $0x20] sm:$0xf]
  %v5320 = vld [vmem:[%s3 + $0x24] sm:$0xf]
  %v5321 = vld [vmem:[%s3 + $0x28] sm:$0xf]
  %v5322 = vld [vmem:[%s3 + $0x2c] sm:$0xf]
  %v5323 = vld [vmem:[%s3 + $0x30] sm:$0xf]
  %v5324 = vld [vmem:[%s3 + $0x34] sm:$0xf]
  %v5325 = vld [vmem:[%s3 + $0x38] sm:$0xf]
  %v5326 = vld [vmem:[%s3 + $0x3c] sm:$0xf]
  %v5327 = vld [vmem:[%s3 + $0x40] sm:$0xf]
  %v5328 = vld [vmem:[%s3 + $0x44] sm:$0xf]
  %v5329 = vld [vmem:[%s3 + $0x48] sm:$0xf]
  %v5330 = vld [vmem:[%s3 + $0x4c] sm:$0xf]
  %v5331 = vld [vmem:[%s3 + $0x50] sm:$0xf]
  %v5332 = vld [vmem:[%s3 + $0x54] sm:$0xf]
  %v5333 = vld [vmem:[%s3 + $0x58] sm:$0xf]
  %v5334 = vld [vmem:[%s3 + $0x5c] sm:$0xf]
  %v5335 = vld [vmem:[%s3 + $0x60] sm:$0xf]
  %v5336 = vld [vmem:[%s3 + $0x64] sm:$0xf]
  %v5337 = vld [vmem:[%s3 + $0x68] sm:$0xf]
  %v5338 = vld [vmem:[%s3 + $0x6c] sm:$0xf]
  %v5339 = vld [vmem:[%s3 + $0x70] sm:$0xf]
  %v5340 = vld [vmem:[%s3 + $0x74] sm:$0xf]
  %v5341 = vld [vmem:[%s3 + $0x78] sm:$0xf]
  %v5342 = vld [vmem:[%s3 + $0x7c] sm:$0xf]
  %v5343 = vpack.c.bf16 %v5309, %v5309
  %v5344 = vpack.c.bf16 %v5310, %v5310
  %v5345 = vld [vmem:[%s4 + $0x4] ss:$0 sm:$0xff]
  %v5378 = vunpack.c.l.b16 %v5311
  %v5379 = vunpack.c.l.b16 %v5312
  %v5380 = vunpack.c.l.b16 %v5313
  %v5381 = vunpack.c.l.b16 %v5314
  %v5382 = vunpack.c.l.b16 %v5315
  %v5383 = vunpack.c.l.b16 %v5316
  %v5384 = vunpack.c.l.b16 %v5317
  %v5385 = vunpack.c.l.b16 %v5318
  %v5386 = vunpack.c.l.b16 %v5319
  %v5387 = vunpack.c.l.b16 %v5320
  %v5388 = vunpack.c.l.b16 %v5321
  %v5389 = vunpack.c.l.b16 %v5322
  %v5390 = vunpack.c.l.b16 %v5323
  %v5391 = vunpack.c.l.b16 %v5324
  %v5392 = vunpack.c.l.b16 %v5325
  %v5393 = vunpack.c.l.b16 %v5326
  %v5394 = vunpack.c.l.b16 %v5327
  %v5395 = vunpack.c.l.b16 %v5328
  %v5396 = vunpack.c.l.b16 %v5329
  %v5397 = vunpack.c.l.b16 %v5330
  %v5398 = vunpack.c.l.b16 %v5331
  %v5399 = vunpack.c.l.b16 %v5332
  %v5400 = vunpack.c.l.b16 %v5333
  %v5401 = vunpack.c.l.b16 %v5334
  %v5402 = vunpack.c.l.b16 %v5335
  %v5403 = vunpack.c.l.b16 %v5336
  %v5404 = vunpack.c.l.b16 %v5337
  %v5405 = vunpack.c.l.b16 %v5338
  %v5406 = vunpack.c.l.b16 %v5339
  %v5407 = vunpack.c.l.b16 %v5340
  %v5408 = vunpack.c.l.b16 %v5341
  %v5409 = vunpack.c.l.b16 %v5342
  %v5410 = vpack.c.b16 %v5379, %v5378
  %v5411 = vpack.c.b16 %v5381, %v5380
  %v5412 = vpack.c.b16 %v5383, %v5382
  %v5413 = vpack.c.b16 %v5385, %v5384
  %v5414 = vpack.c.b16 %v5387, %v5386
  %v5415 = vpack.c.b16 %v5389, %v5388
  %v5416 = vpack.c.b16 %v5391, %v5390
  %v5417 = vpack.c.b16 %v5393, %v5392
  %v5418 = vpack.c.b16 %v5395, %v5394
  %v5419 = vpack.c.b16 %v5397, %v5396
  %v5420 = vpack.c.b16 %v5399, %v5398
  %v5421 = vpack.c.b16 %v5401, %v5400
  %v5422 = vpack.c.b16 %v5403, %v5402
  %v5423 = vpack.c.b16 %v5405, %v5404
  %v5424 = vpack.c.b16 %v5407, %v5406
  %v5425 = vpack.c.b16 %v5409, %v5408
  %5442 = vmatpush.bf16.msra.mxu0 %v5417
  %5443 = vmatpush.bf16.msra.mxu0 %v5416
  %5444 = vmatpush.bf16.msra.mxu0 %v5415
  %5445 = vmatpush.bf16.msra.mxu0 %v5414
  %5446 = vmatpush.bf16.msra.mxu0 %v5413
  %5447 = vmatpush.bf16.msra.mxu0 %v5412
  %5448 = vmatpush.bf16.msra.mxu0 %v5411
  %5449 = vmatpush.bf16.msra.mxu0 %v5410
  %5450 = vmatmul.bf16.gmra.mxu0 %v5343
  %v5451 = vpop.f32.mrf.mxu0
  %v5452 = vadd.f32 %v5345, %v5451
  %v5453 = vpop.f32.mrf.mxu0
  %5454 = vdwg.mxu0
  %5455 = vmatpush.bf16.msra.mxu0 %v5425
  %5456 = vmatpush.bf16.msra.mxu0 %v5424
  %5457 = vmatpush.bf16.msra.mxu0 %v5423
  %5458 = vmatpush.bf16.msra.mxu0 %v5422
  %5459 = vmatpush.bf16.msra.mxu0 %v5421
  %5460 = vmatpush.bf16.msra.mxu0 %v5420
  %5461 = vmatpush.bf16.msra.mxu0 %v5419
  %5462 = vmatpush.bf16.msra.mxu0 %v5418
  %5463 = vmatmul.bf16.gmra.mxu0 %v5344
  %v5464 = vpop.f32.mrf.mxu0
  %v5465 = vadd.f32 %v5452, %v5464
  %v5466 = vpop.f32.mrf.mxu0
  %5467 = vdwg.mxu0
  %v5468 = vmax.f32 %v5465, 0.0
  %v5469 = vld [vmem:[%s3 + $0x80] sm:$0xf]
  %v5470 = vld [vmem:[%s3 + $0x84] sm:$0xf]
  %v5471 = vld [vmem:[%s3 + $0x88] sm:$0xf]
  %v5472 = vld [vmem:[%s3 + $0x8c] sm:$0xf]
  %v5473 = vld [vmem:[%s3 + $0x90] sm:$0xf]
  %v5474 = vld [vmem:[%s3 + $0x94] sm:$0xf]
  %v5475 = vld [vmem:[%s3 + $0x98] sm:$0xf]
  %v5476 = vld [vmem:[%s3 + $0x9c] sm:$0xf]
  %v5477 = vld [vmem:[%s3 + $0xa0] sm:$0xf]
  %v5478 = vld [vmem:[%s3 + $0xa4] sm:$0xf]
  %v5479 = vld [vmem:[%s3 + $0xa8] sm:$0xf]
  %v5480 = vld [vmem:[%s3 + $0xac] sm:$0xf]
  %v5481 = vld [vmem:[%s3 + $0xb0] sm:$0xf]
  %v5482 = vld [vmem:[%s3 + $0xb4] sm:$0xf]
  %v5483 = vld [vmem:[%s3 + $0xb8] sm:$0xf]
  %v5484 = vld [vmem:[%s3 + $0xbc] sm:$0xf]
  %v5485 = vpack.c.bf16 %v5468, %v5468
  %v5486 = vld [vmem:[%s4 + $0x5] ss:$0 sm:$0xff]
  %v5503 = vunpack.c.l.b16 %v5469
  %v5504 = vunpack.c.l.b16 %v5470
  %v5505 = vunpack.c.l.b16 %v5471
  %v5506 = vunpack.c.l.b16 %v5472
  %v5507 = vunpack.c.l.b16 %v5473
  %v5508 = vunpack.c.l.b16 %v5474
  %v5509 = vunpack.c.l.b16 %v5475
  %v5510 = vunpack.c.l.b16 %v5476
  %v5511 = vunpack.c.l.b16 %v5477
  %v5512 = vunpack.c.l.b16 %v5478
  %v5513 = vunpack.c.l.b16 %v5479
  %v5514 = vunpack.c.l.b16 %v5480
  %v5515 = vunpack.c.l.b16 %v5481
  %v5516 = vunpack.c.l.b16 %v5482
  %v5517 = vunpack.c.l.b16 %v5483
  %v5518 = vunpack.c.l.b16 %v5484
  %v5519 = vpack.c.b16 %v5504, %v5503
  %v5520 = vpack.c.b16 %v5506, %v5505
  %v5521 = vpack.c.b16 %v5508, %v5507
  %v5522 = vpack.c.b16 %v5510, %v5509
  %v5523 = vpack.c.b16 %v5512, %v5511
  %v5524 = vpack.c.b16 %v5514, %v5513
  %v5525 = vpack.c.b16 %v5516, %v5515
  %v5526 = vpack.c.b16 %v5518, %v5517
  %5535 = vmatpush.bf16.msra.mxu0 %v5526
  %5536 = vmatpush.bf16.msra.mxu0 %v5525
  %5537 = vmatpush.bf16.msra.mxu0 %v5524
  %5538 = vmatpush.bf16.msra.mxu0 %v5523
  %5539 = vmatpush.bf16.msra.mxu0 %v5522
  %5540 = vmatpush.bf16.msra.mxu0 %v5521
  %5541 = vmatpush.bf16.msra.mxu0 %v5520
  %5542 = vmatpush.bf16.msra.mxu0 %v5519
  %5543 = vmatmul.bf16.gmra.mxu0 %v5485
  %v5544 = vpop.f32.mrf.mxu0
  %v5545 = vadd.f32 %v5486, %v5544
  %v5546 = vpop.f32.mrf.mxu0
  %5547 = vdwg.mxu0
  %v5548 = vmax.f32 %v5545, 0.0
  %v5549 = vld [vmem:[%s3 + $0xc0] sm:$0xf]
  %v5550 = vld [vmem:[%s3 + $0xc4] sm:$0xf]
  %v5551 = vld [vmem:[%s3 + $0xc8] sm:$0xf]
  %v5552 = vld [vmem:[%s3 + $0xcc] sm:$0xf]
  %v5553 = vld [vmem:[%s3 + $0xd0] sm:$0xf]
  %v5554 = vld [vmem:[%s3 + $0xd4] sm:$0xf]
  %v5555 = vld [vmem:[%s3 + $0xd8] sm:$0xf]
  %v5556 = vld [vmem:[%s3 + $0xdc] sm:$0xf]
  %v5557 = vld [vmem:[%s3 + $0xe0] sm:$0xf]
  %v5558 = vld [vmem:[%s3 + $0xe4] sm:$0xf]
  %v5559 = vld [vmem:[%s3 + $0xe8] sm:$0xf]
  %v5560 = vld [vmem:[%s3 + $0xec] sm:$0xf]
  %v5561 = vld [vmem:[%s3 + $0xf0] sm:$0xf]
  %v5562 = vld [vmem:[%s3 + $0xf4] sm:$0xf]
  %v5563 = vld [vmem:[%s3 + $0xf8] sm:$0xf]
  %v5564 = vld [vmem:[%s3 + $0xfc] sm:$0xf]
  %v5565 = vpack.c.bf16 %v5548, %v5548
  %v5566 = vld [vmem:[%s4 + $0x6] ss:$0 sm:$0xff]
  %v5583 = vunpack.c.l.b16 %v5549
  %v5584 = vunpack.c.l.b16 %v5550
  %v5585 = vunpack.c.l.b16 %v5551
  %v5586 = vunpack.c.l.b16 %v5552
  %v5587 = vunpack.c.l.b16 %v5553
  %v5588 = vunpack.c.l.b16 %v5554
  %v5589 = vunpack.c.l.b16 %v5555
  %v5590 = vunpack.c.l.b16 %v5556
  %v5591 = vunpack.c.l.b16 %v5557
  %v5592 = vunpack.c.l.b16 %v5558
  %v5593 = vunpack.c.l.b16 %v5559
  %v5594 = vunpack.c.l.b16 %v5560
  %v5595 = vunpack.c.l.b16 %v5561
  %v5596 = vunpack.c.l.b16 %v5562
  %v5597 = vunpack.c.l.b16 %v5563
  %v5598 = vunpack.c.l.b16 %v5564
  %v5599 = vpack.c.b16 %v5584, %v5583
  %v5600 = vpack.c.b16 %v5586, %v5585
  %v5601 = vpack.c.b16 %v5588, %v5587
  %v5602 = vpack.c.b16 %v5590, %v5589
  %v5603 = vpack.c.b16 %v5592, %v5591
  %v5604 = vpack.c.b16 %v5594, %v5593
  %v5605 = vpack.c.b16 %v5596, %v5595
  %v5606 = vpack.c.b16 %v5598, %v5597
  %5615 = vmatpush.bf16.msra.mxu0 %v5606
  %5616 = vmatpush.bf16.msra.mxu0 %v5605
  %5617 = vmatpush.bf16.msra.mxu0 %v5604
  %5618 = vmatpush.bf16.msra.mxu0 %v5603
  %5619 = vmatpush.bf16.msra.mxu0 %v5602
  %5620 = vmatpush.bf16.msra.mxu0 %v5601
  %5621 = vmatpush.bf16.msra.mxu0 %v5600
  %5622 = vmatpush.bf16.msra.mxu0 %v5599
  %5623 = vmatmul.bf16.gmra.mxu0 %v5565
  %v5624 = vpop.f32.mrf.mxu0
  %v5625 = vadd.f32 %v5566, %v5624
  %v5626 = vpop.f32.mrf.mxu0
  %5627 = vdwg.mxu0
  %v5628 = vxor.u32 %v5625, 2147483648
  %v5629 = vmul.f32 %v5628, 1.442695
  %v5630 = vpow.pop %v5629
  %v5631 = vadd.f32 %v5630, 1.0
  %v5632 = vrcp.pop %v5631
  %v5633 = vmul.f32 %v5631, %v5632
  %v5634 = vsub.f32 1.0, %v5633
  %v5635 = vmul.f32 %v5632, %v5634
  %v5636 = vadd.f32 %v5632, %v5635
  %vm5637 = vweird.f32 %v5631
  %vm5638 = vweird.f32 %v5632
  %vm5639 = vmor %vm5637, %vm5638
  %v5640 = vsel %vm5639, %v5632, %v5636
  %v5641 = vand.u32 2147483647, %v5631
  %vm5642 = vcmp.eq.f32.partialorder %v5641, 8.507059e+37
  %v5643 = vand.u32 %v5631, 2147483648
  %v5644 = vor.u32 1.1754944e-38, %v5643
  %v5645 = vsel %vm5642, %v5644, %v5640
  %v5646 = vmul.f32 1.0, %v5645
  %5647 = vst [vmem:[%s5] sm:$0xff] %v5646
  // Predicated region
  $region22: #{chess_cnn_forward.1} parent=0 // pred_check
    _
  $region23: #{chess_cnn_forward.1} parent=0 // pred_check_branch
    %5649 = sbr.rel (0) target = $region25
  $region24: #{chess_cnn_forward.1} parent=0 // pred_region
    _
  $region25: #{chess_cnn_forward.1} parent=0 // pred_fallthru
    _
  // Predicated region
  $region26: #{chess_cnn_forward.1} parent=0 // pred_check
    _
  $region27: #{chess_cnn_forward.1} parent=0 // pred_check_branch
    %5651 = sbr.rel (0) target = $region29
  $region28: #{chess_cnn_forward.1} parent=0 // pred_region
    _
  $region29: #{chess_cnn_forward.1} parent=0 // pred_fallthru
    _

</llo_original>
